<compile_context>
chip_gen: v5e
topology: v5e:2x2
jax: 0.10.0
libtpu: 0.0.40
codegen_flags: <defaults>
</compile_context>

<pallas_src>
import functools

import jax
import jax.numpy as jnp
from jax import lax
from jax.experimental import pallas as pl
from jax.experimental.pallas import tpu as pltpu

EPS = 1e-5


def _layernorm(x, g, b):
    # x: (R, D) f32; g, b: (1, D) f32
    mu = jnp.mean(x, axis=-1, keepdims=True)
    var = jnp.mean((x - mu) ** 2, axis=-1, keepdims=True)
    return (x - mu) * lax.rsqrt(var + EPS) * g + b


# ----------------------------------------------------------------------------
# fused kernel: pos-add + L residual attention blocks + ln_final + EOT gather
#               + text projection
# ----------------------------------------------------------------------------
def text_encoder_kernel(eot_ref,                            # scalar prefetch (SMEM)
                        prompts_ref, pos_ref, mask_ref,
                        ln1g, ln1b, wq, wk, wv, bq, bk, bv, wo, bo,
                        ln2g, ln2b, wfc, bfc, wpr, bpr,
                        lnfg, lnfb, wtxt,
                        out_ref,                            # (1, 1, E) f32
                        x_scr,                              # VMEM (S, D) f32
                        *, num_heads):
    b = pl.program_id(0)
    l = pl.program_id(1)
    S, D = x_scr.shape
    H = num_heads
    hd = D // H
    scale = 1.0 / float(hd) ** 0.5
    bf16 = jnp.bfloat16

    # ---- layer 0: x = prompts + positional_embedding (fused pos-add) ----
    @pl.when(l == 0)
    def _():
        x_scr[...] = prompts_ref[0] + pos_ref[...]

    x = x_scr[...]                                          # (S, D) f32

    # ---- multi-head self-attention (causal, pre-LN), batched over heads ----
    xn = _layernorm(x, ln1g[0], ln1b[0])                    # (S, D) f32
    xn_b = jnp.broadcast_to(xn.astype(bf16)[None], (H, S, D))
    qh = jnp.einsum('hsd,hde->hse', xn_b, wq[0],
                    preferred_element_type=jnp.float32) + bq[0]   # (H, S, hd)
    kh = jnp.einsum('hsd,hde->hse', xn_b, wk[0],
                    preferred_element_type=jnp.float32) + bk[0]
    vh = jnp.einsum('hsd,hde->hse', xn_b, wv[0],
                    preferred_element_type=jnp.float32) + bv[0]

    s = jnp.einsum('hqe,hke->hqk', qh.astype(bf16), kh.astype(bf16),
                   preferred_element_type=jnp.float32)      # (H, S, S) f32
    s = s * scale + mask_ref[...][None]                     # additive causal mask
    s = s - jnp.max(s, axis=-1, keepdims=True)
    p = jnp.exp(s)
    p = p * pl.reciprocal(jnp.sum(p, axis=-1, keepdims=True), approx=True)

    ctx = jnp.einsum('hqk,hke->hqe', p.astype(bf16), vh.astype(bf16),
                     preferred_element_type=jnp.float32)    # (H, S, hd)
    out_h = jnp.einsum('hse,hed->hsd', ctx.astype(bf16), wo[0],
                       preferred_element_type=jnp.float32)  # (H, S, D)
    x = x + jnp.sum(out_h, axis=0) + bo[0]                  # residual

    # ---- MLP with QuickGELU (pre-LN) ----
    xn2 = _layernorm(x, ln2g[0], ln2b[0])
    h1 = jnp.dot(xn2.astype(bf16), wfc[0],
                 preferred_element_type=jnp.float32) + bfc[0]
    h1 = h1 * jax.nn.sigmoid(1.702 * h1)                    # QuickGELU (f32 VPU/EUP)
    h2 = jnp.dot(h1.astype(bf16), wpr[0],
                 preferred_element_type=jnp.float32) + bpr[0]
    x = x + h2
    x_scr[...] = x                                          # carry residual in VMEM

    # ---- last layer: ln_final on the EOT row + text projection ----
    @pl.when(l == pl.num_programs(1) - 1)
    def _():
        row = x_scr[pl.ds(eot_ref[b], 1), :]                # (1, D) dynamic row gather
        rown = _layernorm(row, lnfg[...], lnfb[...])
        out_ref[0] = jnp.dot(rown.astype(bf16), wtxt[...],
                             preferred_element_type=jnp.float32)


# ----------------------------------------------------------------------------
# wrapper: one pallas_call for the whole forward
# ----------------------------------------------------------------------------
def text_encoder_forward(prompts, tokenized_prompts, params):
    B, S, D = prompts.shape
    H = params["num_heads"]
    hd = D // H
    L = params["w_q"].shape[0]
    F = 4 * D
    E = params["text_projection"].shape[-1]

    # EOT index (argmax over token ids) -- plain JAX glue, fed via scalar prefetch.
    eot = jnp.argmax(tokenized_prompts, axis=-1).astype(jnp.int32)      # (B,)
    # causal mask built once (hoisted out of the kernel).
    mask = jnp.where(jnp.arange(S)[None, :] <= jnp.arange(S)[:, None],
                     0.0, -1e30).astype(jnp.float32)

    def layer_spec(full_shape):
        blk = (1,) + tuple(full_shape[1:])
        nz = len(full_shape) - 1
        return pl.BlockSpec(blk, lambda b, l, e: (l,) + (0,) * nz)

    def const_spec(full_shape):
        nz = len(full_shape)
        return pl.BlockSpec(tuple(full_shape), lambda b, l, e: (0,) * nz)

    in_specs = [
        pl.BlockSpec((1, S, D), lambda b, l, e: (b, 0, 0)),     # prompts
        const_spec((S, D)),                                     # positional embedding
        const_spec((S, S)),                                     # causal mask
        layer_spec((L, 1, D)), layer_spec((L, 1, D)),           # ln_1 g, b
        layer_spec((L, H, D, hd)), layer_spec((L, H, D, hd)),   # w_q, w_k
        layer_spec((L, H, D, hd)),                              # w_v
        layer_spec((L, H, 1, hd)), layer_spec((L, H, 1, hd)),   # b_q, b_k
        layer_spec((L, H, 1, hd)),                              # b_v
        layer_spec((L, H, hd, D)),                              # w_o (per-head rows)
        layer_spec((L, 1, D)),                                  # b_o
        layer_spec((L, 1, D)), layer_spec((L, 1, D)),           # ln_2 g, b
        layer_spec((L, D, F)), layer_spec((L, 1, F)),           # mlp c_fc
        layer_spec((L, F, D)), layer_spec((L, 1, D)),           # mlp c_proj
        const_spec((1, D)), const_spec((1, D)),                 # ln_final g, b
        const_spec((D, E)),                                     # text_projection
    ]

    # Explicit scoped-VMEM budget: double-buffered per-layer weights (bf16) +
    # invariant inputs + activations, with headroom; clamped for v7x (64 MiB).
    per_layer_bytes = 2 * (3 * D * D + D * D + 2 * D * F) + 4 * (8 * D + 2 * F)
    invariant_bytes = 4 * (2 * S * D + S * S + 2 * D) + 2 * D * E
    act_bytes = 4 * (4 * S * D + 3 * H * S * S + H * S * (3 * hd + D) + 2 * S * F)
    vmem_limit = int(1.5 * (2 * per_layer_bytes + 2 * invariant_bytes + act_bytes))
    vmem_limit = min(max(vmem_limit, 32 << 20), 64 << 20)

    kern = functools.partial(text_encoder_kernel, num_heads=H)
    out = pl.pallas_call(
        kern,
        out_shape=jax.ShapeDtypeStruct((B, 1, E), jnp.float32),
        grid_spec=pltpu.PrefetchScalarGridSpec(
            num_scalar_prefetch=1,
            grid=(B, L),
            in_specs=in_specs,
            out_specs=pl.BlockSpec((1, 1, E), lambda b, l, e: (b, 0, 0)),
            scratch_shapes=[pltpu.VMEM((S, D), jnp.float32)],
        ),
        compiler_params=pltpu.CompilerParams(
            dimension_semantics=("parallel", "arbitrary"),
            vmem_limit_bytes=vmem_limit,
        ),
    )(eot, prompts, params["pos"], mask,
      params["ln1_g"], params["ln1_b"],
      params["w_q"], params["w_k"], params["w_v"],
      params["b_q"], params["b_k"], params["b_v"],
      params["w_o"], params["b_o"],
      params["ln2_g"], params["ln2_b"],
      params["w_fc"], params["b_fc"],
      params["w_pr"], params["b_pr"],
      params["lnf_g"], params["lnf_b"],
      params["text_projection"])
    return out.reshape(B, E)


# ----------------------------------------------------------------------------
# synthetic CLIP text-transformer parameters (standard layout), then kernel prep
# ----------------------------------------------------------------------------
def init_clip_text_params(key, *, S, D, H, L, E):
    kpos, kproj, *klayers = jax.random.split(key, 2 + L)
    layers = []
    for kl in klayers:
        kq, ko, kf, kp = jax.random.split(kl, 4)
        layers.append(dict(
            ln1_g=jnp.ones((D,), jnp.float32), ln1_b=jnp.zeros((D,), jnp.float32),
            w_qkv=0.02 * jax.random.normal(kq, (D, 3 * D), jnp.float32),
            b_qkv=jnp.zeros((3 * D,), jnp.float32),
            w_o=0.02 * jax.random.normal(ko, (D, D), jnp.float32),
            b_o=jnp.zeros((D,), jnp.float32),
            ln2_g=jnp.ones((D,), jnp.float32), ln2_b=jnp.zeros((D,), jnp.float32),
            w_fc=0.02 * jax.random.normal(kf, (D, 4 * D), jnp.float32),
            b_fc=jnp.zeros((4 * D,), jnp.float32),
            w_proj=0.02 * jax.random.normal(kp, (4 * D, D), jnp.float32),
            b_proj=jnp.zeros((D,), jnp.float32),
        ))
    return dict(
        num_heads=H,
        pos=0.01 * jax.random.normal(kpos, (S, D), jnp.float32),
        layers=layers,
        lnf_g=jnp.ones((D,), jnp.float32), lnf_b=jnp.zeros((D,), jnp.float32),
        text_projection=(D ** -0.5) * jax.random.normal(kproj, (D, E), jnp.float32),
    )


def prepare_params(p):
    """Stack per-layer weights along L, split attention heads, cast MXU operands to bf16."""
    D = p["pos"].shape[-1]
    H = p["num_heads"]
    hd = D // H
    L = len(p["layers"])
    bf16 = jnp.bfloat16

    def stack(name):
        return jnp.stack([lp[name] for lp in p["layers"]], axis=0)

    w_qkv = stack("w_qkv")                                   # (L, D, 3D)
    b_qkv = stack("b_qkv")                                   # (L, 3D)

    def split_w(w):                                          # (L, D, D) -> (L, H, D, hd)
        return w.reshape(L, D, H, hd).transpose(0, 2, 1, 3)

    def split_b(bvec):                                       # (L, D) -> (L, H, 1, hd)
        return bvec.reshape(L, H, hd)[:, :, None, :]

    return dict(
        num_heads=H,
        pos=p["pos"],
        ln1_g=stack("ln1_g")[:, None, :], ln1_b=stack("ln1_b")[:, None, :],
        w_q=split_w(w_qkv[:, :, 0 * D:1 * D]).astype(bf16),
        w_k=split_w(w_qkv[:, :, 1 * D:2 * D]).astype(bf16),
        w_v=split_w(w_qkv[:, :, 2 * D:3 * D]).astype(bf16),
        b_q=split_b(b_qkv[:, 0 * D:1 * D]),
        b_k=split_b(b_qkv[:, 1 * D:2 * D]),
        b_v=split_b(b_qkv[:, 2 * D:3 * D]),
        w_o=stack("w_o").reshape(L, H, hd, D).astype(bf16),  # out-proj rows grouped per head
        b_o=stack("b_o")[:, None, :],
        ln2_g=stack("ln2_g")[:, None, :], ln2_b=stack("ln2_b")[:, None, :],
        w_fc=stack("w_fc").astype(bf16), b_fc=stack("b_fc")[:, None, :],
        w_pr=stack("w_proj").astype(bf16), b_pr=stack("b_proj")[:, None, :],
        lnf_g=p["lnf_g"][None, :], lnf_b=p["lnf_b"][None, :],
        text_projection=p["text_projection"].astype(bf16),
    )


if __name__ == "__main__":
    # Small but lane-dense shapes (D, E multiples of 128; S multiple of 8).
    B, S, D, H, L, E = 2, 8, 128, 4, 2, 128

    key = jax.random.PRNGKey(0)
    kparams, kprompts, ktok = jax.random.split(key, 3)

    raw_params = init_clip_text_params(kparams, S=S, D=D, H=H, L=L, E=E)
    params = prepare_params(raw_params)

    # prompts: continuous prompt embeddings (batch, seq, dim)
    prompts = jax.random.normal(kprompts, (B, S, D), jnp.float32)

    # tokenized_prompts: integer ids; EOT token (largest id) marks the argmax position.
    tokenized_prompts = jax.random.randint(ktok, (B, S), 1, 100, dtype=jnp.int32)
    eot_positions = jnp.array([5, 7], dtype=jnp.int32)
    tokenized_prompts = tokenized_prompts.at[jnp.arange(B), eot_positions].set(49407)

    out = text_encoder_forward(prompts, tokenized_prompts, params)
    out = jax.block_until_ready(out)
    assert out.shape == (B, E) and out.dtype == jnp.float32
    print("KERNEL_OK")
</pallas_src>

<mosaic_0001>
module attributes {stable_mosaic.version = 11 : i64} {
  func.func @text_encoder_kernel(%arg0: i32, %arg1: i32, %arg2: memref<2xi32, #tpu.memory_space<smem>>, %arg3: memref<1x8x128xf32, #tpu.memory_space<vmem>>, %arg4: memref<8x128xf32, #tpu.memory_space<vmem>>, %arg5: memref<8x8xf32, #tpu.memory_space<vmem>>, %arg6: memref<1x1x128xf32, #tpu.memory_space<vmem>>, %arg7: memref<1x1x128xf32, #tpu.memory_space<vmem>>, %arg8: memref<1x4x128x32xbf16, #tpu.memory_space<vmem>>, %arg9: memref<1x4x128x32xbf16, #tpu.memory_space<vmem>>, %arg10: memref<1x4x128x32xbf16, #tpu.memory_space<vmem>>, %arg11: memref<1x4x1x32xf32, #tpu.memory_space<vmem>>, %arg12: memref<1x4x1x32xf32, #tpu.memory_space<vmem>>, %arg13: memref<1x4x1x32xf32, #tpu.memory_space<vmem>>, %arg14: memref<1x4x32x128xbf16, #tpu.memory_space<vmem>>, %arg15: memref<1x1x128xf32, #tpu.memory_space<vmem>>, %arg16: memref<1x1x128xf32, #tpu.memory_space<vmem>>, %arg17: memref<1x1x128xf32, #tpu.memory_space<vmem>>, %arg18: memref<1x128x512xbf16, #tpu.memory_space<vmem>>, %arg19: memref<1x1x512xf32, #tpu.memory_space<vmem>>, %arg20: memref<1x512x128xbf16, #tpu.memory_space<vmem>>, %arg21: memref<1x1x128xf32, #tpu.memory_space<vmem>>, %arg22: memref<1x128xf32, #tpu.memory_space<vmem>>, %arg23: memref<1x128xf32, #tpu.memory_space<vmem>>, %arg24: memref<128x128xbf16, #tpu.memory_space<vmem>>, %arg25: memref<1x1x128xf32, #tpu.memory_space<vmem>>, %arg26: memref<8x128xf32, #tpu.memory_space<vmem>>) attributes {dimension_semantics = [#tpu.dimension_semantics<parallel>, #tpu.dimension_semantics<arbitrary>], iteration_bounds = array<i64: 2, 2>, scalar_prefetch = 1 : i64, scratch_operands = 1 : i64, tpu.core_type = #tpu.core_type<tc>, window_params = [{transform_indices = @transform_0, window_bounds = array<i64: 1, 8, 128>}, {pipeline_mode = #tpu.pipeline_mode<synchronous>, transform_indices = @transform_1, window_bounds = array<i64: 8, 128>}, {pipeline_mode = #tpu.pipeline_mode<synchronous>, transform_indices = @transform_2, window_bounds = array<i64: 8, 8>}, {transform_indices = @transform_3, window_bounds = array<i64: 1, 1, 128>}, {transform_indices = @transform_4, window_bounds = array<i64: 1, 1, 128>}, {transform_indices = @transform_5, window_bounds = array<i64: 1, 4, 128, 32>}, {transform_indices = @transform_6, window_bounds = array<i64: 1, 4, 128, 32>}, {transform_indices = @transform_7, window_bounds = array<i64: 1, 4, 128, 32>}, {transform_indices = @transform_8, window_bounds = array<i64: 1, 4, 1, 32>}, {transform_indices = @transform_9, window_bounds = array<i64: 1, 4, 1, 32>}, {transform_indices = @transform_10, window_bounds = array<i64: 1, 4, 1, 32>}, {transform_indices = @transform_11, window_bounds = array<i64: 1, 4, 32, 128>}, {transform_indices = @transform_12, window_bounds = array<i64: 1, 1, 128>}, {transform_indices = @transform_13, window_bounds = array<i64: 1, 1, 128>}, {transform_indices = @transform_14, window_bounds = array<i64: 1, 1, 128>}, {transform_indices = @transform_15, window_bounds = array<i64: 1, 128, 512>}, {transform_indices = @transform_16, window_bounds = array<i64: 1, 1, 512>}, {transform_indices = @transform_17, window_bounds = array<i64: 1, 512, 128>}, {transform_indices = @transform_18, window_bounds = array<i64: 1, 1, 128>}, {pipeline_mode = #tpu.pipeline_mode<synchronous>, transform_indices = @transform_19, window_bounds = array<i64: 1, 128>}, {pipeline_mode = #tpu.pipeline_mode<synchronous>, transform_indices = @transform_20, window_bounds = array<i64: 1, 128>}, {pipeline_mode = #tpu.pipeline_mode<synchronous>, transform_indices = @transform_21, window_bounds = array<i64: 128, 128>}, {transform_indices = @transform_22, window_bounds = array<i64: 1, 1, 128>}]} {
    %c0_i32 = arith.constant 0 : i32
    %0 = arith.cmpi eq, %arg1, %c0_i32 : i32
    %1 = arith.extui %0 : i1 to i32
    %c0_i32_0 = arith.constant 0 : i32
    %2 = arith.cmpi ne, %1, %c0_i32_0 : i32
    scf.if %2 {
      %c0_85 = arith.constant 0 : index
      %c0_86 = arith.constant 0 : index
      %c0_87 = arith.constant 0 : index
      %142 = vector.load %arg3[%c0_85, %c0_86, %c0_87] : memref<1x8x128xf32, #tpu.memory_space<vmem>>, vector<1x8x128xf32>
      %143 = vector.shape_cast %142 : vector<1x8x128xf32> to vector<8x128xf32>
      %c0_88 = arith.constant 0 : index
      %c0_89 = arith.constant 0 : index
      %144 = vector.load %arg4[%c0_88, %c0_89] : memref<8x128xf32, #tpu.memory_space<vmem>>, vector<8x128xf32>
      %145 = arith.addf %143, %144 : vector<8x128xf32>
      %c0_90 = arith.constant 0 : index
      %c0_91 = arith.constant 0 : index
      %146 = vector.load %arg26[%c0_90, %c0_91] : memref<8x128xf32, #tpu.memory_space<vmem>>, vector<8x128xf32>
      tpu.vector_store %arg26[%c0_90, %c0_91], %145 {strides = array<i32>} : memref<8x128xf32, #tpu.memory_space<vmem>>, vector<8x128xf32>,
    } else {
    }
    %c0 = arith.constant 0 : index
    %c0_1 = arith.constant 0 : index
    %3 = vector.load %arg26[%c0, %c0_1] : memref<8x128xf32, #tpu.memory_space<vmem>>, vector<8x128xf32>
    %c0_2 = arith.constant 0 : index
    %c0_3 = arith.constant 0 : index
    %c0_4 = arith.constant 0 : index
    %4 = vector.load %arg6[%c0_2, %c0_3, %c0_4] : memref<1x1x128xf32, #tpu.memory_space<vmem>>, vector<1x1x128xf32>
    %5 = vector.shape_cast %4 : vector<1x1x128xf32> to vector<1x128xf32>
    %c0_5 = arith.constant 0 : index
    %c0_6 = arith.constant 0 : index
    %c0_7 = arith.constant 0 : index
    %6 = vector.load %arg7[%c0_5, %c0_6, %c0_7] : memref<1x1x128xf32, #tpu.memory_space<vmem>>, vector<1x1x128xf32>
    %7 = vector.shape_cast %6 : vector<1x1x128xf32> to vector<1x128xf32>
    %cst = arith.constant dense<0.000000e+00> : vector<8xf32>
    %8 = vector.multi_reduction <add>, %3, %cst [1] : vector<8x128xf32> to vector<8xf32>
    %9 = vector.shape_cast %8 : vector<8xf32> to vector<8x1xf32>
    %cst_8 = arith.constant 1.280000e+02 : f32
    %10 = vector.broadcast %cst_8 : f32 to vector<8x1xf32>
    %11 = arith.divf %9, %10 : vector<8x1xf32>
    %12 = vector.broadcast %11 : vector<8x1xf32> to vector<8x128xf32>
    %13 = arith.subf %3, %12 : vector<8x128xf32>
    %14 = arith.mulf %13, %13 : vector<8x128xf32>
    %cst_9 = arith.constant dense<0.000000e+00> : vector<8xf32>
    %15 = vector.multi_reduction <add>, %14, %cst_9 [1] : vector<8x128xf32> to vector<8xf32>
    %16 = vector.shape_cast %15 : vector<8xf32> to vector<8x1xf32>
    %cst_10 = arith.constant 1.280000e+02 : f32
    %17 = vector.broadcast %cst_10 : f32 to vector<8x1xf32>
    %18 = arith.divf %16, %17 : vector<8x1xf32>
    %19 = vector.broadcast %11 : vector<8x1xf32> to vector<8x128xf32>
    %20 = arith.subf %3, %19 : vector<8x128xf32>
    %cst_11 = arith.constant 9.99999974E-6 : f32
    %21 = vector.broadcast %cst_11 : f32 to vector<8x1xf32>
    %22 = arith.addf %18, %21 : vector<8x1xf32>
    %23 = math.rsqrt %22 : vector<8x1xf32>
    %24 = vector.broadcast %23 : vector<8x1xf32> to vector<8x128xf32>
    %25 = arith.mulf %20, %24 : vector<8x128xf32>
    %26 = vector.broadcast %5 : vector<1x128xf32> to vector<8x128xf32>
    %27 = arith.mulf %25, %26 : vector<8x128xf32>
    %28 = vector.broadcast %7 : vector<1x128xf32> to vector<8x128xf32>
    %29 = arith.addf %27, %28 : vector<8x128xf32>
    %30 = arith.truncf %29 : vector<8x128xf32> to vector<8x128xbf16>
    %31 = vector.shape_cast %30 : vector<8x128xbf16> to vector<1x8x128xbf16>
    %32 = vector.shape_cast %31 : vector<1x8x128xbf16> to vector<1x8x128xbf16>
    %33 = vector.broadcast %32 : vector<1x8x128xbf16> to vector<4x8x128xbf16>
    %c0_12 = arith.constant 0 : index
    %c0_13 = arith.constant 0 : index
    %c0_14 = arith.constant 0 : index
    %c0_15 = arith.constant 0 : index
    %34 = vector.load %arg8[%c0_12, %c0_13, %c0_14, %c0_15] : memref<1x4x128x32xbf16, #tpu.memory_space<vmem>>, vector<1x4x128x32xbf16>
    %35 = vector.shape_cast %34 : vector<1x4x128x32xbf16> to vector<4x128x32xbf16>
    "tpu.trace_start"() <{level = 10 : i32, message = "hsd,hde->hse"}> : () -> ()
    %cst_16 = arith.constant dense<0.000000e+00> : vector<4x8x32xf32>
    %36 = tpu.matmul %33, %35, %cst_16 {dimension_numbers = #tpu.dot_dimension_numbers<[2], [1], [1], [2], [0, 0, 0, 1, 1, 2], [0], [0]>} : vector<4x8x128xbf16>, vector<4x128x32xbf16>, vector<4x8x32xf32> -> vector<4x8x32xf32>
    "tpu.trace_stop"() : () -> ()
    %c0_17 = arith.constant 0 : index
    %c0_18 = arith.constant 0 : index
    %c0_19 = arith.constant 0 : index
    %c0_20 = arith.constant 0 : index
    %37 = vector.load %arg11[%c0_17, %c0_18, %c0_19, %c0_20] : memref<1x4x1x32xf32, #tpu.memory_space<vmem>>, vector<1x4x1x32xf32>
    %38 = vector.shape_cast %37 : vector<1x4x1x32xf32> to vector<4x1x32xf32>
    %39 = vector.broadcast %38 : vector<4x1x32xf32> to vector<4x8x32xf32>
    %40 = arith.addf %36, %39 : vector<4x8x32xf32>
    %c0_21 = arith.constant 0 : index
    %c0_22 = arith.constant 0 : index
    %c0_23 = arith.constant 0 : index
    %c0_24 = arith.constant 0 : index
    %41 = vector.load %arg9[%c0_21, %c0_22, %c0_23, %c0_24] : memref<1x4x128x32xbf16, #tpu.memory_space<vmem>>, vector<1x4x128x32xbf16>
    %42 = vector.shape_cast %41 : vector<1x4x128x32xbf16> to vector<4x128x32xbf16>
    "tpu.trace_start"() <{level = 10 : i32, message = "hsd,hde->hse"}> : () -> ()
    %cst_25 = arith.constant dense<0.000000e+00> : vector<4x8x32xf32>
    %43 = tpu.matmul %33, %42, %cst_25 {dimension_numbers = #tpu.dot_dimension_numbers<[2], [1], [1], [2], [0, 0, 0, 1, 1, 2], [0], [0]>} : vector<4x8x128xbf16>, vector<4x128x32xbf16>, vector<4x8x32xf32> -> vector<4x8x32xf32>
    "tpu.trace_stop"() : () -> ()
    %c0_26 = arith.constant 0 : index
    %c0_27 = arith.constant 0 : index
    %c0_28 = arith.constant 0 : index
    %c0_29 = arith.constant 0 : index
    %44 = vector.load %arg12[%c0_26, %c0_27, %c0_28, %c0_29] : memref<1x4x1x32xf32, #tpu.memory_space<vmem>>, vector<1x4x1x32xf32>
    %45 = vector.shape_cast %44 : vector<1x4x1x32xf32> to vector<4x1x32xf32>
    %46 = vector.broadcast %45 : vector<4x1x32xf32> to vector<4x8x32xf32>
    %47 = arith.addf %43, %46 : vector<4x8x32xf32>
    %c0_30 = arith.constant 0 : index
    %c0_31 = arith.constant 0 : index
    %c0_32 = arith.constant 0 : index
    %c0_33 = arith.constant 0 : index
    %48 = vector.load %arg10[%c0_30, %c0_31, %c0_32, %c0_33] : memref<1x4x128x32xbf16, #tpu.memory_space<vmem>>, vector<1x4x128x32xbf16>
    %49 = vector.shape_cast %48 : vector<1x4x128x32xbf16> to vector<4x128x32xbf16>
    "tpu.trace_start"() <{level = 10 : i32, message = "hsd,hde->hse"}> : () -> ()
    %cst_34 = arith.constant dense<0.000000e+00> : vector<4x8x32xf32>
    %50 = tpu.matmul %33, %49, %cst_34 {dimension_numbers = #tpu.dot_dimension_numbers<[2], [1], [1], [2], [0, 0, 0, 1, 1, 2], [0], [0]>} : vector<4x8x128xbf16>, vector<4x128x32xbf16>, vector<4x8x32xf32> -> vector<4x8x32xf32>
    "tpu.trace_stop"() : () -> ()
    %c0_35 = arith.constant 0 : index
    %c0_36 = arith.constant 0 : index
    %c0_37 = arith.constant 0 : index
    %c0_38 = arith.constant 0 : index
    %51 = vector.load %arg13[%c0_35, %c0_36, %c0_37, %c0_38] : memref<1x4x1x32xf32, #tpu.memory_space<vmem>>, vector<1x4x1x32xf32>
    %52 = vector.shape_cast %51 : vector<1x4x1x32xf32> to vector<4x1x32xf32>
    %53 = vector.broadcast %52 : vector<4x1x32xf32> to vector<4x8x32xf32>
    %54 = arith.addf %50, %53 : vector<4x8x32xf32>
    %55 = arith.truncf %40 : vector<4x8x32xf32> to vector<4x8x32xbf16>
    %56 = arith.truncf %47 : vector<4x8x32xf32> to vector<4x8x32xbf16>
    "tpu.trace_start"() <{level = 10 : i32, message = "hqe,hke->hqk"}> : () -> ()
    %cst_39 = arith.constant dense<0.000000e+00> : vector<4x8x8xf32>
    %57 = tpu.matmul %55, %56, %cst_39 {dimension_numbers = #tpu.dot_dimension_numbers<[2], [2], [1], [1], [0, 0, 0, 1, 1, 1], [0], [0]>} : vector<4x8x32xbf16>, vector<4x8x32xbf16>, vector<4x8x8xf32> -> vector<4x8x8xf32>
    "tpu.trace_stop"() : () -> ()
    %cst_40 = arith.constant 0.176776692 : f32
    %58 = vector.broadcast %cst_40 : f32 to vector<4x8x8xf32>
    %59 = arith.mulf %57, %58 : vector<4x8x8xf32>
    %c0_41 = arith.constant 0 : index
    %c0_42 = arith.constant 0 : index
    %60 = vector.load %arg5[%c0_41, %c0_42] : memref<8x8xf32, #tpu.memory_space<vmem>>, vector<8x8xf32>
    %61 = vector.shape_cast %60 : vector<8x8xf32> to vector<1x8x8xf32>
    %62 = vector.broadcast %61 : vector<1x8x8xf32> to vector<4x8x8xf32>
    %63 = arith.addf %59, %62 : vector<4x8x8xf32>
    %cst_43 = arith.constant dense<0xFF800000> : vector<4x8xf32>
    %64 = vector.multi_reduction <maximumf>, %63, %cst_43 [2] : vector<4x8x8xf32> to vector<4x8xf32>
    %65 = vector.shape_cast %64 : vector<4x8xf32> to vector<4x8x1xf32>
    %66 = vector.broadcast %65 : vector<4x8x1xf32> to vector<4x8x8xf32>
    %67 = arith.subf %63, %66 : vector<4x8x8xf32>
    %68 = math.exp %67 : vector<4x8x8xf32>
    %cst_44 = arith.constant dense<0.000000e+00> : vector<4x8xf32>
    %69 = vector.multi_reduction <add>, %68, %cst_44 [2] : vector<4x8x8xf32> to vector<4x8xf32>
    %70 = vector.shape_cast %69 : vector<4x8xf32> to vector<4x8x1xf32>
    %71 = tpu.reciprocal %70 {approx = true} : vector<4x8x1xf32> -> vector<4x8x1xf32>
    %72 = vector.broadcast %71 : vector<4x8x1xf32> to vector<4x8x8xf32>
    %73 = arith.mulf %68, %72 : vector<4x8x8xf32>
    %74 = arith.truncf %73 : vector<4x8x8xf32> to vector<4x8x8xbf16>
    %75 = arith.truncf %54 : vector<4x8x32xf32> to vector<4x8x32xbf16>
    "tpu.trace_start"() <{level = 10 : i32, message = "hqk,hke->hqe"}> : () -> ()
    %cst_45 = arith.constant dense<0.000000e+00> : vector<4x8x32xf32>
    %76 = tpu.matmul %74, %75, %cst_45 {dimension_numbers = #tpu.dot_dimension_numbers<[2], [1], [1], [2], [0, 0, 0, 1, 1, 2], [0], [0]>} : vector<4x8x8xbf16>, vector<4x8x32xbf16>, vector<4x8x32xf32> -> vector<4x8x32xf32>
    "tpu.trace_stop"() : () -> ()
    %77 = arith.truncf %76 : vector<4x8x32xf32> to vector<4x8x32xbf16>
    %c0_46 = arith.constant 0 : index
    %c0_47 = arith.constant 0 : index
    %c0_48 = arith.constant 0 : index
    %c0_49 = arith.constant 0 : index
    %78 = vector.load %arg14[%c0_46, %c0_47, %c0_48, %c0_49] : memref<1x4x32x128xbf16, #tpu.memory_space<vmem>>, vector<1x4x32x128xbf16>
    %79 = vector.shape_cast %78 : vector<1x4x32x128xbf16> to vector<4x32x128xbf16>
    "tpu.trace_start"() <{level = 10 : i32, message = "hse,hed->hsd"}> : () -> ()
    %cst_50 = arith.constant dense<0.000000e+00> : vector<4x8x128xf32>
    %80 = tpu.matmul %77, %79, %cst_50 {dimension_numbers = #tpu.dot_dimension_numbers<[2], [1], [1], [2], [0, 0, 0, 1, 1, 2], [0], [0]>} : vector<4x8x32xbf16>, vector<4x32x128xbf16>, vector<4x8x128xf32> -> vector<4x8x128xf32>
    "tpu.trace_stop"() : () -> ()
    %cst_51 = arith.constant dense<0.000000e+00> : vector<8x128xf32>
    %81 = vector.multi_reduction <add>, %80, %cst_51 [0] : vector<4x8x128xf32> to vector<8x128xf32>
    %82 = arith.addf %3, %81 : vector<8x128xf32>
    %c0_52 = arith.constant 0 : index
    %c0_53 = arith.constant 0 : index
    %c0_54 = arith.constant 0 : index
    %83 = vector.load %arg15[%c0_52, %c0_53, %c0_54] : memref<1x1x128xf32, #tpu.memory_space<vmem>>, vector<1x1x128xf32>
    %84 = vector.shape_cast %83 : vector<1x1x128xf32> to vector<1x128xf32>
    %85 = vector.broadcast %84 : vector<1x128xf32> to vector<8x128xf32>
    %86 = arith.addf %82, %85 : vector<8x128xf32>
    %c0_55 = arith.constant 0 : index
    %c0_56 = arith.constant 0 : index
    %c0_57 = arith.constant 0 : index
    %87 = vector.load %arg16[%c0_55, %c0_56, %c0_57] : memref<1x1x128xf32, #tpu.memory_space<vmem>>, vector<1x1x128xf32>
    %88 = vector.shape_cast %87 : vector<1x1x128xf32> to vector<1x128xf32>
    %c0_58 = arith.constant 0 : index
    %c0_59 = arith.constant 0 : index
    %c0_60 = arith.constant 0 : index
    %89 = vector.load %arg17[%c0_58, %c0_59, %c0_60] : memref<1x1x128xf32, #tpu.memory_space<vmem>>, vector<1x1x128xf32>
    %90 = vector.shape_cast %89 : vector<1x1x128xf32> to vector<1x128xf32>
    %cst_61 = arith.constant dense<0.000000e+00> : vector<8xf32>
    %91 = vector.multi_reduction <add>, %86, %cst_61 [1] : vector<8x128xf32> to vector<8xf32>
    %92 = vector.shape_cast %91 : vector<8xf32> to vector<8x1xf32>
    %cst_62 = arith.constant 1.280000e+02 : f32
    %93 = vector.broadcast %cst_62 : f32 to vector<8x1xf32>
    %94 = arith.divf %92, %93 : vector<8x1xf32>
    %95 = vector.broadcast %94 : vector<8x1xf32> to vector<8x128xf32>
    %96 = arith.subf %86, %95 : vector<8x128xf32>
    %97 = arith.mulf %96, %96 : vector<8x128xf32>
    %cst_63 = arith.constant dense<0.000000e+00> : vector<8xf32>
    %98 = vector.multi_reduction <add>, %97, %cst_63 [1] : vector<8x128xf32> to vector<8xf32>
    %99 = vector.shape_cast %98 : vector<8xf32> to vector<8x1xf32>
    %cst_64 = arith.constant 1.280000e+02 : f32
    %100 = vector.broadcast %cst_64 : f32 to vector<8x1xf32>
    %101 = arith.divf %99, %100 : vector<8x1xf32>
    %102 = vector.broadcast %94 : vector<8x1xf32> to vector<8x128xf32>
    %103 = arith.subf %86, %102 : vector<8x128xf32>
    %cst_65 = arith.constant 9.99999974E-6 : f32
    %104 = vector.broadcast %cst_65 : f32 to vector<8x1xf32>
    %105 = arith.addf %101, %104 : vector<8x1xf32>
    %106 = math.rsqrt %105 : vector<8x1xf32>
    %107 = vector.broadcast %106 : vector<8x1xf32> to vector<8x128xf32>
    %108 = arith.mulf %103, %107 : vector<8x128xf32>
    %109 = vector.broadcast %88 : vector<1x128xf32> to vector<8x128xf32>
    %110 = arith.mulf %108, %109 : vector<8x128xf32>
    %111 = vector.broadcast %90 : vector<1x128xf32> to vector<8x128xf32>
    %112 = arith.addf %110, %111 : vector<8x128xf32>
    %113 = arith.truncf %112 : vector<8x128xf32> to vector<8x128xbf16>
    %c0_66 = arith.constant 0 : index
    %c0_67 = arith.constant 0 : index
    %c0_68 = arith.constant 0 : index
    %114 = vector.load %arg18[%c0_66, %c0_67, %c0_68] : memref<1x128x512xbf16, #tpu.memory_space<vmem>>, vector<1x128x512xbf16>
    %115 = vector.shape_cast %114 : vector<1x128x512xbf16> to vector<128x512xbf16>
    %cst_69 = arith.constant dense<0.000000e+00> : vector<8x512xf32>
    %116 = tpu.matmul %113, %115, %cst_69 {dimension_numbers = #tpu.dot_dimension_numbers<[1], [0], [0], [1], [0, 0, 1, 1], [], []>} : vector<8x128xbf16>, vector<128x512xbf16>, vector<8x512xf32> -> vector<8x512xf32>
    %c0_70 = arith.constant 0 : index
    %c0_71 = arith.constant 0 : index
    %c0_72 = arith.constant 0 : index
    %117 = vector.load %arg19[%c0_70, %c0_71, %c0_72] : memref<1x1x512xf32, #tpu.memory_space<vmem>>, vector<1x1x512xf32>
    %118 = vector.shape_cast %117 : vector<1x1x512xf32> to vector<1x512xf32>
    %119 = vector.broadcast %118 : vector<1x512xf32> to vector<8x512xf32>
    %120 = arith.addf %116, %119 : vector<8x512xf32>
    %cst_73 = arith.constant 1.702000e+00 : f32
    %121 = vector.broadcast %cst_73 : f32 to vector<8x512xf32>
    %122 = arith.mulf %121, %120 : vector<8x512xf32>
    %123 = arith.negf %122 : vector<8x512xf32>
    %124 = math.exp %123 : vector<8x512xf32>
    %cst_74 = arith.constant 1.000000e+00 : f32
    %125 = vector.broadcast %cst_74 : f32 to vector<8x512xf32>
    %126 = arith.addf %125, %124 : vector<8x512xf32>
    %127 = arith.divf %125, %126 : vector<8x512xf32>
    %128 = arith.mulf %120, %127 : vector<8x512xf32>
    %129 = arith.truncf %128 : vector<8x512xf32> to vector<8x512xbf16>
    %c0_75 = arith.constant 0 : index
    %c0_76 = arith.constant 0 : index
    %c0_77 = arith.constant 0 : index
    %130 = vector.load %arg20[%c0_75, %c0_76, %c0_77] : memref<1x512x128xbf16, #tpu.memory_space<vmem>>, vector<1x512x128xbf16>
    %131 = vector.shape_cast %130 : vector<1x512x128xbf16> to vector<512x128xbf16>
    %cst_78 = arith.constant dense<0.000000e+00> : vector<8x128xf32>
    %132 = tpu.matmul %129, %131, %cst_78 {dimension_numbers = #tpu.dot_dimension_numbers<[1], [0], [0], [1], [0, 0, 1, 1], [], []>} : vector<8x512xbf16>, vector<512x128xbf16>, vector<8x128xf32> -> vector<8x128xf32>
    %c0_79 = arith.constant 0 : index
    %c0_80 = arith.constant 0 : index
    %c0_81 = arith.constant 0 : index
    %133 = vector.load %arg21[%c0_79, %c0_80, %c0_81] : memref<1x1x128xf32, #tpu.memory_space<vmem>>, vector<1x1x128xf32>
    %134 = vector.shape_cast %133 : vector<1x1x128xf32> to vector<1x128xf32>
    %135 = vector.broadcast %134 : vector<1x128xf32> to vector<8x128xf32>
    %136 = arith.addf %132, %135 : vector<8x128xf32>
    %137 = arith.addf %86, %136 : vector<8x128xf32>
    %c0_82 = arith.constant 0 : index
    %c0_83 = arith.constant 0 : index
    %138 = vector.load %arg26[%c0_82, %c0_83] : memref<8x128xf32, #tpu.memory_space<vmem>>, vector<8x128xf32>
    tpu.vector_store %arg26[%c0_82, %c0_83], %137 {strides = array<i32>} : memref<8x128xf32, #tpu.memory_space<vmem>>, vector<8x128xf32>,
    %c1_i32 = arith.constant 1 : i32
    %139 = arith.cmpi eq, %arg1, %c1_i32 : i32
    %140 = arith.extui %139 : i1 to i32
    %c0_i32_84 = arith.constant 0 : i32
    %141 = arith.cmpi ne, %140, %c0_i32_84 : i32
    scf.if %141 {
      %142 = arith.index_cast %arg0 : i32 to index
      %143 = memref.load %arg2[%142] : memref<2xi32, #tpu.memory_space<smem>>
      %144 = arith.index_cast %143 : i32 to index
      %c0_85 = arith.constant 0 : index
      %145 = vector.load %arg26[%144, %c0_85] : memref<8x128xf32, #tpu.memory_space<vmem>>, vector<1x128xf32>
      %c0_86 = arith.constant 0 : index
      %c0_87 = arith.constant 0 : index
      %146 = vector.load %arg22[%c0_86, %c0_87] : memref<1x128xf32, #tpu.memory_space<vmem>>, vector<1x128xf32>
      %c0_88 = arith.constant 0 : index
      %c0_89 = arith.constant 0 : index
      %147 = vector.load %arg23[%c0_88, %c0_89] : memref<1x128xf32, #tpu.memory_space<vmem>>, vector<1x128xf32>
      %cst_90 = arith.constant dense<0.000000e+00> : vector<1xf32>
      %148 = vector.multi_reduction <add>, %145, %cst_90 [1] : vector<1x128xf32> to vector<1xf32>
      %149 = vector.shape_cast %148 : vector<1xf32> to vector<1x1xf32>
      %cst_91 = arith.constant 1.280000e+02 : f32
      %150 = vector.broadcast %cst_91 : f32 to vector<1x1xf32>
      %151 = arith.divf %149, %150 : vector<1x1xf32>
      %152 = vector.broadcast %151 : vector<1x1xf32> to vector<1x128xf32>
      %153 = arith.subf %145, %152 : vector<1x128xf32>
      %154 = arith.mulf %153, %153 : vector<1x128xf32>
      %cst_92 = arith.constant dense<0.000000e+00> : vector<1xf32>
      %155 = vector.multi_reduction <add>, %154, %cst_92 [1] : vector<1x128xf32> to vector<1xf32>
      %156 = vector.shape_cast %155 : vector<1xf32> to vector<1x1xf32>
      %cst_93 = arith.constant 1.280000e+02 : f32
      %157 = vector.broadcast %cst_93 : f32 to vector<1x1xf32>
      %158 = arith.divf %156, %157 : vector<1x1xf32>
      %159 = vector.broadcast %151 : vector<1x1xf32> to vector<1x128xf32>
      %160 = arith.subf %145, %159 : vector<1x128xf32>
      %cst_94 = arith.constant 9.99999974E-6 : f32
      %161 = vector.broadcast %cst_94 : f32 to vector<1x1xf32>
      %162 = arith.addf %158, %161 : vector<1x1xf32>
      %163 = math.rsqrt %162 : vector<1x1xf32>
      %164 = vector.broadcast %163 : vector<1x1xf32> to vector<1x128xf32>
      %165 = arith.mulf %160, %164 : vector<1x128xf32>
      %166 = arith.mulf %165, %146 : vector<1x128xf32>
      %167 = arith.addf %166, %147 : vector<1x128xf32>
      %168 = arith.truncf %167 : vector<1x128xf32> to vector<1x128xbf16>
      %c0_95 = arith.constant 0 : index
      %c0_96 = arith.constant 0 : index
      %169 = vector.load %arg24[%c0_95, %c0_96] : memref<128x128xbf16, #tpu.memory_space<vmem>>, vector<128x128xbf16>
      %cst_97 = arith.constant dense<0.000000e+00> : vector<1x128xf32>
      %170 = tpu.matmul %168, %169, %cst_97 {dimension_numbers = #tpu.dot_dimension_numbers<[1], [0], [0], [1], [0, 0, 1, 1], [], []>} : vector<1x128xbf16>, vector<128x128xbf16>, vector<1x128xf32> -> vector<1x128xf32>
      %c0_98 = arith.constant 0 : index
      %c0_99 = arith.constant 0 : index
      %c0_100 = arith.constant 0 : index
      %171 = vector.load %arg25[%c0_98, %c0_99, %c0_100] : memref<1x1x128xf32, #tpu.memory_space<vmem>>, vector<1x1x128xf32>
      %172 = vector.shape_cast %171 : vector<1x1x128xf32> to vector<1x128xf32>
      %173 = vector.shape_cast %170 : vector<1x128xf32> to vector<1x1x128xf32>
      tpu.vector_store %arg25[%c0_98, %c0_99, %c0_100], %173 {strides = array<i32>} : memref<1x1x128xf32, #tpu.memory_space<vmem>>, vector<1x1x128xf32>,
    } else {
    }
    return
  }
  func.func @transform_0(%arg0: i32, %arg1: i32, %arg2: memref<2xi32, #tpu.memory_space<smem>>) -> (i32, i32, i32) {
    %c0_i32 = arith.constant 0 : i32
    %c0_i32_0 = arith.constant 0 : i32
    %c0_i32_1 = arith.constant 0 : i32
    return %arg0, %c0_i32, %c0_i32_0 : i32, i32, i32
  }
  func.func @transform_1(%arg0: i32, %arg1: i32, %arg2: memref<2xi32, #tpu.memory_space<smem>>) -> (i32, i32) {
    %c0_i32 = arith.constant 0 : i32
    %c0_i32_0 = arith.constant 0 : i32
    %c0_i32_1 = arith.constant 0 : i32
    return %c0_i32, %c0_i32_0 : i32, i32
  }
  func.func @transform_2(%arg0: i32, %arg1: i32, %arg2: memref<2xi32, #tpu.memory_space<smem>>) -> (i32, i32) {
    %c0_i32 = arith.constant 0 : i32
    %c0_i32_0 = arith.constant 0 : i32
    %c0_i32_1 = arith.constant 0 : i32
    return %c0_i32, %c0_i32_0 : i32, i32
  }
  func.func @transform_3(%arg0: i32, %arg1: i32, %arg2: memref<2xi32, #tpu.memory_space<smem>>) -> (i32, i32, i32) {
    %c0_i32 = arith.constant 0 : i32
    %c0_i32_0 = arith.constant 0 : i32
    %c0_i32_1 = arith.constant 0 : i32
    return %arg1, %c0_i32, %c0_i32_0 : i32, i32, i32
  }
  func.func @transform_4(%arg0: i32, %arg1: i32, %arg2: memref<2xi32, #tpu.memory_space<smem>>) -> (i32, i32, i32) {
    %c0_i32 = arith.constant 0 : i32
    %c0_i32_0 = arith.constant 0 : i32
    %c0_i32_1 = arith.constant 0 : i32
    return %arg1, %c0_i32, %c0_i32_0 : i32, i32, i32
  }
  func.func @transform_5(%arg0: i32, %arg1: i32, %arg2: memref<2xi32, #tpu.memory_space<smem>>) -> (i32, i32, i32, i32) {
    %c0_i32 = arith.constant 0 : i32
    %c0_i32_0 = arith.constant 0 : i32
    %c0_i32_1 = arith.constant 0 : i32
    %c0_i32_2 = arith.constant 0 : i32
    return %arg1, %c0_i32, %c0_i32_0, %c0_i32_1 : i32, i32, i32, i32
  }
  func.func @transform_6(%arg0: i32, %arg1: i32, %arg2: memref<2xi32, #tpu.memory_space<smem>>) -> (i32, i32, i32, i32) {
    %c0_i32 = arith.constant 0 : i32
    %c0_i32_0 = arith.constant 0 : i32
    %c0_i32_1 = arith.constant 0 : i32
    %c0_i32_2 = arith.constant 0 : i32
    return %arg1, %c0_i32, %c0_i32_0, %c0_i32_1 : i32, i32, i32, i32
  }
  func.func @transform_7(%arg0: i32, %arg1: i32, %arg2: memref<2xi32, #tpu.memory_space<smem>>) -> (i32, i32, i32, i32) {
    %c0_i32 = arith.constant 0 : i32
    %c0_i32_0 = arith.constant 0 : i32
    %c0_i32_1 = arith.constant 0 : i32
    %c0_i32_2 = arith.constant 0 : i32
    return %arg1, %c0_i32, %c0_i32_0, %c0_i32_1 : i32, i32, i32, i32
  }
  func.func @transform_8(%arg0: i32, %arg1: i32, %arg2: memref<2xi32, #tpu.memory_space<smem>>) -> (i32, i32, i32, i32) {
    %c0_i32 = arith.constant 0 : i32
    %c0_i32_0 = arith.constant 0 : i32
    %c0_i32_1 = arith.constant 0 : i32
    %c0_i32_2 = arith.constant 0 : i32
    return %arg1, %c0_i32, %c0_i32_0, %c0_i32_1 : i32, i32, i32, i32
  }
  func.func @transform_9(%arg0: i32, %arg1: i32, %arg2: memref<2xi32, #tpu.memory_space<smem>>) -> (i32, i32, i32, i32) {
    %c0_i32 = arith.constant 0 : i32
    %c0_i32_0 = arith.constant 0 : i32
    %c0_i32_1 = arith.constant 0 : i32
    %c0_i32_2 = arith.constant 0 : i32
    return %arg1, %c0_i32, %c0_i32_0, %c0_i32_1 : i32, i32, i32, i32
  }
  func.func @transform_10(%arg0: i32, %arg1: i32, %arg2: memref<2xi32, #tpu.memory_space<smem>>) -> (i32, i32, i32, i32) {
    %c0_i32 = arith.constant 0 : i32
    %c0_i32_0 = arith.constant 0 : i32
    %c0_i32_1 = arith.constant 0 : i32
    %c0_i32_2 = arith.constant 0 : i32
    return %arg1, %c0_i32, %c0_i32_0, %c0_i32_1 : i32, i32, i32, i32
  }
  func.func @transform_11(%arg0: i32, %arg1: i32, %arg2: memref<2xi32, #tpu.memory_space<smem>>) -> (i32, i32, i32, i32) {
    %c0_i32 = arith.constant 0 : i32
    %c0_i32_0 = arith.constant 0 : i32
    %c0_i32_1 = arith.constant 0 : i32
    %c0_i32_2 = arith.constant 0 : i32
    return %arg1, %c0_i32, %c0_i32_0, %c0_i32_1 : i32, i32, i32, i32
  }
  func.func @transform_12(%arg0: i32, %arg1: i32, %arg2: memref<2xi32, #tpu.memory_space<smem>>) -> (i32, i32, i32) {
    %c0_i32 = arith.constant 0 : i32
    %c0_i32_0 = arith.constant 0 : i32
    %c0_i32_1 = arith.constant 0 : i32
    return %arg1, %c0_i32, %c0_i32_0 : i32, i32, i32
  }
  func.func @transform_13(%arg0: i32, %arg1: i32, %arg2: memref<2xi32, #tpu.memory_space<smem>>) -> (i32, i32, i32) {
    %c0_i32 = arith.constant 0 : i32
    %c0_i32_0 = arith.constant 0 : i32
    %c0_i32_1 = arith.constant 0 : i32
    return %arg1, %c0_i32, %c0_i32_0 : i32, i32, i32
  }
  func.func @transform_14(%arg0: i32, %arg1: i32, %arg2: memref<2xi32, #tpu.memory_space<smem>>) -> (i32, i32, i32) {
    %c0_i32 = arith.constant 0 : i32
    %c0_i32_0 = arith.constant 0 : i32
    %c0_i32_1 = arith.constant 0 : i32
    return %arg1, %c0_i32, %c0_i32_0 : i32, i32, i32
  }
  func.func @transform_15(%arg0: i32, %arg1: i32, %arg2: memref<2xi32, #tpu.memory_space<smem>>) -> (i32, i32, i32) {
    %c0_i32 = arith.constant 0 : i32
    %c0_i32_0 = arith.constant 0 : i32
    %c0_i32_1 = arith.constant 0 : i32
    return %arg1, %c0_i32, %c0_i32_0 : i32, i32, i32
  }
  func.func @transform_16(%arg0: i32, %arg1: i32, %arg2: memref<2xi32, #tpu.memory_space<smem>>) -> (i32, i32, i32) {
    %c0_i32 = arith.constant 0 : i32
    %c0_i32_0 = arith.constant 0 : i32
    %c0_i32_1 = arith.constant 0 : i32
    return %arg1, %c0_i32, %c0_i32_0 : i32, i32, i32
  }
  func.func @transform_17(%arg0: i32, %arg1: i32, %arg2: memref<2xi32, #tpu.memory_space<smem>>) -> (i32, i32, i32) {
    %c0_i32 = arith.constant 0 : i32
    %c0_i32_0 = arith.constant 0 : i32
    %c0_i32_1 = arith.constant 0 : i32
    return %arg1, %c0_i32, %c0_i32_0 : i32, i32, i32
  }
  func.func @transform_18(%arg0: i32, %arg1: i32, %arg2: memref<2xi32, #tpu.memory_space<smem>>) -> (i32, i32, i32) {
    %c0_i32 = arith.constant 0 : i32
    %c0_i32_0 = arith.constant 0 : i32
    %c0_i32_1 = arith.constant 0 : i32
    return %arg1, %c0_i32, %c0_i32_0 : i32, i32, i32
  }
  func.func @transform_19(%arg0: i32, %arg1: i32, %arg2: memref<2xi32, #tpu.memory_space<smem>>) -> (i32, i32) {
    %c0_i32 = arith.constant 0 : i32
    %c0_i32_0 = arith.constant 0 : i32
    %c0_i32_1 = arith.constant 0 : i32
    return %c0_i32, %c0_i32_0 : i32, i32
  }
  func.func @transform_20(%arg0: i32, %arg1: i32, %arg2: memref<2xi32, #tpu.memory_space<smem>>) -> (i32, i32) {
    %c0_i32 = arith.constant 0 : i32
    %c0_i32_0 = arith.constant 0 : i32
    %c0_i32_1 = arith.constant 0 : i32
    return %c0_i32, %c0_i32_0 : i32, i32
  }
  func.func @transform_21(%arg0: i32, %arg1: i32, %arg2: memref<2xi32, #tpu.memory_space<smem>>) -> (i32, i32) {
    %c0_i32 = arith.constant 0 : i32
    %c0_i32_0 = arith.constant 0 : i32
    %c0_i32_1 = arith.constant 0 : i32
    return %c0_i32, %c0_i32_0 : i32, i32
  }
  func.func @transform_22(%arg0: i32, %arg1: i32, %arg2: memref<2xi32, #tpu.memory_space<smem>>) -> (i32, i32, i32) {
    %c0_i32 = arith.constant 0 : i32
    %c0_i32_0 = arith.constant 0 : i32
    %c0_i32_1 = arith.constant 0 : i32
    return %arg0, %c0_i32, %c0_i32_0 : i32, i32, i32
  }
}

</mosaic_0001>

<llo_original>
// kernel: tpu_custom_call.1
$region0: #{tpu_custom_call.1}
  #allocation0 [shape = 'u32[]', space=smem, size = 0x4, offset = 0x4, fixed_abs, tag = 'smem constant byte address 0x4 - core index']
  #allocation1 [shape = 'u32[72,128]{1,0:T(1,128)}', space=vmem, size = 0x9000, scoped, tag = 'internal scratch']
  #allocation2 [shape = 'f32[8,128]{1,0:T(8,128)}', space=vmem, size = 0x1000, scoped, tag = 'scratch operand']
  #allocation3 [shape = 's32[1]{0}', space=sflag, size = 0x4, scoped, tag = 'scoped memory for tpu_custom_call.1']
  #allocation4 [shape = 'u8[512]{0}', space=smem, size = 0x200, scoped, tag = 'prefetched SMEM operand 0']
  %s0 = inlined_call_operand.vmem [shape: s32[2], index: 0, kind: input, shape index: {}]
  %s1 = inlined_call_operand.vmem [shape: f32[2,8,128], index: 1, kind: input, shape index: {}]
  %s2 = inlined_call_operand.vmem [shape: f32[8,128], index: 2, kind: input, shape index: {}]
  %s3 = inlined_call_operand.vmem [shape: f32[8,8], index: 3, kind: input, shape index: {}]
  %s4 = inlined_call_operand.vmem [shape: f32[2,1,128], index: 4, kind: input, shape index: {}]
  %s5 = inlined_call_operand.vmem [shape: f32[2,1,128], index: 5, kind: input, shape index: {}]
  %s6 = inlined_call_operand.vmem [shape: bf16[2,4,128,32], index: 6, kind: input, shape index: {}]
  %s7 = inlined_call_operand.vmem [shape: bf16[2,4,128,32], index: 7, kind: input, shape index: {}]
  %s8 = inlined_call_operand.vmem [shape: bf16[2,4,128,32], index: 8, kind: input, shape index: {}]
  %s9 = inlined_call_operand.vmem [shape: f32[2,4,1,32], index: 9, kind: input, shape index: {}]
  %s10 = inlined_call_operand.vmem [shape: f32[2,4,1,32], index: 10, kind: input, shape index: {}]
  %s11 = inlined_call_operand.vmem [shape: f32[2,4,1,32], index: 11, kind: input, shape index: {}]
  %s12 = inlined_call_operand.vmem [shape: bf16[2,4,32,128], index: 12, kind: input, shape index: {}]
  %s13 = inlined_call_operand.vmem [shape: f32[2,1,128], index: 13, kind: input, shape index: {}]
  %s14 = inlined_call_operand.vmem [shape: f32[2,1,128], index: 14, kind: input, shape index: {}]
  %s15 = inlined_call_operand.vmem [shape: f32[2,1,128], index: 15, kind: input, shape index: {}]
  %s16 = inlined_call_operand.vmem [shape: bf16[2,128,512], index: 16, kind: input, shape index: {}]
  %s17 = inlined_call_operand.vmem [shape: f32[2,1,512], index: 17, kind: input, shape index: {}]
  %s18 = inlined_call_operand.vmem [shape: bf16[2,512,128], index: 18, kind: input, shape index: {}]
  %s19 = inlined_call_operand.vmem [shape: f32[2,1,128], index: 19, kind: input, shape index: {}]
  %s20 = inlined_call_operand.vmem [shape: f32[1,128], index: 20, kind: input, shape index: {}]
  %s21 = inlined_call_operand.vmem [shape: f32[1,128], index: 21, kind: input, shape index: {}]
  %s22 = inlined_call_operand.vmem [shape: bf16[128,128], index: 22, kind: input, shape index: {}]
  %s23 = inlined_call_operand.hbm [shape: f32[2,1,128], index: 23, kind: output, shape index: {}]
  %s24 = sld [smem:[#allocation0]]
  $region129: #{tpu_custom_call.1} parent=0
    _
  %s26 = ssub.s32 1, %s24
  %s27 = scalar_select 0, %s26, %s24
  %s29 = sshll.u32 %s0, 4
  %s30 = int_to_ptr.vmem [resolvable:$true] %s29
  %32 = dma.vmem_to_smem %s30, 16, [#allocation4], [#allocation3]
  %34 = dma.done [#allocation3], 16
  %35 = sfence
  $region1: #{tpu_custom_call.1} parent=0
    #allocation5 [shape = 'u8[1024]{0}', space=vmem, size = 0x400, scoped, tag = 'output window, operand 0']
    #allocation6 [shape = 's32[2]{0}', space=sflag, size = 0x8, scoped, tag = 'scoped memory for tpu_custom_call.1']
    %36 = vsyncpa [#allocation6], 0
    %s37 = scalar_lea.sflag [#allocation6], 1
    %38 = vsyncpa %s37, 0
    loop: start=0, step=1, limit=6
    $region2: #{tpu_custom_call.1} parent=1 // loop_pre_header
      _
    $region3: #{tpu_custom_call.1} parent=1 // loop_header
      %s40 = sphi 0, %s44
      %p41 = scmp.ge.s32.totalorder %s40, 6
      %s47 = sphi 0, %s59
      %s48 = sphi 0, %s55
      %s49 = sphi 0, %s47
      %s50 = sphi 0, %s48
      %s51 = sphi 0, %s49
      %s52 = sphi 0, %s50
      %s62 = sphi 0, %s64
      %s65 = sphi 0, %s62
      %s66 = sphi 0, %s65
      %s82 = sphi 0, %s66
      %s86 = sphi 0, %s86
      %s88 = sphi 0, %s86
      %s89 = sphi 0, %s88
      %s103 = sphi 0, %s89
      %s107 = sphi 0, %s107
      %s109 = sphi 0, %s107
      %s110 = sphi 0, %s109
      %s124 = sphi 0, %s110
      %s130 = sphi 0, %s132
      %s133 = sphi 0, %s130
      %s134 = sphi 0, %s133
      %s150 = sphi 0, %s134
      %s156 = sphi 0, %s158
      %s159 = sphi 0, %s156
      %s160 = sphi 0, %s159
      %s176 = sphi 0, %s160
      %s182 = sphi 0, %s184
      %s185 = sphi 0, %s182
      %s186 = sphi 0, %s185
      %s202 = sphi 0, %s186
      %s208 = sphi 0, %s210
      %s211 = sphi 0, %s208
      %s212 = sphi 0, %s211
      %s228 = sphi 0, %s212
      %s234 = sphi 0, %s236
      %s237 = sphi 0, %s234
      %s238 = sphi 0, %s237
      %s254 = sphi 0, %s238
      %s260 = sphi 0, %s262
      %s263 = sphi 0, %s260
      %s264 = sphi 0, %s263
      %s280 = sphi 0, %s264
      %s286 = sphi 0, %s288
      %s289 = sphi 0, %s286
      %s290 = sphi 0, %s289
      %s306 = sphi 0, %s290
      %s312 = sphi 0, %s314
      %s315 = sphi 0, %s312
      %s316 = sphi 0, %s315
      %s332 = sphi 0, %s316
      %s338 = sphi 0, %s340
      %s341 = sphi 0, %s338
      %s342 = sphi 0, %s341
      %s358 = sphi 0, %s342
      %s364 = sphi 0, %s366
      %s367 = sphi 0, %s364
      %s368 = sphi 0, %s367
      %s384 = sphi 0, %s368
      %s390 = sphi 0, %s392
      %s393 = sphi 0, %s390
      %s394 = sphi 0, %s393
      %s410 = sphi 0, %s394
      %s416 = sphi 0, %s418
      %s419 = sphi 0, %s416
      %s420 = sphi 0, %s419
      %s436 = sphi 0, %s420
      %s442 = sphi 0, %s444
      %s445 = sphi 0, %s442
      %s446 = sphi 0, %s445
      %s462 = sphi 0, %s446
      %s468 = sphi 0, %s470
      %s471 = sphi 0, %s468
      %s472 = sphi 0, %s471
      %s488 = sphi 0, %s472
      %s494 = sphi 0, %s496
      %s497 = sphi 0, %s494
      %s498 = sphi 0, %s497
      %s514 = sphi 0, %s498
      %s520 = sphi 0, %s522
      %s523 = sphi 0, %s520
      %s524 = sphi 0, %s523
      %s540 = sphi 0, %s524
      %s544 = sphi 0, %s544
      %s546 = sphi 0, %s544
      %s547 = sphi 0, %s546
      %s561 = sphi 0, %s547
      %s565 = sphi 0, %s565
      %s567 = sphi 0, %s565
      %s568 = sphi 0, %s567
      %s582 = sphi 0, %s568
      %s586 = sphi 0, %s586
      %s588 = sphi 0, %s586
      %s589 = sphi 0, %s588
      %s603 = sphi 0, %s589
      %s609 = sphi 0, %s611
      %s612 = sphi 0, %s609
      %s613 = sphi 0, %s612
      %s629 = sphi 0, %s613
    $region4: #{tpu_custom_call.1} parent=1 // loop_header_branch
      %43 = sbr.rel (%p41) target = $region8
    $region5: #{tpu_custom_call.1} parent=1 // loop_body
      %s45 = ssub.s32 %s40, 1
      %s46 = ssub.s32 %s40, 2
      %s53 = sadd.s32 1, %s48
      %p54 = scmp.ge.s32.totalorder %s53, 2
      %s55 = scalar_select %p54, 0, %s53
      %s56 = sadd.s32 1, %s47
      %s57 = scalar_select %p54, %s56, %s47
      %p58 = scmp.ge.s32.totalorder %s57, 2
      %s59 = scalar_select %p58, 0, %s57
      %s60 = ssub.s32 %s47, %s59
      %p61 = scmp.eq.s32.totalorder %s60, 0
      %s63 = sadd.s32 %s62, 1
      %s64 = scalar_select %p61, %s62, %s63
      %p67 = pneg %p61
      %p68 = scmp.eq.s32.totalorder %s40, 3
      %p69 = por %p67, %p68
      %p70 = scmp.ne.s32.totalorder %s62, %s65
      %p71 = scmp.eq.s32.totalorder %s40, 0
      %p72 = por %p70, %p71
      %p73 = scmp.ne.s32.totalorder %s62, %s65
      %p74 = scmp.eq.s32.totalorder %s45, 3
      %p75 = por %p73, %p74
      %p76 = scmp.ne.s32.totalorder %s65, %s66
      %p77 = scmp.eq.s32.totalorder %s45, 0
      %p78 = por %p76, %p77
      %p79 = scmp.ne.s32.totalorder %s65, %s66
      %p80 = scmp.eq.s32.totalorder %s46, 3
      %p81 = por %p79, %p80
      %p83 = scmp.ne.s32.totalorder %s66, %s82
      %p84 = scmp.eq.s32.totalorder %s46, 0
      %p85 = por %p83, %p84
      %s87 = sadd.s32 %s86, 1
      %p90 = scmp.eq.s32.totalorder %s40, 3
      %p91 = scmp.ne.s32.totalorder %s86, %s88
      %p92 = scmp.eq.s32.totalorder %s40, 0
      %p93 = por %p91, %p92
      %p94 = scmp.ne.s32.totalorder %s86, %s88
      %p95 = scmp.eq.s32.totalorder %s45, 3
      %p96 = por %p94, %p95
      %p97 = scmp.ne.s32.totalorder %s88, %s89
      %p98 = scmp.eq.s32.totalorder %s45, 0
      %p99 = por %p97, %p98
      %p100 = scmp.ne.s32.totalorder %s88, %s89
      %p101 = scmp.eq.s32.totalorder %s46, 3
      %p102 = por %p100, %p101
      %p104 = scmp.ne.s32.totalorder %s89, %s103
      %p105 = scmp.eq.s32.totalorder %s46, 0
      %p106 = por %p104, %p105
      %s108 = sadd.s32 %s107, 1
      %p111 = scmp.eq.s32.totalorder %s40, 3
      %p112 = scmp.ne.s32.totalorder %s107, %s109
      %p113 = scmp.eq.s32.totalorder %s40, 0
      %p114 = por %p112, %p113
      %p115 = scmp.ne.s32.totalorder %s107, %s109
      %p116 = scmp.eq.s32.totalorder %s45, 3
      %p117 = por %p115, %p116
      %p118 = scmp.ne.s32.totalorder %s109, %s110
      %p119 = scmp.eq.s32.totalorder %s45, 0
      %p120 = por %p118, %p119
      %p121 = scmp.ne.s32.totalorder %s109, %s110
      %p122 = scmp.eq.s32.totalorder %s46, 3
      %p123 = por %p121, %p122
      %p125 = scmp.ne.s32.totalorder %s110, %s124
      %p126 = scmp.eq.s32.totalorder %s46, 0
      %p127 = por %p125, %p126
      %s128 = ssub.s32 %s48, %s55
      %p129 = scmp.eq.s32.totalorder %s128, 0
      %s131 = sadd.s32 %s130, 1
      %s132 = scalar_select %p129, %s130, %s131
      %p135 = pneg %p129
      %p136 = scmp.eq.s32.totalorder %s40, 3
      %p137 = por %p135, %p136
      %p138 = scmp.ne.s32.totalorder %s130, %s133
      %p139 = scmp.eq.s32.totalorder %s40, 0
      %p140 = por %p138, %p139
      %p141 = scmp.ne.s32.totalorder %s130, %s133
      %p142 = scmp.eq.s32.totalorder %s45, 3
      %p143 = por %p141, %p142
      %p144 = scmp.ne.s32.totalorder %s133, %s134
      %p145 = scmp.eq.s32.totalorder %s45, 0
      %p146 = por %p144, %p145
      %p147 = scmp.ne.s32.totalorder %s133, %s134
      %p148 = scmp.eq.s32.totalorder %s46, 3
      %p149 = por %p147, %p148
      %p151 = scmp.ne.s32.totalorder %s134, %s150
      %p152 = scmp.eq.s32.totalorder %s46, 0
      %p153 = por %p151, %p152
      %s154 = ssub.s32 %s48, %s55
      %p155 = scmp.eq.s32.totalorder %s154, 0
      %s157 = sadd.s32 %s156, 1
      %s158 = scalar_select %p155, %s156, %s157
      %p161 = pneg %p155
      %p162 = scmp.eq.s32.totalorder %s40, 3
      %p163 = por %p161, %p162
      %p164 = scmp.ne.s32.totalorder %s156, %s159
      %p165 = scmp.eq.s32.totalorder %s40, 0
      %p166 = por %p164, %p165
      %p167 = scmp.ne.s32.totalorder %s156, %s159
      %p168 = scmp.eq.s32.totalorder %s45, 3
      %p169 = por %p167, %p168
      %p170 = scmp.ne.s32.totalorder %s159, %s160
      %p171 = scmp.eq.s32.totalorder %s45, 0
      %p172 = por %p170, %p171
      %p173 = scmp.ne.s32.totalorder %s159, %s160
      %p174 = scmp.eq.s32.totalorder %s46, 3
      %p175 = por %p173, %p174
      %p177 = scmp.ne.s32.totalorder %s160, %s176
      %p178 = scmp.eq.s32.totalorder %s46, 0
      %p179 = por %p177, %p178
      %s180 = ssub.s32 %s48, %s55
      %p181 = scmp.eq.s32.totalorder %s180, 0
      %s183 = sadd.s32 %s182, 1
      %s184 = scalar_select %p181, %s182, %s183
      %p187 = pneg %p181
      %p188 = scmp.eq.s32.totalorder %s40, 3
      %p189 = por %p187, %p188
      %p190 = scmp.ne.s32.totalorder %s182, %s185
      %p191 = scmp.eq.s32.totalorder %s40, 0
      %p192 = por %p190, %p191
      %p193 = scmp.ne.s32.totalorder %s182, %s185
      %p194 = scmp.eq.s32.totalorder %s45, 3
      %p195 = por %p193, %p194
      %p196 = scmp.ne.s32.totalorder %s185, %s186
      %p197 = scmp.eq.s32.totalorder %s45, 0
      %p198 = por %p196, %p197
      %p199 = scmp.ne.s32.totalorder %s185, %s186
      %p200 = scmp.eq.s32.totalorder %s46, 3
      %p201 = por %p199, %p200
      %p203 = scmp.ne.s32.totalorder %s186, %s202
      %p204 = scmp.eq.s32.totalorder %s46, 0
      %p205 = por %p203, %p204
      %s206 = ssub.s32 %s48, %s55
      %p207 = scmp.eq.s32.totalorder %s206, 0
      %s209 = sadd.s32 %s208, 1
      %s210 = scalar_select %p207, %s208, %s209
      %p213 = pneg %p207
      %p214 = scmp.eq.s32.totalorder %s40, 3
      %p215 = por %p213, %p214
      %p216 = scmp.ne.s32.totalorder %s208, %s211
      %p217 = scmp.eq.s32.totalorder %s40, 0
      %p218 = por %p216, %p217
      %p219 = scmp.ne.s32.totalorder %s208, %s211
      %p220 = scmp.eq.s32.totalorder %s45, 3
      %p221 = por %p219, %p220
      %p222 = scmp.ne.s32.totalorder %s211, %s212
      %p223 = scmp.eq.s32.totalorder %s45, 0
      %p224 = por %p222, %p223
      %p225 = scmp.ne.s32.totalorder %s211, %s212
      %p226 = scmp.eq.s32.totalorder %s46, 3
      %p227 = por %p225, %p226
      %p229 = scmp.ne.s32.totalorder %s212, %s228
      %p230 = scmp.eq.s32.totalorder %s46, 0
      %p231 = por %p229, %p230
      %s232 = ssub.s32 %s48, %s55
      %p233 = scmp.eq.s32.totalorder %s232, 0
      %s235 = sadd.s32 %s234, 1
      %s236 = scalar_select %p233, %s234, %s235
      %p239 = pneg %p233
      %p240 = scmp.eq.s32.totalorder %s40, 3
      %p241 = por %p239, %p240
      %p242 = scmp.ne.s32.totalorder %s234, %s237
      %p243 = scmp.eq.s32.totalorder %s40, 0
      %p244 = por %p242, %p243
      %p245 = scmp.ne.s32.totalorder %s234, %s237
      %p246 = scmp.eq.s32.totalorder %s45, 3
      %p247 = por %p245, %p246
      %p248 = scmp.ne.s32.totalorder %s237, %s238
      %p249 = scmp.eq.s32.totalorder %s45, 0
      %p250 = por %p248, %p249
      %p251 = scmp.ne.s32.totalorder %s237, %s238
      %p252 = scmp.eq.s32.totalorder %s46, 3
      %p253 = por %p251, %p252
      %p255 = scmp.ne.s32.totalorder %s238, %s254
      %p256 = scmp.eq.s32.totalorder %s46, 0
      %p257 = por %p255, %p256
      %s258 = ssub.s32 %s48, %s55
      %p259 = scmp.eq.s32.totalorder %s258, 0
      %s261 = sadd.s32 %s260, 1
      %s262 = scalar_select %p259, %s260, %s261
      %p265 = pneg %p259
      %p266 = scmp.eq.s32.totalorder %s40, 3
      %p267 = por %p265, %p266
      %p268 = scmp.ne.s32.totalorder %s260, %s263
      %p269 = scmp.eq.s32.totalorder %s40, 0
      %p270 = por %p268, %p269
      %p271 = scmp.ne.s32.totalorder %s260, %s263
      %p272 = scmp.eq.s32.totalorder %s45, 3
      %p273 = por %p271, %p272
      %p274 = scmp.ne.s32.totalorder %s263, %s264
      %p275 = scmp.eq.s32.totalorder %s45, 0
      %p276 = por %p274, %p275
      %p277 = scmp.ne.s32.totalorder %s263, %s264
      %p278 = scmp.eq.s32.totalorder %s46, 3
      %p279 = por %p277, %p278
      %p281 = scmp.ne.s32.totalorder %s264, %s280
      %p282 = scmp.eq.s32.totalorder %s46, 0
      %p283 = por %p281, %p282
      %s284 = ssub.s32 %s48, %s55
      %p285 = scmp.eq.s32.totalorder %s284, 0
      %s287 = sadd.s32 %s286, 1
      %s288 = scalar_select %p285, %s286, %s287
      %p291 = pneg %p285
      %p292 = scmp.eq.s32.totalorder %s40, 3
      %p293 = por %p291, %p292
      %p294 = scmp.ne.s32.totalorder %s286, %s289
      %p295 = scmp.eq.s32.totalorder %s40, 0
      %p296 = por %p294, %p295
      %p297 = scmp.ne.s32.totalorder %s286, %s289
      %p298 = scmp.eq.s32.totalorder %s45, 3
      %p299 = por %p297, %p298
      %p300 = scmp.ne.s32.totalorder %s289, %s290
      %p301 = scmp.eq.s32.totalorder %s45, 0
      %p302 = por %p300, %p301
      %p303 = scmp.ne.s32.totalorder %s289, %s290
      %p304 = scmp.eq.s32.totalorder %s46, 3
      %p305 = por %p303, %p304
      %p307 = scmp.ne.s32.totalorder %s290, %s306
      %p308 = scmp.eq.s32.totalorder %s46, 0
      %p309 = por %p307, %p308
      %s310 = ssub.s32 %s48, %s55
      %p311 = scmp.eq.s32.totalorder %s310, 0
      %s313 = sadd.s32 %s312, 1
      %s314 = scalar_select %p311, %s312, %s313
      %p317 = pneg %p311
      %p318 = scmp.eq.s32.totalorder %s40, 3
      %p319 = por %p317, %p318
      %p320 = scmp.ne.s32.totalorder %s312, %s315
      %p321 = scmp.eq.s32.totalorder %s40, 0
      %p322 = por %p320, %p321
      %p323 = scmp.ne.s32.totalorder %s312, %s315
      %p324 = scmp.eq.s32.totalorder %s45, 3
      %p325 = por %p323, %p324
      %p326 = scmp.ne.s32.totalorder %s315, %s316
      %p327 = scmp.eq.s32.totalorder %s45, 0
      %p328 = por %p326, %p327
      %p329 = scmp.ne.s32.totalorder %s315, %s316
      %p330 = scmp.eq.s32.totalorder %s46, 3
      %p331 = por %p329, %p330
      %p333 = scmp.ne.s32.totalorder %s316, %s332
      %p334 = scmp.eq.s32.totalorder %s46, 0
      %p335 = por %p333, %p334
      %s336 = ssub.s32 %s48, %s55
      %p337 = scmp.eq.s32.totalorder %s336, 0
      %s339 = sadd.s32 %s338, 1
      %s340 = scalar_select %p337, %s338, %s339
      %p343 = pneg %p337
      %p344 = scmp.eq.s32.totalorder %s40, 3
      %p345 = por %p343, %p344
      %p346 = scmp.ne.s32.totalorder %s338, %s341
      %p347 = scmp.eq.s32.totalorder %s40, 0
      %p348 = por %p346, %p347
      %p349 = scmp.ne.s32.totalorder %s338, %s341
      %p350 = scmp.eq.s32.totalorder %s45, 3
      %p351 = por %p349, %p350
      %p352 = scmp.ne.s32.totalorder %s341, %s342
      %p353 = scmp.eq.s32.totalorder %s45, 0
      %p354 = por %p352, %p353
      %p355 = scmp.ne.s32.totalorder %s341, %s342
      %p356 = scmp.eq.s32.totalorder %s46, 3
      %p357 = por %p355, %p356
      %p359 = scmp.ne.s32.totalorder %s342, %s358
      %p360 = scmp.eq.s32.totalorder %s46, 0
      %p361 = por %p359, %p360
      %s362 = ssub.s32 %s48, %s55
      %p363 = scmp.eq.s32.totalorder %s362, 0
      %s365 = sadd.s32 %s364, 1
      %s366 = scalar_select %p363, %s364, %s365
      %p369 = pneg %p363
      %p370 = scmp.eq.s32.totalorder %s40, 3
      %p371 = por %p369, %p370
      %p372 = scmp.ne.s32.totalorder %s364, %s367
      %p373 = scmp.eq.s32.totalorder %s40, 0
      %p374 = por %p372, %p373
      %p375 = scmp.ne.s32.totalorder %s364, %s367
      %p376 = scmp.eq.s32.totalorder %s45, 3
      %p377 = por %p375, %p376
      %p378 = scmp.ne.s32.totalorder %s367, %s368
      %p379 = scmp.eq.s32.totalorder %s45, 0
      %p380 = por %p378, %p379
      %p381 = scmp.ne.s32.totalorder %s367, %s368
      %p382 = scmp.eq.s32.totalorder %s46, 3
      %p383 = por %p381, %p382
      %p385 = scmp.ne.s32.totalorder %s368, %s384
      %p386 = scmp.eq.s32.totalorder %s46, 0
      %p387 = por %p385, %p386
      %s388 = ssub.s32 %s48, %s55
      %p389 = scmp.eq.s32.totalorder %s388, 0
      %s391 = sadd.s32 %s390, 1
      %s392 = scalar_select %p389, %s390, %s391
      %p395 = pneg %p389
      %p396 = scmp.eq.s32.totalorder %s40, 3
      %p397 = por %p395, %p396
      %p398 = scmp.ne.s32.totalorder %s390, %s393
      %p399 = scmp.eq.s32.totalorder %s40, 0
      %p400 = por %p398, %p399
      %p401 = scmp.ne.s32.totalorder %s390, %s393
      %p402 = scmp.eq.s32.totalorder %s45, 3
      %p403 = por %p401, %p402
      %p404 = scmp.ne.s32.totalorder %s393, %s394
      %p405 = scmp.eq.s32.totalorder %s45, 0
      %p406 = por %p404, %p405
      %p407 = scmp.ne.s32.totalorder %s393, %s394
      %p408 = scmp.eq.s32.totalorder %s46, 3
      %p409 = por %p407, %p408
      %p411 = scmp.ne.s32.totalorder %s394, %s410
      %p412 = scmp.eq.s32.totalorder %s46, 0
      %p413 = por %p411, %p412
      %s414 = ssub.s32 %s48, %s55
      %p415 = scmp.eq.s32.totalorder %s414, 0
      %s417 = sadd.s32 %s416, 1
      %s418 = scalar_select %p415, %s416, %s417
      %p421 = pneg %p415
      %p422 = scmp.eq.s32.totalorder %s40, 3
      %p423 = por %p421, %p422
      %p424 = scmp.ne.s32.totalorder %s416, %s419
      %p425 = scmp.eq.s32.totalorder %s40, 0
      %p426 = por %p424, %p425
      %p427 = scmp.ne.s32.totalorder %s416, %s419
      %p428 = scmp.eq.s32.totalorder %s45, 3
      %p429 = por %p427, %p428
      %p430 = scmp.ne.s32.totalorder %s419, %s420
      %p431 = scmp.eq.s32.totalorder %s45, 0
      %p432 = por %p430, %p431
      %p433 = scmp.ne.s32.totalorder %s419, %s420
      %p434 = scmp.eq.s32.totalorder %s46, 3
      %p435 = por %p433, %p434
      %p437 = scmp.ne.s32.totalorder %s420, %s436
      %p438 = scmp.eq.s32.totalorder %s46, 0
      %p439 = por %p437, %p438
      %s440 = ssub.s32 %s48, %s55
      %p441 = scmp.eq.s32.totalorder %s440, 0
      %s443 = sadd.s32 %s442, 1
      %s444 = scalar_select %p441, %s442, %s443
      %p447 = pneg %p441
      %p448 = scmp.eq.s32.totalorder %s40, 3
      %p449 = por %p447, %p448
      %p450 = scmp.ne.s32.totalorder %s442, %s445
      %p451 = scmp.eq.s32.totalorder %s40, 0
      %p452 = por %p450, %p451
      %p453 = scmp.ne.s32.totalorder %s442, %s445
      %p454 = scmp.eq.s32.totalorder %s45, 3
      %p455 = por %p453, %p454
      %p456 = scmp.ne.s32.totalorder %s445, %s446
      %p457 = scmp.eq.s32.totalorder %s45, 0
      %p458 = por %p456, %p457
      %p459 = scmp.ne.s32.totalorder %s445, %s446
      %p460 = scmp.eq.s32.totalorder %s46, 3
      %p461 = por %p459, %p460
      %p463 = scmp.ne.s32.totalorder %s446, %s462
      %p464 = scmp.eq.s32.totalorder %s46, 0
      %p465 = por %p463, %p464
      %s466 = ssub.s32 %s48, %s55
      %p467 = scmp.eq.s32.totalorder %s466, 0
      %s469 = sadd.s32 %s468, 1
      %s470 = scalar_select %p467, %s468, %s469
      %p473 = pneg %p467
      %p474 = scmp.eq.s32.totalorder %s40, 3
      %p475 = por %p473, %p474
      %p476 = scmp.ne.s32.totalorder %s468, %s471
      %p477 = scmp.eq.s32.totalorder %s40, 0
      %p478 = por %p476, %p477
      %p479 = scmp.ne.s32.totalorder %s468, %s471
      %p480 = scmp.eq.s32.totalorder %s45, 3
      %p481 = por %p479, %p480
      %p482 = scmp.ne.s32.totalorder %s471, %s472
      %p483 = scmp.eq.s32.totalorder %s45, 0
      %p484 = por %p482, %p483
      %p485 = scmp.ne.s32.totalorder %s471, %s472
      %p486 = scmp.eq.s32.totalorder %s46, 3
      %p487 = por %p485, %p486
      %p489 = scmp.ne.s32.totalorder %s472, %s488
      %p490 = scmp.eq.s32.totalorder %s46, 0
      %p491 = por %p489, %p490
      %s492 = ssub.s32 %s48, %s55
      %p493 = scmp.eq.s32.totalorder %s492, 0
      %s495 = sadd.s32 %s494, 1
      %s496 = scalar_select %p493, %s494, %s495
      %p499 = pneg %p493
      %p500 = scmp.eq.s32.totalorder %s40, 3
      %p501 = por %p499, %p500
      %p502 = scmp.ne.s32.totalorder %s494, %s497
      %p503 = scmp.eq.s32.totalorder %s40, 0
      %p504 = por %p502, %p503
      %p505 = scmp.ne.s32.totalorder %s494, %s497
      %p506 = scmp.eq.s32.totalorder %s45, 3
      %p507 = por %p505, %p506
      %p508 = scmp.ne.s32.totalorder %s497, %s498
      %p509 = scmp.eq.s32.totalorder %s45, 0
      %p510 = por %p508, %p509
      %p511 = scmp.ne.s32.totalorder %s497, %s498
      %p512 = scmp.eq.s32.totalorder %s46, 3
      %p513 = por %p511, %p512
      %p515 = scmp.ne.s32.totalorder %s498, %s514
      %p516 = scmp.eq.s32.totalorder %s46, 0
      %p517 = por %p515, %p516
      %s518 = ssub.s32 %s48, %s55
      %p519 = scmp.eq.s32.totalorder %s518, 0
      %s521 = sadd.s32 %s520, 1
      %s522 = scalar_select %p519, %s520, %s521
      %p525 = pneg %p519
      %p526 = scmp.eq.s32.totalorder %s40, 3
      %p527 = por %p525, %p526
      %p528 = scmp.ne.s32.totalorder %s520, %s523
      %p529 = scmp.eq.s32.totalorder %s40, 0
      %p530 = por %p528, %p529
      %p531 = scmp.ne.s32.totalorder %s520, %s523
      %p532 = scmp.eq.s32.totalorder %s45, 3
      %p533 = por %p531, %p532
      %p534 = scmp.ne.s32.totalorder %s523, %s524
      %p535 = scmp.eq.s32.totalorder %s45, 0
      %p536 = por %p534, %p535
      %p537 = scmp.ne.s32.totalorder %s523, %s524
      %p538 = scmp.eq.s32.totalorder %s46, 3
      %p539 = por %p537, %p538
      %p541 = scmp.ne.s32.totalorder %s524, %s540
      %p542 = scmp.eq.s32.totalorder %s46, 0
      %p543 = por %p541, %p542
      %s545 = sadd.s32 %s544, 1
      %p548 = scmp.eq.s32.totalorder %s40, 3
      %p549 = scmp.ne.s32.totalorder %s544, %s546
      %p550 = scmp.eq.s32.totalorder %s40, 0
      %p551 = por %p549, %p550
      %p552 = scmp.ne.s32.totalorder %s544, %s546
      %p553 = scmp.eq.s32.totalorder %s45, 3
      %p554 = por %p552, %p553
      %p555 = scmp.ne.s32.totalorder %s546, %s547
      %p556 = scmp.eq.s32.totalorder %s45, 0
      %p557 = por %p555, %p556
      %p558 = scmp.ne.s32.totalorder %s546, %s547
      %p559 = scmp.eq.s32.totalorder %s46, 3
      %p560 = por %p558, %p559
      %p562 = scmp.ne.s32.totalorder %s547, %s561
      %p563 = scmp.eq.s32.totalorder %s46, 0
      %p564 = por %p562, %p563
      %s566 = sadd.s32 %s565, 1
      %p569 = scmp.eq.s32.totalorder %s40, 3
      %p570 = scmp.ne.s32.totalorder %s565, %s567
      %p571 = scmp.eq.s32.totalorder %s40, 0
      %p572 = por %p570, %p571
      %p573 = scmp.ne.s32.totalorder %s565, %s567
      %p574 = scmp.eq.s32.totalorder %s45, 3
      %p575 = por %p573, %p574
      %p576 = scmp.ne.s32.totalorder %s567, %s568
      %p577 = scmp.eq.s32.totalorder %s45, 0
      %p578 = por %p576, %p577
      %p579 = scmp.ne.s32.totalorder %s567, %s568
      %p580 = scmp.eq.s32.totalorder %s46, 3
      %p581 = por %p579, %p580
      %p583 = scmp.ne.s32.totalorder %s568, %s582
      %p584 = scmp.eq.s32.totalorder %s46, 0
      %p585 = por %p583, %p584
      %s587 = sadd.s32 %s586, 1
      %p590 = scmp.eq.s32.totalorder %s40, 3
      %p591 = scmp.ne.s32.totalorder %s586, %s588
      %p592 = scmp.eq.s32.totalorder %s40, 0
      %p593 = por %p591, %p592
      %p594 = scmp.ne.s32.totalorder %s586, %s588
      %p595 = scmp.eq.s32.totalorder %s45, 3
      %p596 = por %p594, %p595
      %p597 = scmp.ne.s32.totalorder %s588, %s589
      %p598 = scmp.eq.s32.totalorder %s45, 0
      %p599 = por %p597, %p598
      %p600 = scmp.ne.s32.totalorder %s588, %s589
      %p601 = scmp.eq.s32.totalorder %s46, 3
      %p602 = por %p600, %p601
      %p604 = scmp.ne.s32.totalorder %s589, %s603
      %p605 = scmp.eq.s32.totalorder %s46, 0
      %p606 = por %p604, %p605
      %s607 = ssub.s32 %s47, %s59
      %p608 = scmp.eq.s32.totalorder %s607, 0
      %s610 = sadd.s32 %s609, 1
      %s611 = scalar_select %p608, %s609, %s610
      %p614 = pneg %p608
      %p615 = scmp.eq.s32.totalorder %s40, 3
      %p616 = por %p614, %p615
      %p617 = scmp.ne.s32.totalorder %s609, %s612
      %p618 = scmp.eq.s32.totalorder %s40, 0
      %p619 = por %p617, %p618
      %p620 = scmp.ne.s32.totalorder %s609, %s612
      %p621 = scmp.eq.s32.totalorder %s45, 3
      %p622 = por %p620, %p621
      %p623 = scmp.ne.s32.totalorder %s612, %s613
      %p624 = scmp.eq.s32.totalorder %s45, 0
      %p625 = por %p623, %p624
      %p626 = scmp.ne.s32.totalorder %s612, %s613
      %p627 = scmp.eq.s32.totalorder %s46, 3
      %p628 = por %p626, %p627
      %p630 = scmp.ne.s32.totalorder %s613, %s629
      %p631 = scmp.eq.s32.totalorder %s46, 0
      %p632 = por %p630, %p631
      %p633 = scmp.le.s32.totalorder 1, %s40
      %p634 = scmp.lt.s32.totalorder %s40, 5
      %p635 = pnand %p633, %p634
      %p636 = pneg %p635
      // Predicated region
      $region9: #{tpu_custom_call.1} parent=5 // pred_check
        _
      $region10: #{tpu_custom_call.1} parent=5 // pred_check_branch
        %638 = sbr.rel (%p635) target = $region12
      $region11: #{tpu_custom_call.1} parent=5 // pred_region
        %s639 = ssub.s32 %s40, 1
        // Predicated region
        $region13: #{tpu_custom_call.1} parent=11 // pred_check
          %p640 = pneg %p99
        $region14: #{tpu_custom_call.1} parent=11 // pred_check_branch
          %642 = sbr.rel (%p640) target = $region16
        $region15: #{tpu_custom_call.1} parent=11 // pred_region
          _
        $region16: #{tpu_custom_call.1} parent=11 // pred_fallthru
          _
        // Predicated region
        $region17: #{tpu_custom_call.1} parent=11 // pred_check
          %p643 = pneg %p120
        $region18: #{tpu_custom_call.1} parent=11 // pred_check_branch
          %645 = sbr.rel (%p643) target = $region20
        $region19: #{tpu_custom_call.1} parent=11 // pred_region
          _
        $region20: #{tpu_custom_call.1} parent=11 // pred_fallthru
          _
        // Predicated region
        $region21: #{tpu_custom_call.1} parent=11 // pred_check
          %p646 = pneg %p557
        $region22: #{tpu_custom_call.1} parent=11 // pred_check_branch
          %648 = sbr.rel (%p646) target = $region24
        $region23: #{tpu_custom_call.1} parent=11 // pred_region
          _
        $region24: #{tpu_custom_call.1} parent=11 // pred_fallthru
          _
        // Predicated region
        $region25: #{tpu_custom_call.1} parent=11 // pred_check
          %p649 = pneg %p578
        $region26: #{tpu_custom_call.1} parent=11 // pred_check_branch
          %651 = sbr.rel (%p649) target = $region28
        $region27: #{tpu_custom_call.1} parent=11 // pred_region
          _
        $region28: #{tpu_custom_call.1} parent=11 // pred_fallthru
          _
        // Predicated region
        $region29: #{tpu_custom_call.1} parent=11 // pred_check
          %p652 = pneg %p599
        $region30: #{tpu_custom_call.1} parent=11 // pred_check_branch
          %654 = sbr.rel (%p652) target = $region32
        $region31: #{tpu_custom_call.1} parent=11 // pred_region
          _
        $region32: #{tpu_custom_call.1} parent=11 // pred_fallthru
          _
      $region12: #{tpu_custom_call.1} parent=5 // pred_fallthru
        _
      %p655 = scmp.lt.s32.totalorder %s40, 4
      // Predicated region
      $region33: #{tpu_custom_call.1} parent=5 // pred_check
        %p656 = pneg %p655
      $region34: #{tpu_custom_call.1} parent=5 // pred_check_branch
        %658 = sbr.rel (%p656) target = $region36
      $region35: #{tpu_custom_call.1} parent=5 // pred_region
        // Predicated region
        $region37: #{tpu_custom_call.1} parent=35 // pred_check
          %p659 = pneg %p72
        $region38: #{tpu_custom_call.1} parent=35 // pred_check_branch
          %661 = sbr.rel (%p659) target = $region40
        $region39: #{tpu_custom_call.1} parent=35 // pred_region
          %p662 = scmp.lt.s32.totalorder %s47, 1
          %s663 = scalar_select %p662, %s47, 1
          %s664 = smul.addr %s663, 8
          %s665 = scalar_lea.vmem %s1, %s664
        $region40: #{tpu_custom_call.1} parent=35 // pred_fallthru
          _
        // Predicated region
        $region41: #{tpu_custom_call.1} parent=35 // pred_check
          %p666 = pneg %p140
        $region42: #{tpu_custom_call.1} parent=35 // pred_check_branch
          %668 = sbr.rel (%p666) target = $region44
        $region43: #{tpu_custom_call.1} parent=35 // pred_region
          %p669 = scmp.lt.s32.totalorder %s48, 1
          %s670 = scalar_select %p669, %s48, 1
          %s671 = scalar_lea.vmem %s4, %s670
        $region44: #{tpu_custom_call.1} parent=35 // pred_fallthru
          _
        // Predicated region
        $region45: #{tpu_custom_call.1} parent=35 // pred_check
          %p672 = pneg %p166
        $region46: #{tpu_custom_call.1} parent=35 // pred_check_branch
          %674 = sbr.rel (%p672) target = $region48
        $region47: #{tpu_custom_call.1} parent=35 // pred_region
          %p675 = scmp.lt.s32.totalorder %s48, 1
          %s676 = scalar_select %p675, %s48, 1
          %s677 = scalar_lea.vmem %s5, %s676
        $region48: #{tpu_custom_call.1} parent=35 // pred_fallthru
          _
        // Predicated region
        $region49: #{tpu_custom_call.1} parent=35 // pred_check
          %p678 = pneg %p192
        $region50: #{tpu_custom_call.1} parent=35 // pred_check_branch
          %680 = sbr.rel (%p678) target = $region52
        $region51: #{tpu_custom_call.1} parent=35 // pred_region
          %p681 = scmp.lt.s32.totalorder %s48, 1
          %s682 = scalar_select %p681, %s48, 1
          %s683 = smul.addr %s682, 64
          %s684 = smul.addr %s683, 4
          %s685 = scalar_lea.vmem %s6, %s684
        $region52: #{tpu_custom_call.1} parent=35 // pred_fallthru
          _
        // Predicated region
        $region53: #{tpu_custom_call.1} parent=35 // pred_check
          %p686 = pneg %p218
        $region54: #{tpu_custom_call.1} parent=35 // pred_check_branch
          %688 = sbr.rel (%p686) target = $region56
        $region55: #{tpu_custom_call.1} parent=35 // pred_region
          %p689 = scmp.lt.s32.totalorder %s48, 1
          %s690 = scalar_select %p689, %s48, 1
          %s691 = smul.addr %s690, 64
          %s692 = smul.addr %s691, 4
          %s693 = scalar_lea.vmem %s7, %s692
        $region56: #{tpu_custom_call.1} parent=35 // pred_fallthru
          _
        // Predicated region
        $region57: #{tpu_custom_call.1} parent=35 // pred_check
          %p694 = pneg %p244
        $region58: #{tpu_custom_call.1} parent=35 // pred_check_branch
          %696 = sbr.rel (%p694) target = $region60
        $region59: #{tpu_custom_call.1} parent=35 // pred_region
          %p697 = scmp.lt.s32.totalorder %s48, 1
          %s698 = scalar_select %p697, %s48, 1
          %s699 = smul.addr %s698, 64
          %s700 = smul.addr %s699, 4
          %s701 = scalar_lea.vmem %s8, %s700
        $region60: #{tpu_custom_call.1} parent=35 // pred_fallthru
          _
        // Predicated region
        $region61: #{tpu_custom_call.1} parent=35 // pred_check
          %p702 = pneg %p270
        $region62: #{tpu_custom_call.1} parent=35 // pred_check_branch
          %704 = sbr.rel (%p702) target = $region64
        $region63: #{tpu_custom_call.1} parent=35 // pred_region
          %p705 = scmp.lt.s32.totalorder %s48, 1
          %s706 = scalar_select %p705, %s48, 1
          %s707 = smul.addr %s706, 4
          %s708 = scalar_lea.vmem %s9, %s707
        $region64: #{tpu_custom_call.1} parent=35 // pred_fallthru
          _
        // Predicated region
        $region65: #{tpu_custom_call.1} parent=35 // pred_check
          %p709 = pneg %p296
        $region66: #{tpu_custom_call.1} parent=35 // pred_check_branch
          %711 = sbr.rel (%p709) target = $region68
        $region67: #{tpu_custom_call.1} parent=35 // pred_region
          %p712 = scmp.lt.s32.totalorder %s48, 1
          %s713 = scalar_select %p712, %s48, 1
          %s714 = smul.addr %s713, 4
          %s715 = scalar_lea.vmem %s10, %s714
        $region68: #{tpu_custom_call.1} parent=35 // pred_fallthru
          _
        // Predicated region
        $region69: #{tpu_custom_call.1} parent=35 // pred_check
          %p716 = pneg %p322
        $region70: #{tpu_custom_call.1} parent=35 // pred_check_branch
          %718 = sbr.rel (%p716) target = $region72
        $region71: #{tpu_custom_call.1} parent=35 // pred_region
          %p719 = scmp.lt.s32.totalorder %s48, 1
          %s720 = scalar_select %p719, %s48, 1
          %s721 = smul.addr %s720, 4
          %s722 = scalar_lea.vmem %s11, %s721
        $region72: #{tpu_custom_call.1} parent=35 // pred_fallthru
          _
        // Predicated region
        $region73: #{tpu_custom_call.1} parent=35 // pred_check
          %p723 = pneg %p348
        $region74: #{tpu_custom_call.1} parent=35 // pred_check_branch
          %725 = sbr.rel (%p723) target = $region76
        $region75: #{tpu_custom_call.1} parent=35 // pred_region
          %p726 = scmp.lt.s32.totalorder %s48, 1
          %s727 = scalar_select %p726, %s48, 1
          %s728 = smul.addr %s727, 16
          %s729 = smul.addr %s728, 4
          %s730 = scalar_lea.vmem %s12, %s729
        $region76: #{tpu_custom_call.1} parent=35 // pred_fallthru
          _
        // Predicated region
        $region77: #{tpu_custom_call.1} parent=35 // pred_check
          %p731 = pneg %p374
        $region78: #{tpu_custom_call.1} parent=35 // pred_check_branch
          %733 = sbr.rel (%p731) target = $region80
        $region79: #{tpu_custom_call.1} parent=35 // pred_region
          %p734 = scmp.lt.s32.totalorder %s48, 1
          %s735 = scalar_select %p734, %s48, 1
          %s736 = scalar_lea.vmem %s13, %s735
        $region80: #{tpu_custom_call.1} parent=35 // pred_fallthru
          _
        // Predicated region
        $region81: #{tpu_custom_call.1} parent=35 // pred_check
          %p737 = pneg %p400
        $region82: #{tpu_custom_call.1} parent=35 // pred_check_branch
          %739 = sbr.rel (%p737) target = $region84
        $region83: #{tpu_custom_call.1} parent=35 // pred_region
          %p740 = scmp.lt.s32.totalorder %s48, 1
          %s741 = scalar_select %p740, %s48, 1
          %s742 = scalar_lea.vmem %s14, %s741
        $region84: #{tpu_custom_call.1} parent=35 // pred_fallthru
          _
        // Predicated region
        $region85: #{tpu_custom_call.1} parent=35 // pred_check
          %p743 = pneg %p426
        $region86: #{tpu_custom_call.1} parent=35 // pred_check_branch
          %745 = sbr.rel (%p743) target = $region88
        $region87: #{tpu_custom_call.1} parent=35 // pred_region
          %p746 = scmp.lt.s32.totalorder %s48, 1
          %s747 = scalar_select %p746, %s48, 1
          %s748 = scalar_lea.vmem %s15, %s747
        $region88: #{tpu_custom_call.1} parent=35 // pred_fallthru
          _
        // Predicated region
        $region89: #{tpu_custom_call.1} parent=35 // pred_check
          %p749 = pneg %p452
        $region90: #{tpu_custom_call.1} parent=35 // pred_check_branch
          %751 = sbr.rel (%p749) target = $region92
        $region91: #{tpu_custom_call.1} parent=35 // pred_region
          %p752 = scmp.lt.s32.totalorder %s48, 1
          %s753 = scalar_select %p752, %s48, 1
          %s754 = smul.addr %s753, 64
          %s755 = smul.addr %s754, 4
          %s756 = scalar_lea.vmem %s16, %s755
        $region92: #{tpu_custom_call.1} parent=35 // pred_fallthru
          _
        // Predicated region
        $region93: #{tpu_custom_call.1} parent=35 // pred_check
          %p757 = pneg %p478
        $region94: #{tpu_custom_call.1} parent=35 // pred_check_branch
          %759 = sbr.rel (%p757) target = $region96
        $region95: #{tpu_custom_call.1} parent=35 // pred_region
          %p760 = scmp.lt.s32.totalorder %s48, 1
          %s761 = scalar_select %p760, %s48, 1
          %s762 = smul.addr %s761, 4
          %s763 = scalar_lea.vmem %s17, %s762
        $region96: #{tpu_custom_call.1} parent=35 // pred_fallthru
          _
        // Predicated region
        $region97: #{tpu_custom_call.1} parent=35 // pred_check
          %p764 = pneg %p504
        $region98: #{tpu_custom_call.1} parent=35 // pred_check_branch
          %766 = sbr.rel (%p764) target = $region100
        $region99: #{tpu_custom_call.1} parent=35 // pred_region
          %p767 = scmp.lt.s32.totalorder %s48, 1
          %s768 = scalar_select %p767, %s48, 1
          %s769 = smul.addr %s768, 64
          %s770 = smul.addr %s769, 4
          %s771 = scalar_lea.vmem %s18, %s770
        $region100: #{tpu_custom_call.1} parent=35 // pred_fallthru
          _
        // Predicated region
        $region101: #{tpu_custom_call.1} parent=35 // pred_check
          %p772 = pneg %p530
        $region102: #{tpu_custom_call.1} parent=35 // pred_check_branch
          %774 = sbr.rel (%p772) target = $region104
        $region103: #{tpu_custom_call.1} parent=35 // pred_region
          %p775 = scmp.lt.s32.totalorder %s48, 1
          %s776 = scalar_select %p775, %s48, 1
          %s777 = scalar_lea.vmem %s19, %s776
        $region104: #{tpu_custom_call.1} parent=35 // pred_fallthru
          _
      $region36: #{tpu_custom_call.1} parent=5 // pred_fallthru
        _
      %p778 = scmp.le.s32.totalorder 1, %s40
      %p779 = scmp.lt.s32.totalorder %s40, 5
      %p780 = pnand %p778, %p779
      %p781 = pneg %p780
      // Predicated region
      $region105: #{tpu_custom_call.1} parent=5 // pred_check
        _
      $region106: #{tpu_custom_call.1} parent=5 // pred_check_branch
        %783 = sbr.rel (%p780) target = $region108
      $region107: #{tpu_custom_call.1} parent=5 // pred_region
        %s784 = ssub.s32 %s40, 1
        %p785 = scmp.lt.s32.totalorder %s49, 1
        %s786 = scalar_select %p785, %s49, 1
        %s787 = smul.addr %s786, 8
        %s788 = scalar_lea.vmem %s1, %s787
        %p789 = pneg %p78
        %p790 = pneg %p75
        %p791 = pneg %p99
        %p792 = pneg %p96
        %p793 = pneg %p120
        %p794 = pneg %p117
        %p795 = scmp.lt.s32.totalorder %s50, 1
        %s796 = scalar_select %p795, %s50, 1
        %s797 = scalar_lea.vmem %s4, %s796
        %p798 = pneg %p146
        %p799 = pneg %p143
        %p800 = scmp.lt.s32.totalorder %s50, 1
        %s801 = scalar_select %p800, %s50, 1
        %s802 = scalar_lea.vmem %s5, %s801
        %p803 = pneg %p172
        %p804 = pneg %p169
        %p805 = scmp.lt.s32.totalorder %s50, 1
        %s806 = scalar_select %p805, %s50, 1
        %s807 = smul.addr %s806, 64
        %s808 = smul.addr %s807, 4
        %s809 = scalar_lea.vmem %s6, %s808
        %p810 = pneg %p198
        %p811 = pneg %p195
        %p812 = scmp.lt.s32.totalorder %s50, 1
        %s813 = scalar_select %p812, %s50, 1
        %s814 = smul.addr %s813, 64
        %s815 = smul.addr %s814, 4
        %s816 = scalar_lea.vmem %s7, %s815
        %p817 = pneg %p224
        %p818 = pneg %p221
        %p819 = scmp.lt.s32.totalorder %s50, 1
        %s820 = scalar_select %p819, %s50, 1
        %s821 = smul.addr %s820, 64
        %s822 = smul.addr %s821, 4
        %s823 = scalar_lea.vmem %s8, %s822
        %p824 = pneg %p250
        %p825 = pneg %p247
        %p826 = scmp.lt.s32.totalorder %s50, 1
        %s827 = scalar_select %p826, %s50, 1
        %s828 = smul.addr %s827, 4
        %s829 = scalar_lea.vmem %s9, %s828
        %p830 = pneg %p276
        %p831 = pneg %p273
        %p832 = scmp.lt.s32.totalorder %s50, 1
        %s833 = scalar_select %p832, %s50, 1
        %s834 = smul.addr %s833, 4
        %s835 = scalar_lea.vmem %s10, %s834
        %p836 = pneg %p302
        %p837 = pneg %p299
        %p838 = scmp.lt.s32.totalorder %s50, 1
        %s839 = scalar_select %p838, %s50, 1
        %s840 = smul.addr %s839, 4
        %s841 = scalar_lea.vmem %s11, %s840
        %p842 = pneg %p328
        %p843 = pneg %p325
        %p844 = scmp.lt.s32.totalorder %s50, 1
        %s845 = scalar_select %p844, %s50, 1
        %s846 = smul.addr %s845, 16
        %s847 = smul.addr %s846, 4
        %s848 = scalar_lea.vmem %s12, %s847
        %p849 = pneg %p354
        %p850 = pneg %p351
        %p851 = scmp.lt.s32.totalorder %s50, 1
        %s852 = scalar_select %p851, %s50, 1
        %s853 = scalar_lea.vmem %s13, %s852
        %p854 = pneg %p380
        %p855 = pneg %p377
        %p856 = scmp.lt.s32.totalorder %s50, 1
        %s857 = scalar_select %p856, %s50, 1
        %s858 = scalar_lea.vmem %s14, %s857
        %p859 = pneg %p406
        %p860 = pneg %p403
        %p861 = scmp.lt.s32.totalorder %s50, 1
        %s862 = scalar_select %p861, %s50, 1
        %s863 = scalar_lea.vmem %s15, %s862
        %p864 = pneg %p432
        %p865 = pneg %p429
        %p866 = scmp.lt.s32.totalorder %s50, 1
        %s867 = scalar_select %p866, %s50, 1
        %s868 = smul.addr %s867, 64
        %s869 = smul.addr %s868, 4
        %s870 = scalar_lea.vmem %s16, %s869
        %p871 = pneg %p458
        %p872 = pneg %p455
        %p873 = scmp.lt.s32.totalorder %s50, 1
        %s874 = scalar_select %p873, %s50, 1
        %s875 = smul.addr %s874, 4
        %s876 = scalar_lea.vmem %s17, %s875
        %p877 = pneg %p484
        %p878 = pneg %p481
        %p879 = scmp.lt.s32.totalorder %s50, 1
        %s880 = scalar_select %p879, %s50, 1
        %s881 = smul.addr %s880, 64
        %s882 = smul.addr %s881, 4
        %s883 = scalar_lea.vmem %s18, %s882
        %p884 = pneg %p510
        %p885 = pneg %p507
        %p886 = scmp.lt.s32.totalorder %s50, 1
        %s887 = scalar_select %p886, %s50, 1
        %s888 = scalar_lea.vmem %s19, %s887
        %p889 = pneg %p536
        %p890 = pneg %p533
        %p891 = pneg %p557
        %p892 = pneg %p554
        %p893 = pneg %p578
        %p894 = pneg %p575
        %p895 = pneg %p599
        %p896 = pneg %p596
        %p897 = pneg %p625
        %p898 = pneg %p622
        %s899 = sand.u32 %s612, 1
        %s900 = scalar_lea.sflag [#allocation6], %s899
        %s901 = sand.u32 %s612, 1
        %s902 = scalar_lea.vmem [#allocation5], %s901
        %p903 = scmp.lt.s32.totalorder %s49, 1
        %s904 = scalar_select %p903, %s49, 1
        %s905 = smul.addr %s904, 8
        %s906 = scalar_lea.vmem %s1, %s905
        %p907 = scmp.lt.s32.totalorder %s50, 1
        %s908 = scalar_select %p907, %s50, 1
        %s909 = scalar_lea.vmem %s4, %s908
        %p910 = scmp.lt.s32.totalorder %s50, 1
        %s911 = scalar_select %p910, %s50, 1
        %s912 = scalar_lea.vmem %s5, %s911
        %p913 = scmp.lt.s32.totalorder %s50, 1
        %s914 = scalar_select %p913, %s50, 1
        %s915 = smul.addr %s914, 64
        %s916 = smul.addr %s915, 4
        %s917 = scalar_lea.vmem %s6, %s916
        %p918 = scmp.lt.s32.totalorder %s50, 1
        %s919 = scalar_select %p918, %s50, 1
        %s920 = smul.addr %s919, 64
        %s921 = smul.addr %s920, 4
        %s922 = scalar_lea.vmem %s7, %s921
        %p923 = scmp.lt.s32.totalorder %s50, 1
        %s924 = scalar_select %p923, %s50, 1
        %s925 = smul.addr %s924, 64
        %s926 = smul.addr %s925, 4
        %s927 = scalar_lea.vmem %s8, %s926
        %p928 = scmp.lt.s32.totalorder %s50, 1
        %s929 = scalar_select %p928, %s50, 1
        %s930 = smul.addr %s929, 4
        %s931 = scalar_lea.vmem %s9, %s930
        %p932 = scmp.lt.s32.totalorder %s50, 1
        %s933 = scalar_select %p932, %s50, 1
        %s934 = smul.addr %s933, 4
        %s935 = scalar_lea.vmem %s10, %s934
        %p936 = scmp.lt.s32.totalorder %s50, 1
        %s937 = scalar_select %p936, %s50, 1
        %s938 = smul.addr %s937, 4
        %s939 = scalar_lea.vmem %s11, %s938
        %p940 = scmp.lt.s32.totalorder %s50, 1
        %s941 = scalar_select %p940, %s50, 1
        %s942 = smul.addr %s941, 16
        %s943 = smul.addr %s942, 4
        %s944 = scalar_lea.vmem %s12, %s943
        %p945 = scmp.lt.s32.totalorder %s50, 1
        %s946 = scalar_select %p945, %s50, 1
        %s947 = scalar_lea.vmem %s13, %s946
        %p948 = scmp.lt.s32.totalorder %s50, 1
        %s949 = scalar_select %p948, %s50, 1
        %s950 = scalar_lea.vmem %s14, %s949
        %p951 = scmp.lt.s32.totalorder %s50, 1
        %s952 = scalar_select %p951, %s50, 1
        %s953 = scalar_lea.vmem %s15, %s952
        %p954 = scmp.lt.s32.totalorder %s50, 1
        %s955 = scalar_select %p954, %s50, 1
        %s956 = smul.addr %s955, 64
        %s957 = smul.addr %s956, 4
        %s958 = scalar_lea.vmem %s16, %s957
        %p959 = scmp.lt.s32.totalorder %s50, 1
        %s960 = scalar_select %p959, %s50, 1
        %s961 = smul.addr %s960, 4
        %s962 = scalar_lea.vmem %s17, %s961
        %p963 = scmp.lt.s32.totalorder %s50, 1
        %s964 = scalar_select %p963, %s50, 1
        %s965 = smul.addr %s964, 64
        %s966 = smul.addr %s965, 4
        %s967 = scalar_lea.vmem %s18, %s966
        %p968 = scmp.lt.s32.totalorder %s50, 1
        %s969 = scalar_select %p968, %s50, 1
        %s970 = scalar_lea.vmem %s19, %s969
        %p972 = scmp.eq.s32.totalorder %s50, 0
        // Predicated region
        $region109: #{tpu_custom_call.1} parent=107 // pred_check
          %p973 = pneg %p972
        $region110: #{tpu_custom_call.1} parent=107 // pred_check_branch
          %975 = sbr.rel (%p973) target = $region112
        $region111: #{tpu_custom_call.1} parent=107 // pred_region
          %v976 = vld [vmem:[%s906] sm:$0xff]
          %v977 = vld [vmem:[%s2] sm:$0xff]
          %v978 = vadd.f32 %v976, %v977
          %979 = vst [vmem:[#allocation2] sm:$0xff] %v978
        $region112: #{tpu_custom_call.1} parent=107 // pred_fallthru
          _
        %v980 = vld [vmem:[#allocation2] sm:$0xff]
        %v981 = vld [vmem:[%s909] sm:$0x1]
        %v982 = vld [vmem:[%s912] sm:$0x1]
        %983 = vadd.xlane.f32.xlu0 %v980
        %v984 = vpop.xlane.xlu0 %983
        %v985 = vrcp.pop 128.0
        %v986 = vmul.f32 128.0, %v985
        %v987 = vsub.f32 1.0, %v986
        %v988 = vmul.f32 %v985, %v987
        %v989 = vadd.f32 %v985, %v988
        %vm990 = vweird.f32 %v985
        %v991 = vsel %vm990, %v985, %v989
        %v992 = vmul.f32 %v984, %v991
        %v993 = vsub.f32 %v980, %v992
        %v994 = vmul.f32 %v993, %v993
        %995 = vadd.xlane.f32.xlu0 %v994
        %v996 = vpop.xlane.xlu0 %995
        %v997 = vmul.f32 %v996, %v991
        %v998 = vadd.f32 %v997, 1e-05
        %v999 = vrsqrt.pop %v998
        %v1000 = vmul.f32 %v999, %v998
        %v1001 = vmul.f32 %v1000, %v999
        %v1002 = vmul.f32 0.5, %v1001
        %v1003 = vsub.f32 1.5, %v1002
        %v1004 = vmul.f32 %v999, %v1003
        %vm1005 = vweird.f32 %v998
        %vm1006 = vweird.f32 %v999
        %vm1007 = vmor %vm1005, %vm1006
        %v1008 = vsel %vm1007, %v999, %v1004
        %v1009 = vmul.f32 %v993, %v1008
        %v1011 = vperm.slane %v981, 0
        %v1013 = vmul.f32 %v1009, %v1011
        %v1015 = vperm.slane %v982, 0
        %v1017 = vadd.f32 %v1013, %v1015
        %v1018 = vpack.c.bf16 %v1017, %v1017
        %v1019 = vld [vmem:[%s917] sm:$0xf]
        %v1020 = vld [vmem:[%s917 + $0x4] sm:$0xf]
        %v1021 = vld [vmem:[%s917 + $0x8] sm:$0xf]
        %v1022 = vld [vmem:[%s917 + $0xc] sm:$0xf]
        %v1023 = vld [vmem:[%s917 + $0x10] sm:$0xf]
        %v1024 = vld [vmem:[%s917 + $0x14] sm:$0xf]
        %v1025 = vld [vmem:[%s917 + $0x18] sm:$0xf]
        %v1026 = vld [vmem:[%s917 + $0x1c] sm:$0xf]
        %v1027 = vld [vmem:[%s917 + $0x20] sm:$0xf]
        %v1028 = vld [vmem:[%s917 + $0x24] sm:$0xf]
        %v1029 = vld [vmem:[%s917 + $0x28] sm:$0xf]
        %v1030 = vld [vmem:[%s917 + $0x2c] sm:$0xf]
        %v1031 = vld [vmem:[%s917 + $0x30] sm:$0xf]
        %v1032 = vld [vmem:[%s917 + $0x34] sm:$0xf]
        %v1033 = vld [vmem:[%s917 + $0x38] sm:$0xf]
        %v1034 = vld [vmem:[%s917 + $0x3c] sm:$0xf]
        %v1035 = vld [vmem:[%s917 + $0x40] sm:$0xf]
        %v1036 = vld [vmem:[%s917 + $0x44] sm:$0xf]
        %v1037 = vld [vmem:[%s917 + $0x48] sm:$0xf]
        %v1038 = vld [vmem:[%s917 + $0x4c] sm:$0xf]
        %v1039 = vld [vmem:[%s917 + $0x50] sm:$0xf]
        %v1040 = vld [vmem:[%s917 + $0x54] sm:$0xf]
        %v1041 = vld [vmem:[%s917 + $0x58] sm:$0xf]
        %v1042 = vld [vmem:[%s917 + $0x5c] sm:$0xf]
        %v1043 = vld [vmem:[%s917 + $0x60] sm:$0xf]
        %v1044 = vld [vmem:[%s917 + $0x64] sm:$0xf]
        %v1045 = vld [vmem:[%s917 + $0x68] sm:$0xf]
        %v1046 = vld [vmem:[%s917 + $0x6c] sm:$0xf]
        %v1047 = vld [vmem:[%s917 + $0x70] sm:$0xf]
        %v1048 = vld [vmem:[%s917 + $0x74] sm:$0xf]
        %v1049 = vld [vmem:[%s917 + $0x78] sm:$0xf]
        %v1050 = vld [vmem:[%s917 + $0x7c] sm:$0xf]
        %v1051 = vld [vmem:[%s917 + $0x80] sm:$0xf]
        %v1052 = vld [vmem:[%s917 + $0x84] sm:$0xf]
        %v1053 = vld [vmem:[%s917 + $0x88] sm:$0xf]
        %v1054 = vld [vmem:[%s917 + $0x8c] sm:$0xf]
        %v1055 = vld [vmem:[%s917 + $0x90] sm:$0xf]
        %v1056 = vld [vmem:[%s917 + $0x94] sm:$0xf]
        %v1057 = vld [vmem:[%s917 + $0x98] sm:$0xf]
        %v1058 = vld [vmem:[%s917 + $0x9c] sm:$0xf]
        %v1059 = vld [vmem:[%s917 + $0xa0] sm:$0xf]
        %v1060 = vld [vmem:[%s917 + $0xa4] sm:$0xf]
        %v1061 = vld [vmem:[%s917 + $0xa8] sm:$0xf]
        %v1062 = vld [vmem:[%s917 + $0xac] sm:$0xf]
        %v1063 = vld [vmem:[%s917 + $0xb0] sm:$0xf]
        %v1064 = vld [vmem:[%s917 + $0xb4] sm:$0xf]
        %v1065 = vld [vmem:[%s917 + $0xb8] sm:$0xf]
        %v1066 = vld [vmem:[%s917 + $0xbc] sm:$0xf]
        %v1067 = vld [vmem:[%s917 + $0xc0] sm:$0xf]
        %v1068 = vld [vmem:[%s917 + $0xc4] sm:$0xf]
        %v1069 = vld [vmem:[%s917 + $0xc8] sm:$0xf]
        %v1070 = vld [vmem:[%s917 + $0xcc] sm:$0xf]
        %v1071 = vld [vmem:[%s917 + $0xd0] sm:$0xf]
        %v1072 = vld [vmem:[%s917 + $0xd4] sm:$0xf]
        %v1073 = vld [vmem:[%s917 + $0xd8] sm:$0xf]
        %v1074 = vld [vmem:[%s917 + $0xdc] sm:$0xf]
        %v1075 = vld [vmem:[%s917 + $0xe0] sm:$0xf]
        %v1076 = vld [vmem:[%s917 + $0xe4] sm:$0xf]
        %v1077 = vld [vmem:[%s917 + $0xe8] sm:$0xf]
        %v1078 = vld [vmem:[%s917 + $0xec] sm:$0xf]
        %v1079 = vld [vmem:[%s917 + $0xf0] sm:$0xf]
        %v1080 = vld [vmem:[%s917 + $0xf4] sm:$0xf]
        %v1081 = vld [vmem:[%s917 + $0xf8] sm:$0xf]
        %v1082 = vld [vmem:[%s917 + $0xfc] sm:$0xf]
        %v1083 = vld [vmem:[%s931] sm:$0x1]
        %v1084 = vld [vmem:[%s931 + $0x1] sm:$0x1]
        %v1085 = vld [vmem:[%s931 + $0x2] sm:$0x1]
        %v1086 = vld [vmem:[%s931 + $0x3] sm:$0x1]
        %v1091 = vperm.slane %v1083, 0
        %v1092 = vperm.slane %v1084, 0
        %v1093 = vperm.slane %v1085, 0
        %v1094 = vperm.slane %v1086, 0
        %v1115 = vunpack.c.l.b16 %v1019
        %v1116 = vunpack.c.l.b16 %v1020
        %v1117 = vunpack.c.l.b16 %v1021
        %v1118 = vunpack.c.l.b16 %v1022
        %v1119 = vunpack.c.l.b16 %v1023
        %v1120 = vunpack.c.l.b16 %v1024
        %v1121 = vunpack.c.l.b16 %v1025
        %v1122 = vunpack.c.l.b16 %v1026
        %v1123 = vunpack.c.l.b16 %v1027
        %v1124 = vunpack.c.l.b16 %v1028
        %v1125 = vunpack.c.l.b16 %v1029
        %v1126 = vunpack.c.l.b16 %v1030
        %v1127 = vunpack.c.l.b16 %v1031
        %v1128 = vunpack.c.l.b16 %v1032
        %v1129 = vunpack.c.l.b16 %v1033
        %v1130 = vunpack.c.l.b16 %v1034
        %v1131 = vpack.c.b16 %v1116, %v1115
        %v1132 = vpack.c.b16 %v1118, %v1117
        %v1133 = vpack.c.b16 %v1120, %v1119
        %v1134 = vpack.c.b16 %v1122, %v1121
        %v1135 = vpack.c.b16 %v1124, %v1123
        %v1136 = vpack.c.b16 %v1126, %v1125
        %v1137 = vpack.c.b16 %v1128, %v1127
        %v1138 = vpack.c.b16 %v1130, %v1129
        %1147 = vmatpush.bf16.msra.mxu0 %v1138
        %1148 = vmatpush.bf16.msra.mxu0 %v1137
        %1149 = vmatpush.bf16.msra.mxu0 %v1136
        %1150 = vmatpush.bf16.msra.mxu0 %v1135
        %1151 = vmatpush.bf16.msra.mxu0 %v1134
        %1152 = vmatpush.bf16.msra.mxu0 %v1133
        %1153 = vmatpush.bf16.msra.mxu0 %v1132
        %1154 = vmatpush.bf16.msra.mxu0 %v1131
        %1155 = vmatmul.bf16.gmra.mxu0 %v1018
        %v1156 = vpop.f32.mrf.mxu0
        %v1157 = vadd.f32 %v1091, %v1156
        %v1158 = vpop.f32.mrf.mxu0
        %1159 = vdwg.mxu0
        %v1176 = vunpack.c.l.b16 %v1035
        %v1177 = vunpack.c.l.b16 %v1036
        %v1178 = vunpack.c.l.b16 %v1037
        %v1179 = vunpack.c.l.b16 %v1038
        %v1180 = vunpack.c.l.b16 %v1039
        %v1181 = vunpack.c.l.b16 %v1040
        %v1182 = vunpack.c.l.b16 %v1041
        %v1183 = vunpack.c.l.b16 %v1042
        %v1184 = vunpack.c.l.b16 %v1043
        %v1185 = vunpack.c.l.b16 %v1044
        %v1186 = vunpack.c.l.b16 %v1045
        %v1187 = vunpack.c.l.b16 %v1046
        %v1188 = vunpack.c.l.b16 %v1047
        %v1189 = vunpack.c.l.b16 %v1048
        %v1190 = vunpack.c.l.b16 %v1049
        %v1191 = vunpack.c.l.b16 %v1050
        %v1192 = vpack.c.b16 %v1177, %v1176
        %v1193 = vpack.c.b16 %v1179, %v1178
        %v1194 = vpack.c.b16 %v1181, %v1180
        %v1195 = vpack.c.b16 %v1183, %v1182
        %v1196 = vpack.c.b16 %v1185, %v1184
        %v1197 = vpack.c.b16 %v1187, %v1186
        %v1198 = vpack.c.b16 %v1189, %v1188
        %v1199 = vpack.c.b16 %v1191, %v1190
        %1208 = vmatpush.bf16.msra.mxu0 %v1199
        %1209 = vmatpush.bf16.msra.mxu0 %v1198
        %1210 = vmatpush.bf16.msra.mxu0 %v1197
        %1211 = vmatpush.bf16.msra.mxu0 %v1196
        %1212 = vmatpush.bf16.msra.mxu0 %v1195
        %1213 = vmatpush.bf16.msra.mxu0 %v1194
        %1214 = vmatpush.bf16.msra.mxu0 %v1193
        %1215 = vmatpush.bf16.msra.mxu0 %v1192
        %1216 = vmatmul.bf16.gmra.mxu0 %v1018
        %v1217 = vpop.f32.mrf.mxu0
        %v1218 = vadd.f32 %v1092, %v1217
        %v1219 = vpop.f32.mrf.mxu0
        %1220 = vdwg.mxu0
        %v1237 = vunpack.c.l.b16 %v1051
        %v1238 = vunpack.c.l.b16 %v1052
        %v1239 = vunpack.c.l.b16 %v1053
        %v1240 = vunpack.c.l.b16 %v1054
        %v1241 = vunpack.c.l.b16 %v1055
        %v1242 = vunpack.c.l.b16 %v1056
        %v1243 = vunpack.c.l.b16 %v1057
        %v1244 = vunpack.c.l.b16 %v1058
        %v1245 = vunpack.c.l.b16 %v1059
        %v1246 = vunpack.c.l.b16 %v1060
        %v1247 = vunpack.c.l.b16 %v1061
        %v1248 = vunpack.c.l.b16 %v1062
        %v1249 = vunpack.c.l.b16 %v1063
        %v1250 = vunpack.c.l.b16 %v1064
        %v1251 = vunpack.c.l.b16 %v1065
        %v1252 = vunpack.c.l.b16 %v1066
        %v1253 = vpack.c.b16 %v1238, %v1237
        %v1254 = vpack.c.b16 %v1240, %v1239
        %v1255 = vpack.c.b16 %v1242, %v1241
        %v1256 = vpack.c.b16 %v1244, %v1243
        %v1257 = vpack.c.b16 %v1246, %v1245
        %v1258 = vpack.c.b16 %v1248, %v1247
        %v1259 = vpack.c.b16 %v1250, %v1249
        %v1260 = vpack.c.b16 %v1252, %v1251
        %1269 = vmatpush.bf16.msra.mxu0 %v1260
        %1270 = vmatpush.bf16.msra.mxu0 %v1259
        %1271 = vmatpush.bf16.msra.mxu0 %v1258
        %1272 = vmatpush.bf16.msra.mxu0 %v1257
        %1273 = vmatpush.bf16.msra.mxu0 %v1256
        %1274 = vmatpush.bf16.msra.mxu0 %v1255
        %1275 = vmatpush.bf16.msra.mxu0 %v1254
        %1276 = vmatpush.bf16.msra.mxu0 %v1253
        %1277 = vmatmul.bf16.gmra.mxu0 %v1018
        %v1278 = vpop.f32.mrf.mxu0
        %v1279 = vadd.f32 %v1093, %v1278
        %v1280 = vpop.f32.mrf.mxu0
        %1281 = vdwg.mxu0
        %v1298 = vunpack.c.l.b16 %v1067
        %v1299 = vunpack.c.l.b16 %v1068
        %v1300 = vunpack.c.l.b16 %v1069
        %v1301 = vunpack.c.l.b16 %v1070
        %v1302 = vunpack.c.l.b16 %v1071
        %v1303 = vunpack.c.l.b16 %v1072
        %v1304 = vunpack.c.l.b16 %v1073
        %v1305 = vunpack.c.l.b16 %v1074
        %v1306 = vunpack.c.l.b16 %v1075
        %v1307 = vunpack.c.l.b16 %v1076
        %v1308 = vunpack.c.l.b16 %v1077
        %v1309 = vunpack.c.l.b16 %v1078
        %v1310 = vunpack.c.l.b16 %v1079
        %v1311 = vunpack.c.l.b16 %v1080
        %v1312 = vunpack.c.l.b16 %v1081
        %v1313 = vunpack.c.l.b16 %v1082
        %v1314 = vpack.c.b16 %v1299, %v1298
        %v1315 = vpack.c.b16 %v1301, %v1300
        %v1316 = vpack.c.b16 %v1303, %v1302
        %v1317 = vpack.c.b16 %v1305, %v1304
        %v1318 = vpack.c.b16 %v1307, %v1306
        %v1319 = vpack.c.b16 %v1309, %v1308
        %v1320 = vpack.c.b16 %v1311, %v1310
        %v1321 = vpack.c.b16 %v1313, %v1312
        %1330 = vmatpush.bf16.msra.mxu0 %v1321
        %1331 = vmatpush.bf16.msra.mxu0 %v1320
        %1332 = vmatpush.bf16.msra.mxu0 %v1319
        %1333 = vmatpush.bf16.msra.mxu0 %v1318
        %1334 = vmatpush.bf16.msra.mxu0 %v1317
        %1335 = vmatpush.bf16.msra.mxu0 %v1316
        %1336 = vmatpush.bf16.msra.mxu0 %v1315
        %1337 = vmatpush.bf16.msra.mxu0 %v1314
        %1338 = vmatmul.bf16.gmra.mxu0 %v1018
        %v1339 = vpop.f32.mrf.mxu0
        %v1340 = vadd.f32 %v1094, %v1339
        %v1341 = vpop.f32.mrf.mxu0
        %1342 = vdwg.mxu0
        %v1343 = vld [vmem:[%s922] sm:$0xf]
        %v1344 = vld [vmem:[%s922 + $0x4] sm:$0xf]
        %v1345 = vld [vmem:[%s922 + $0x8] sm:$0xf]
        %v1346 = vld [vmem:[%s922 + $0xc] sm:$0xf]
        %v1347 = vld [vmem:[%s922 + $0x10] sm:$0xf]
        %v1348 = vld [vmem:[%s922 + $0x14] sm:$0xf]
        %v1349 = vld [vmem:[%s922 + $0x18] sm:$0xf]
        %v1350 = vld [vmem:[%s922 + $0x1c] sm:$0xf]
        %v1351 = vld [vmem:[%s922 + $0x20] sm:$0xf]
        %v1352 = vld [vmem:[%s922 + $0x24] sm:$0xf]
        %v1353 = vld [vmem:[%s922 + $0x28] sm:$0xf]
        %v1354 = vld [vmem:[%s922 + $0x2c] sm:$0xf]
        %v1355 = vld [vmem:[%s922 + $0x30] sm:$0xf]
        %v1356 = vld [vmem:[%s922 + $0x34] sm:$0xf]
        %v1357 = vld [vmem:[%s922 + $0x38] sm:$0xf]
        %v1358 = vld [vmem:[%s922 + $0x3c] sm:$0xf]
        %v1359 = vld [vmem:[%s922 + $0x40] sm:$0xf]
        %v1360 = vld [vmem:[%s922 + $0x44] sm:$0xf]
        %v1361 = vld [vmem:[%s922 + $0x48] sm:$0xf]
        %v1362 = vld [vmem:[%s922 + $0x4c] sm:$0xf]
        %v1363 = vld [vmem:[%s922 + $0x50] sm:$0xf]
        %v1364 = vld [vmem:[%s922 + $0x54] sm:$0xf]
        %v1365 = vld [vmem:[%s922 + $0x58] sm:$0xf]
        %v1366 = vld [vmem:[%s922 + $0x5c] sm:$0xf]
        %v1367 = vld [vmem:[%s922 + $0x60] sm:$0xf]
        %v1368 = vld [vmem:[%s922 + $0x64] sm:$0xf]
        %v1369 = vld [vmem:[%s922 + $0x68] sm:$0xf]
        %v1370 = vld [vmem:[%s922 + $0x6c] sm:$0xf]
        %v1371 = vld [vmem:[%s922 + $0x70] sm:$0xf]
        %v1372 = vld [vmem:[%s922 + $0x74] sm:$0xf]
        %v1373 = vld [vmem:[%s922 + $0x78] sm:$0xf]
        %v1374 = vld [vmem:[%s922 + $0x7c] sm:$0xf]
        %v1375 = vld [vmem:[%s922 + $0x80] sm:$0xf]
        %v1376 = vld [vmem:[%s922 + $0x84] sm:$0xf]
        %v1377 = vld [vmem:[%s922 + $0x88] sm:$0xf]
        %v1378 = vld [vmem:[%s922 + $0x8c] sm:$0xf]
        %v1379 = vld [vmem:[%s922 + $0x90] sm:$0xf]
        %v1380 = vld [vmem:[%s922 + $0x94] sm:$0xf]
        %v1381 = vld [vmem:[%s922 + $0x98] sm:$0xf]
        %v1382 = vld [vmem:[%s922 + $0x9c] sm:$0xf]
        %v1383 = vld [vmem:[%s922 + $0xa0] sm:$0xf]
        %v1384 = vld [vmem:[%s922 + $0xa4] sm:$0xf]
        %v1385 = vld [vmem:[%s922 + $0xa8] sm:$0xf]
        %v1386 = vld [vmem:[%s922 + $0xac] sm:$0xf]
        %v1387 = vld [vmem:[%s922 + $0xb0] sm:$0xf]
        %v1388 = vld [vmem:[%s922 + $0xb4] sm:$0xf]
        %v1389 = vld [vmem:[%s922 + $0xb8] sm:$0xf]
        %v1390 = vld [vmem:[%s922 + $0xbc] sm:$0xf]
        %v1391 = vld [vmem:[%s922 + $0xc0] sm:$0xf]
        %v1392 = vld [vmem:[%s922 + $0xc4] sm:$0xf]
        %v1393 = vld [vmem:[%s922 + $0xc8] sm:$0xf]
        %v1394 = vld [vmem:[%s922 + $0xcc] sm:$0xf]
        %v1395 = vld [vmem:[%s922 + $0xd0] sm:$0xf]
        %v1396 = vld [vmem:[%s922 + $0xd4] sm:$0xf]
        %v1397 = vld [vmem:[%s922 + $0xd8] sm:$0xf]
        %v1398 = vld [vmem:[%s922 + $0xdc] sm:$0xf]
        %v1399 = vld [vmem:[%s922 + $0xe0] sm:$0xf]
        %v1400 = vld [vmem:[%s922 + $0xe4] sm:$0xf]
        %v1401 = vld [vmem:[%s922 + $0xe8] sm:$0xf]
        %v1402 = vld [vmem:[%s922 + $0xec] sm:$0xf]
        %v1403 = vld [vmem:[%s922 + $0xf0] sm:$0xf]
        %v1404 = vld [vmem:[%s922 + $0xf4] sm:$0xf]
        %v1405 = vld [vmem:[%s922 + $0xf8] sm:$0xf]
        %v1406 = vld [vmem:[%s922 + $0xfc] sm:$0xf]
        %v1407 = vld [vmem:[%s935] sm:$0x1]
        %v1408 = vld [vmem:[%s935 + $0x1] sm:$0x1]
        %v1409 = vld [vmem:[%s935 + $0x2] sm:$0x1]
        %v1410 = vld [vmem:[%s935 + $0x3] sm:$0x1]
        %v1415 = vperm.slane %v1407, 0
        %v1416 = vperm.slane %v1408, 0
        %v1417 = vperm.slane %v1409, 0
        %v1418 = vperm.slane %v1410, 0
        %v1439 = vunpack.c.l.b16 %v1343
        %v1440 = vunpack.c.l.b16 %v1344
        %v1441 = vunpack.c.l.b16 %v1345
        %v1442 = vunpack.c.l.b16 %v1346
        %v1443 = vunpack.c.l.b16 %v1347
        %v1444 = vunpack.c.l.b16 %v1348
        %v1445 = vunpack.c.l.b16 %v1349
        %v1446 = vunpack.c.l.b16 %v1350
        %v1447 = vunpack.c.l.b16 %v1351
        %v1448 = vunpack.c.l.b16 %v1352
        %v1449 = vunpack.c.l.b16 %v1353
        %v1450 = vunpack.c.l.b16 %v1354
        %v1451 = vunpack.c.l.b16 %v1355
        %v1452 = vunpack.c.l.b16 %v1356
        %v1453 = vunpack.c.l.b16 %v1357
        %v1454 = vunpack.c.l.b16 %v1358
        %v1455 = vpack.c.b16 %v1440, %v1439
        %v1456 = vpack.c.b16 %v1442, %v1441
        %v1457 = vpack.c.b16 %v1444, %v1443
        %v1458 = vpack.c.b16 %v1446, %v1445
        %v1459 = vpack.c.b16 %v1448, %v1447
        %v1460 = vpack.c.b16 %v1450, %v1449
        %v1461 = vpack.c.b16 %v1452, %v1451
        %v1462 = vpack.c.b16 %v1454, %v1453
        %1471 = vmatpush.bf16.msra.mxu0 %v1462
        %1472 = vmatpush.bf16.msra.mxu0 %v1461
        %1473 = vmatpush.bf16.msra.mxu0 %v1460
        %1474 = vmatpush.bf16.msra.mxu0 %v1459
        %1475 = vmatpush.bf16.msra.mxu0 %v1458
        %1476 = vmatpush.bf16.msra.mxu0 %v1457
        %1477 = vmatpush.bf16.msra.mxu0 %v1456
        %1478 = vmatpush.bf16.msra.mxu0 %v1455
        %1479 = vmatmul.bf16.gmra.mxu0 %v1018
        %v1480 = vpop.f32.mrf.mxu0
        %v1481 = vadd.f32 %v1415, %v1480
        %v1482 = vpop.f32.mrf.mxu0
        %1483 = vdwg.mxu0
        %v1500 = vunpack.c.l.b16 %v1359
        %v1501 = vunpack.c.l.b16 %v1360
        %v1502 = vunpack.c.l.b16 %v1361
        %v1503 = vunpack.c.l.b16 %v1362
        %v1504 = vunpack.c.l.b16 %v1363
        %v1505 = vunpack.c.l.b16 %v1364
        %v1506 = vunpack.c.l.b16 %v1365
        %v1507 = vunpack.c.l.b16 %v1366
        %v1508 = vunpack.c.l.b16 %v1367
        %v1509 = vunpack.c.l.b16 %v1368
        %v1510 = vunpack.c.l.b16 %v1369
        %v1511 = vunpack.c.l.b16 %v1370
        %v1512 = vunpack.c.l.b16 %v1371
        %v1513 = vunpack.c.l.b16 %v1372
        %v1514 = vunpack.c.l.b16 %v1373
        %v1515 = vunpack.c.l.b16 %v1374
        %v1516 = vpack.c.b16 %v1501, %v1500
        %v1517 = vpack.c.b16 %v1503, %v1502
        %v1518 = vpack.c.b16 %v1505, %v1504
        %v1519 = vpack.c.b16 %v1507, %v1506
        %v1520 = vpack.c.b16 %v1509, %v1508
        %v1521 = vpack.c.b16 %v1511, %v1510
        %v1522 = vpack.c.b16 %v1513, %v1512
        %v1523 = vpack.c.b16 %v1515, %v1514
        %1532 = vmatpush.bf16.msra.mxu0 %v1523
        %1533 = vmatpush.bf16.msra.mxu0 %v1522
        %1534 = vmatpush.bf16.msra.mxu0 %v1521
        %1535 = vmatpush.bf16.msra.mxu0 %v1520
        %1536 = vmatpush.bf16.msra.mxu0 %v1519
        %1537 = vmatpush.bf16.msra.mxu0 %v1518
        %1538 = vmatpush.bf16.msra.mxu0 %v1517
        %1539 = vmatpush.bf16.msra.mxu0 %v1516
        %1540 = vmatmul.bf16.gmra.mxu0 %v1018
        %v1541 = vpop.f32.mrf.mxu0
        %v1542 = vadd.f32 %v1416, %v1541
        %v1543 = vpop.f32.mrf.mxu0
        %1544 = vdwg.mxu0
        %v1561 = vunpack.c.l.b16 %v1375
        %v1562 = vunpack.c.l.b16 %v1376
        %v1563 = vunpack.c.l.b16 %v1377
        %v1564 = vunpack.c.l.b16 %v1378
        %v1565 = vunpack.c.l.b16 %v1379
        %v1566 = vunpack.c.l.b16 %v1380
        %v1567 = vunpack.c.l.b16 %v1381
        %v1568 = vunpack.c.l.b16 %v1382
        %v1569 = vunpack.c.l.b16 %v1383
        %v1570 = vunpack.c.l.b16 %v1384
        %v1571 = vunpack.c.l.b16 %v1385
        %v1572 = vunpack.c.l.b16 %v1386
        %v1573 = vunpack.c.l.b16 %v1387
        %v1574 = vunpack.c.l.b16 %v1388
        %v1575 = vunpack.c.l.b16 %v1389
        %v1576 = vunpack.c.l.b16 %v1390
        %v1577 = vpack.c.b16 %v1562, %v1561
        %v1578 = vpack.c.b16 %v1564, %v1563
        %v1579 = vpack.c.b16 %v1566, %v1565
        %v1580 = vpack.c.b16 %v1568, %v1567
        %v1581 = vpack.c.b16 %v1570, %v1569
        %v1582 = vpack.c.b16 %v1572, %v1571
        %v1583 = vpack.c.b16 %v1574, %v1573
        %v1584 = vpack.c.b16 %v1576, %v1575
        %1593 = vmatpush.bf16.msra.mxu0 %v1584
        %1594 = vmatpush.bf16.msra.mxu0 %v1583
        %1595 = vmatpush.bf16.msra.mxu0 %v1582
        %1596 = vmatpush.bf16.msra.mxu0 %v1581
        %1597 = vmatpush.bf16.msra.mxu0 %v1580
        %1598 = vmatpush.bf16.msra.mxu0 %v1579
        %1599 = vmatpush.bf16.msra.mxu0 %v1578
        %1600 = vmatpush.bf16.msra.mxu0 %v1577
        %1601 = vmatmul.bf16.gmra.mxu0 %v1018
        %v1602 = vpop.f32.mrf.mxu0
        %v1603 = vadd.f32 %v1417, %v1602
        %v1604 = vpop.f32.mrf.mxu0
        %1605 = vdwg.mxu0
        %v1622 = vunpack.c.l.b16 %v1391
        %v1623 = vunpack.c.l.b16 %v1392
        %v1624 = vunpack.c.l.b16 %v1393
        %v1625 = vunpack.c.l.b16 %v1394
        %v1626 = vunpack.c.l.b16 %v1395
        %v1627 = vunpack.c.l.b16 %v1396
        %v1628 = vunpack.c.l.b16 %v1397
        %v1629 = vunpack.c.l.b16 %v1398
        %v1630 = vunpack.c.l.b16 %v1399
        %v1631 = vunpack.c.l.b16 %v1400
        %v1632 = vunpack.c.l.b16 %v1401
        %v1633 = vunpack.c.l.b16 %v1402
        %v1634 = vunpack.c.l.b16 %v1403
        %v1635 = vunpack.c.l.b16 %v1404
        %v1636 = vunpack.c.l.b16 %v1405
        %v1637 = vunpack.c.l.b16 %v1406
        %v1638 = vpack.c.b16 %v1623, %v1622
        %v1639 = vpack.c.b16 %v1625, %v1624
        %v1640 = vpack.c.b16 %v1627, %v1626
        %v1641 = vpack.c.b16 %v1629, %v1628
        %v1642 = vpack.c.b16 %v1631, %v1630
        %v1643 = vpack.c.b16 %v1633, %v1632
        %v1644 = vpack.c.b16 %v1635, %v1634
        %v1645 = vpack.c.b16 %v1637, %v1636
        %1654 = vmatpush.bf16.msra.mxu0 %v1645
        %1655 = vmatpush.bf16.msra.mxu0 %v1644
        %1656 = vmatpush.bf16.msra.mxu0 %v1643
        %1657 = vmatpush.bf16.msra.mxu0 %v1642
        %1658 = vmatpush.bf16.msra.mxu0 %v1641
        %1659 = vmatpush.bf16.msra.mxu0 %v1640
        %1660 = vmatpush.bf16.msra.mxu0 %v1639
        %1661 = vmatpush.bf16.msra.mxu0 %v1638
        %1662 = vmatmul.bf16.gmra.mxu0 %v1018
        %v1663 = vpop.f32.mrf.mxu0
        %v1664 = vadd.f32 %v1418, %v1663
        %v1665 = vpop.f32.mrf.mxu0
        %1666 = vdwg.mxu0
        %v1667 = vld [vmem:[%s927] sm:$0xf]
        %v1668 = vld [vmem:[%s927 + $0x4] sm:$0xf]
        %v1669 = vld [vmem:[%s927 + $0x8] sm:$0xf]
        %v1670 = vld [vmem:[%s927 + $0xc] sm:$0xf]
        %v1671 = vld [vmem:[%s927 + $0x10] sm:$0xf]
        %v1672 = vld [vmem:[%s927 + $0x14] sm:$0xf]
        %v1673 = vld [vmem:[%s927 + $0x18] sm:$0xf]
        %v1674 = vld [vmem:[%s927 + $0x1c] sm:$0xf]
        %v1675 = vld [vmem:[%s927 + $0x20] sm:$0xf]
        %v1676 = vld [vmem:[%s927 + $0x24] sm:$0xf]
        %v1677 = vld [vmem:[%s927 + $0x28] sm:$0xf]
        %v1678 = vld [vmem:[%s927 + $0x2c] sm:$0xf]
        %v1679 = vld [vmem:[%s927 + $0x30] sm:$0xf]
        %v1680 = vld [vmem:[%s927 + $0x34] sm:$0xf]
        %v1681 = vld [vmem:[%s927 + $0x38] sm:$0xf]
        %v1682 = vld [vmem:[%s927 + $0x3c] sm:$0xf]
        %v1683 = vld [vmem:[%s927 + $0x40] sm:$0xf]
        %v1684 = vld [vmem:[%s927 + $0x44] sm:$0xf]
        %v1685 = vld [vmem:[%s927 + $0x48] sm:$0xf]
        %v1686 = vld [vmem:[%s927 + $0x4c] sm:$0xf]
        %v1687 = vld [vmem:[%s927 + $0x50] sm:$0xf]
        %v1688 = vld [vmem:[%s927 + $0x54] sm:$0xf]
        %v1689 = vld [vmem:[%s927 + $0x58] sm:$0xf]
        %v1690 = vld [vmem:[%s927 + $0x5c] sm:$0xf]
        %v1691 = vld [vmem:[%s927 + $0x60] sm:$0xf]
        %v1692 = vld [vmem:[%s927 + $0x64] sm:$0xf]
        %v1693 = vld [vmem:[%s927 + $0x68] sm:$0xf]
        %v1694 = vld [vmem:[%s927 + $0x6c] sm:$0xf]
        %v1695 = vld [vmem:[%s927 + $0x70] sm:$0xf]
        %v1696 = vld [vmem:[%s927 + $0x74] sm:$0xf]
        %v1697 = vld [vmem:[%s927 + $0x78] sm:$0xf]
        %v1698 = vld [vmem:[%s927 + $0x7c] sm:$0xf]
        %v1699 = vld [vmem:[%s927 + $0x80] sm:$0xf]
        %v1700 = vld [vmem:[%s927 + $0x84] sm:$0xf]
        %v1701 = vld [vmem:[%s927 + $0x88] sm:$0xf]
        %v1702 = vld [vmem:[%s927 + $0x8c] sm:$0xf]
        %v1703 = vld [vmem:[%s927 + $0x90] sm:$0xf]
        %v1704 = vld [vmem:[%s927 + $0x94] sm:$0xf]
        %v1705 = vld [vmem:[%s927 + $0x98] sm:$0xf]
        %v1706 = vld [vmem:[%s927 + $0x9c] sm:$0xf]
        %v1707 = vld [vmem:[%s927 + $0xa0] sm:$0xf]
        %v1708 = vld [vmem:[%s927 + $0xa4] sm:$0xf]
        %v1709 = vld [vmem:[%s927 + $0xa8] sm:$0xf]
        %v1710 = vld [vmem:[%s927 + $0xac] sm:$0xf]
        %v1711 = vld [vmem:[%s927 + $0xb0] sm:$0xf]
        %v1712 = vld [vmem:[%s927 + $0xb4] sm:$0xf]
        %v1713 = vld [vmem:[%s927 + $0xb8] sm:$0xf]
        %v1714 = vld [vmem:[%s927 + $0xbc] sm:$0xf]
        %v1715 = vld [vmem:[%s927 + $0xc0] sm:$0xf]
        %v1716 = vld [vmem:[%s927 + $0xc4] sm:$0xf]
        %v1717 = vld [vmem:[%s927 + $0xc8] sm:$0xf]
        %v1718 = vld [vmem:[%s927 + $0xcc] sm:$0xf]
        %v1719 = vld [vmem:[%s927 + $0xd0] sm:$0xf]
        %v1720 = vld [vmem:[%s927 + $0xd4] sm:$0xf]
        %v1721 = vld [vmem:[%s927 + $0xd8] sm:$0xf]
        %v1722 = vld [vmem:[%s927 + $0xdc] sm:$0xf]
        %v1723 = vld [vmem:[%s927 + $0xe0] sm:$0xf]
        %v1724 = vld [vmem:[%s927 + $0xe4] sm:$0xf]
        %v1725 = vld [vmem:[%s927 + $0xe8] sm:$0xf]
        %v1726 = vld [vmem:[%s927 + $0xec] sm:$0xf]
        %v1727 = vld [vmem:[%s927 + $0xf0] sm:$0xf]
        %v1728 = vld [vmem:[%s927 + $0xf4] sm:$0xf]
        %v1729 = vld [vmem:[%s927 + $0xf8] sm:$0xf]
        %v1730 = vld [vmem:[%s927 + $0xfc] sm:$0xf]
        %v1731 = vld [vmem:[%s939] sm:$0x1]
        %v1732 = vld [vmem:[%s939 + $0x1] sm:$0x1]
        %v1733 = vld [vmem:[%s939 + $0x2] sm:$0x1]
        %v1734 = vld [vmem:[%s939 + $0x3] sm:$0x1]
        %v1739 = vperm.slane %v1731, 0
        %v1740 = vperm.slane %v1732, 0
        %v1741 = vperm.slane %v1733, 0
        %v1742 = vperm.slane %v1734, 0
        %v1763 = vunpack.c.l.b16 %v1667
        %v1764 = vunpack.c.l.b16 %v1668
        %v1765 = vunpack.c.l.b16 %v1669
        %v1766 = vunpack.c.l.b16 %v1670
        %v1767 = vunpack.c.l.b16 %v1671
        %v1768 = vunpack.c.l.b16 %v1672
        %v1769 = vunpack.c.l.b16 %v1673
        %v1770 = vunpack.c.l.b16 %v1674
        %v1771 = vunpack.c.l.b16 %v1675
        %v1772 = vunpack.c.l.b16 %v1676
        %v1773 = vunpack.c.l.b16 %v1677
        %v1774 = vunpack.c.l.b16 %v1678
        %v1775 = vunpack.c.l.b16 %v1679
        %v1776 = vunpack.c.l.b16 %v1680
        %v1777 = vunpack.c.l.b16 %v1681
        %v1778 = vunpack.c.l.b16 %v1682
        %v1779 = vpack.c.b16 %v1764, %v1763
        %v1780 = vpack.c.b16 %v1766, %v1765
        %v1781 = vpack.c.b16 %v1768, %v1767
        %v1782 = vpack.c.b16 %v1770, %v1769
        %v1783 = vpack.c.b16 %v1772, %v1771
        %v1784 = vpack.c.b16 %v1774, %v1773
        %v1785 = vpack.c.b16 %v1776, %v1775
        %v1786 = vpack.c.b16 %v1778, %v1777
        %1795 = vmatpush.bf16.msra.mxu0 %v1786
        %1796 = vmatpush.bf16.msra.mxu0 %v1785
        %1797 = vmatpush.bf16.msra.mxu0 %v1784
        %1798 = vmatpush.bf16.msra.mxu0 %v1783
        %1799 = vmatpush.bf16.msra.mxu0 %v1782
        %1800 = vmatpush.bf16.msra.mxu0 %v1781
        %1801 = vmatpush.bf16.msra.mxu0 %v1780
        %1802 = vmatpush.bf16.msra.mxu0 %v1779
        %1803 = vmatmul.bf16.gmra.mxu0 %v1018
        %v1804 = vpop.f32.mrf.mxu0
        %v1805 = vadd.f32 %v1739, %v1804
        %v1806 = vpop.f32.mrf.mxu0
        %1807 = vdwg.mxu0
        %v1824 = vunpack.c.l.b16 %v1683
        %v1825 = vunpack.c.l.b16 %v1684
        %v1826 = vunpack.c.l.b16 %v1685
        %v1827 = vunpack.c.l.b16 %v1686
        %v1828 = vunpack.c.l.b16 %v1687
        %v1829 = vunpack.c.l.b16 %v1688
        %v1830 = vunpack.c.l.b16 %v1689
        %v1831 = vunpack.c.l.b16 %v1690
        %v1832 = vunpack.c.l.b16 %v1691
        %v1833 = vunpack.c.l.b16 %v1692
        %v1834 = vunpack.c.l.b16 %v1693
        %v1835 = vunpack.c.l.b16 %v1694
        %v1836 = vunpack.c.l.b16 %v1695
        %v1837 = vunpack.c.l.b16 %v1696
        %v1838 = vunpack.c.l.b16 %v1697
        %v1839 = vunpack.c.l.b16 %v1698
        %v1840 = vpack.c.b16 %v1825, %v1824
        %v1841 = vpack.c.b16 %v1827, %v1826
        %v1842 = vpack.c.b16 %v1829, %v1828
        %v1843 = vpack.c.b16 %v1831, %v1830
        %v1844 = vpack.c.b16 %v1833, %v1832
        %v1845 = vpack.c.b16 %v1835, %v1834
        %v1846 = vpack.c.b16 %v1837, %v1836
        %v1847 = vpack.c.b16 %v1839, %v1838
        %1856 = vmatpush.bf16.msra.mxu0 %v1847
        %1857 = vmatpush.bf16.msra.mxu0 %v1846
        %1858 = vmatpush.bf16.msra.mxu0 %v1845
        %1859 = vmatpush.bf16.msra.mxu0 %v1844
        %1860 = vmatpush.bf16.msra.mxu0 %v1843
        %1861 = vmatpush.bf16.msra.mxu0 %v1842
        %1862 = vmatpush.bf16.msra.mxu0 %v1841
        %1863 = vmatpush.bf16.msra.mxu0 %v1840
        %1864 = vmatmul.bf16.gmra.mxu0 %v1018
        %v1865 = vpop.f32.mrf.mxu0
        %v1866 = vadd.f32 %v1740, %v1865
        %v1867 = vpop.f32.mrf.mxu0
        %1868 = vdwg.mxu0
        %v1885 = vunpack.c.l.b16 %v1699
        %v1886 = vunpack.c.l.b16 %v1700
        %v1887 = vunpack.c.l.b16 %v1701
        %v1888 = vunpack.c.l.b16 %v1702
        %v1889 = vunpack.c.l.b16 %v1703
        %v1890 = vunpack.c.l.b16 %v1704
        %v1891 = vunpack.c.l.b16 %v1705
        %v1892 = vunpack.c.l.b16 %v1706
        %v1893 = vunpack.c.l.b16 %v1707
        %v1894 = vunpack.c.l.b16 %v1708
        %v1895 = vunpack.c.l.b16 %v1709
        %v1896 = vunpack.c.l.b16 %v1710
        %v1897 = vunpack.c.l.b16 %v1711
        %v1898 = vunpack.c.l.b16 %v1712
        %v1899 = vunpack.c.l.b16 %v1713
        %v1900 = vunpack.c.l.b16 %v1714
        %v1901 = vpack.c.b16 %v1886, %v1885
        %v1902 = vpack.c.b16 %v1888, %v1887
        %v1903 = vpack.c.b16 %v1890, %v1889
        %v1904 = vpack.c.b16 %v1892, %v1891
        %v1905 = vpack.c.b16 %v1894, %v1893
        %v1906 = vpack.c.b16 %v1896, %v1895
        %v1907 = vpack.c.b16 %v1898, %v1897
        %v1908 = vpack.c.b16 %v1900, %v1899
        %1917 = vmatpush.bf16.msra.mxu0 %v1908
        %1918 = vmatpush.bf16.msra.mxu0 %v1907
        %1919 = vmatpush.bf16.msra.mxu0 %v1906
        %1920 = vmatpush.bf16.msra.mxu0 %v1905
        %1921 = vmatpush.bf16.msra.mxu0 %v1904
        %1922 = vmatpush.bf16.msra.mxu0 %v1903
        %1923 = vmatpush.bf16.msra.mxu0 %v1902
        %1924 = vmatpush.bf16.msra.mxu0 %v1901
        %1925 = vmatmul.bf16.gmra.mxu0 %v1018
        %v1926 = vpop.f32.mrf.mxu0
        %v1927 = vadd.f32 %v1741, %v1926
        %v1928 = vpop.f32.mrf.mxu0
        %1929 = vdwg.mxu0
        %v1946 = vunpack.c.l.b16 %v1715
        %v1947 = vunpack.c.l.b16 %v1716
        %v1948 = vunpack.c.l.b16 %v1717
        %v1949 = vunpack.c.l.b16 %v1718
        %v1950 = vunpack.c.l.b16 %v1719
        %v1951 = vunpack.c.l.b16 %v1720
        %v1952 = vunpack.c.l.b16 %v1721
        %v1953 = vunpack.c.l.b16 %v1722
        %v1954 = vunpack.c.l.b16 %v1723
        %v1955 = vunpack.c.l.b16 %v1724
        %v1956 = vunpack.c.l.b16 %v1725
        %v1957 = vunpack.c.l.b16 %v1726
        %v1958 = vunpack.c.l.b16 %v1727
        %v1959 = vunpack.c.l.b16 %v1728
        %v1960 = vunpack.c.l.b16 %v1729
        %v1961 = vunpack.c.l.b16 %v1730
        %v1962 = vpack.c.b16 %v1947, %v1946
        %v1963 = vpack.c.b16 %v1949, %v1948
        %v1964 = vpack.c.b16 %v1951, %v1950
        %v1965 = vpack.c.b16 %v1953, %v1952
        %v1966 = vpack.c.b16 %v1955, %v1954
        %v1967 = vpack.c.b16 %v1957, %v1956
        %v1968 = vpack.c.b16 %v1959, %v1958
        %v1969 = vpack.c.b16 %v1961, %v1960
        %1978 = vmatpush.bf16.msra.mxu0 %v1969
        %1979 = vmatpush.bf16.msra.mxu0 %v1968
        %1980 = vmatpush.bf16.msra.mxu0 %v1967
        %1981 = vmatpush.bf16.msra.mxu0 %v1966
        %1982 = vmatpush.bf16.msra.mxu0 %v1965
        %1983 = vmatpush.bf16.msra.mxu0 %v1964
        %1984 = vmatpush.bf16.msra.mxu0 %v1963
        %1985 = vmatpush.bf16.msra.mxu0 %v1962
        %1986 = vmatmul.bf16.gmra.mxu0 %v1018
        %v1987 = vpop.f32.mrf.mxu0
        %v1988 = vadd.f32 %v1742, %v1987
        %v1989 = vpop.f32.mrf.mxu0
        %1990 = vdwg.mxu0
        %v1991 = vpack.c.bf16 %v1157, %v1157
        %v1992 = vpack.c.bf16 %v1218, %v1218
        %v1993 = vpack.c.bf16 %v1279, %v1279
        %v1994 = vpack.c.bf16 %v1340, %v1340
        %v1995 = vpack.c.bf16 %v1481, %v1481
        %v1996 = vpack.c.bf16 %v1542, %v1542
        %v1997 = vpack.c.bf16 %v1603, %v1603
        %v1998 = vpack.c.bf16 %v1664, %v1664
        %vm1999 = vcmask 261120
        %v2001 = vsel %vm1999, %v1991, 0
        %v2004 = vsel %vm1999, %v1995, 0
        %2006 = vmatpush.bf16.xpose.msra.mxu0 0
        %2007 = vmatpush.bf16.xpose.msra.mxu0 0
        %2008 = vmatpush.bf16.xpose.msra.mxu0 0
        %2009 = vmatpush.bf16.xpose.msra.mxu0 0
        %2010 = vmatpush.bf16.xpose.msra.mxu0 0
        %2011 = vmatpush.bf16.xpose.msra.mxu0 0
        %2012 = vmatpush.bf16.xpose.msra.mxu0 0
        %2013 = vmatpush.bf16.xpose.msra.mxu0 %v2004
        %2014 = vmatmul.bf16.gmra.mxu0 %v2001
        %v2015 = vpop.f32.mrf.mxu0
        %v2016 = vadd.f32 0.0, %v2015
        %v2017 = vpop.f32.mrf.mxu0
        %2018 = vdwg.mxu0
        %v2020 = vsel %vm1999, %v1992, 0
        %v2023 = vsel %vm1999, %v1996, 0
        %2025 = vmatpush.bf16.xpose.msra.mxu0 0
        %2026 = vmatpush.bf16.xpose.msra.mxu0 0
        %2027 = vmatpush.bf16.xpose.msra.mxu0 0
        %2028 = vmatpush.bf16.xpose.msra.mxu0 0
        %2029 = vmatpush.bf16.xpose.msra.mxu0 0
        %2030 = vmatpush.bf16.xpose.msra.mxu0 0
        %2031 = vmatpush.bf16.xpose.msra.mxu0 0
        %2032 = vmatpush.bf16.xpose.msra.mxu0 %v2023
        %2033 = vmatmul.bf16.gmra.mxu0 %v2020
        %v2034 = vpop.f32.mrf.mxu0
        %v2035 = vadd.f32 0.0, %v2034
        %v2036 = vpop.f32.mrf.mxu0
        %2037 = vdwg.mxu0
        %v2039 = vsel %vm1999, %v1993, 0
        %v2042 = vsel %vm1999, %v1997, 0
        %2044 = vmatpush.bf16.xpose.msra.mxu0 0
        %2045 = vmatpush.bf16.xpose.msra.mxu0 0
        %2046 = vmatpush.bf16.xpose.msra.mxu0 0
        %2047 = vmatpush.bf16.xpose.msra.mxu0 0
        %2048 = vmatpush.bf16.xpose.msra.mxu0 0
        %2049 = vmatpush.bf16.xpose.msra.mxu0 0
        %2050 = vmatpush.bf16.xpose.msra.mxu0 0
        %2051 = vmatpush.bf16.xpose.msra.mxu0 %v2042
        %2052 = vmatmul.bf16.gmra.mxu0 %v2039
        %v2053 = vpop.f32.mrf.mxu0
        %v2054 = vadd.f32 0.0, %v2053
        %v2055 = vpop.f32.mrf.mxu0
        %2056 = vdwg.mxu0
        %v2058 = vsel %vm1999, %v1994, 0
        %v2061 = vsel %vm1999, %v1998, 0
        %2063 = vmatpush.bf16.xpose.msra.mxu0 0
        %2064 = vmatpush.bf16.xpose.msra.mxu0 0
        %2065 = vmatpush.bf16.xpose.msra.mxu0 0
        %2066 = vmatpush.bf16.xpose.msra.mxu0 0
        %2067 = vmatpush.bf16.xpose.msra.mxu0 0
        %2068 = vmatpush.bf16.xpose.msra.mxu0 0
        %2069 = vmatpush.bf16.xpose.msra.mxu0 0
        %2070 = vmatpush.bf16.xpose.msra.mxu0 %v2061
        %2071 = vmatmul.bf16.gmra.mxu0 %v2058
        %v2072 = vpop.f32.mrf.mxu0
        %v2073 = vadd.f32 0.0, %v2072
        %v2074 = vpop.f32.mrf.mxu0
        %2075 = vdwg.mxu0
        %v2076 = vmul.f32 %v2016, 0.17677669
        %v2077 = vmul.f32 %v2035, 0.17677669
        %v2078 = vmul.f32 %v2054, 0.17677669
        %v2079 = vmul.f32 %v2073, 0.17677669
        %v2080 = vld [vmem:[%s3] sm:$0xff]
        %v2081 = vadd.f32 %v2076, %v2080
        %v2082 = vadd.f32 %v2077, %v2080
        %v2083 = vadd.f32 %v2078, %v2080
        %v2084 = vadd.f32 %v2079, %v2080
        %vm2085 = vcmask 64512
        %v2086 = vsel %vm2085, %v2081, -inf
        %2087 = vmax.xlane.f32.xlu0 %v2086
        %v2088 = vpop.xlane.xlu0 %2087
        %v2089 = vsel %vm2085, %v2082, -inf
        %2090 = vmax.xlane.f32.xlu0 %v2089
        %v2091 = vpop.xlane.xlu0 %2090
        %v2092 = vsel %vm2085, %v2083, -inf
        %2093 = vmax.xlane.f32.xlu0 %v2092
        %v2094 = vpop.xlane.xlu0 %2093
        %v2095 = vsel %vm2085, %v2084, -inf
        %2096 = vmax.xlane.f32.xlu0 %v2095
        %v2097 = vpop.xlane.xlu0 %2096
        %v2098 = vsub.f32 %v2081, %v2088
        %v2099 = vsub.f32 %v2082, %v2091
        %v2100 = vsub.f32 %v2083, %v2094
        %v2101 = vsub.f32 %v2084, %v2097
        %v2102 = vmul.f32 %v2098, 1.442695
        %v2103 = vpow.pop %v2102
        %v2104 = vmul.f32 %v2099, 1.442695
        %v2105 = vpow.pop %v2104
        %v2106 = vmul.f32 %v2100, 1.442695
        %v2107 = vpow.pop %v2106
        %v2108 = vmul.f32 %v2101, 1.442695
        %v2109 = vpow.pop %v2108
        %v2110 = vsel %vm2085, %v2103, 0.0
        %2111 = vadd.xlane.f32.xlu0 %v2110
        %v2112 = vpop.xlane.xlu0 %2111
        %v2113 = vsel %vm2085, %v2105, 0.0
        %2114 = vadd.xlane.f32.xlu0 %v2113
        %v2115 = vpop.xlane.xlu0 %2114
        %v2116 = vsel %vm2085, %v2107, 0.0
        %2117 = vadd.xlane.f32.xlu0 %v2116
        %v2118 = vpop.xlane.xlu0 %2117
        %v2119 = vsel %vm2085, %v2109, 0.0
        %2120 = vadd.xlane.f32.xlu0 %v2119
        %v2121 = vpop.xlane.xlu0 %2120
        %v2122 = vrcp.pop %v2112
        %v2123 = vrcp.pop %v2115
        %v2124 = vrcp.pop %v2118
        %v2125 = vrcp.pop %v2121
        %v2126 = vmul.f32 %v2103, %v2122
        %v2127 = vmul.f32 %v2105, %v2123
        %v2128 = vmul.f32 %v2107, %v2124
        %v2129 = vmul.f32 %v2109, %v2125
        %v2130 = vpack.c.bf16 %v2126, %v2126
        %v2131 = vpack.c.bf16 %v2127, %v2127
        %v2132 = vpack.c.bf16 %v2128, %v2128
        %v2133 = vpack.c.bf16 %v2129, %v2129
        %v2134 = vpack.c.bf16 %v1805, %v1805
        %v2135 = vpack.c.bf16 %v1866, %v1866
        %v2136 = vpack.c.bf16 %v1927, %v1927
        %v2137 = vpack.c.bf16 %v1988, %v1988
        %v2139 = vsel %vm2085, %v2130, 0
        %vm2141 = vcmask 1043456
        %v2143 = vsel %vm2141, %v2134, 0
        %2145 = vmatpush.bf16.msra.mxu0 0
        %2146 = vmatpush.bf16.msra.mxu0 0
        %2147 = vmatpush.bf16.msra.mxu0 0
        %2148 = vmatpush.bf16.msra.mxu0 0
        %2149 = vmatpush.bf16.msra.mxu0 0
        %2150 = vmatpush.bf16.msra.mxu0 0
        %2151 = vmatpush.bf16.msra.mxu0 0
        %2152 = vmatpush.bf16.msra.mxu0 %v2143
        %2153 = vmatmul.bf16.gmra.mxu0 %v2139
        %v2154 = vpop.f32.mrf.mxu0
        %v2155 = vadd.f32 0.0, %v2154
        %v2156 = vpop.f32.mrf.mxu0
        %2157 = vdwg.mxu0
        %v2159 = vsel %vm2085, %v2131, 0
        %v2162 = vsel %vm2141, %v2135, 0
        %2164 = vmatpush.bf16.msra.mxu0 0
        %2165 = vmatpush.bf16.msra.mxu0 0
        %2166 = vmatpush.bf16.msra.mxu0 0
        %2167 = vmatpush.bf16.msra.mxu0 0
        %2168 = vmatpush.bf16.msra.mxu0 0
        %2169 = vmatpush.bf16.msra.mxu0 0
        %2170 = vmatpush.bf16.msra.mxu0 0
        %2171 = vmatpush.bf16.msra.mxu0 %v2162
        %2172 = vmatmul.bf16.gmra.mxu0 %v2159
        %v2173 = vpop.f32.mrf.mxu0
        %v2174 = vadd.f32 0.0, %v2173
        %v2175 = vpop.f32.mrf.mxu0
        %2176 = vdwg.mxu0
        %v2178 = vsel %vm2085, %v2132, 0
        %v2181 = vsel %vm2141, %v2136, 0
        %2183 = vmatpush.bf16.msra.mxu0 0
        %2184 = vmatpush.bf16.msra.mxu0 0
        %2185 = vmatpush.bf16.msra.mxu0 0
        %2186 = vmatpush.bf16.msra.mxu0 0
        %2187 = vmatpush.bf16.msra.mxu0 0
        %2188 = vmatpush.bf16.msra.mxu0 0
        %2189 = vmatpush.bf16.msra.mxu0 0
        %2190 = vmatpush.bf16.msra.mxu0 %v2181
        %2191 = vmatmul.bf16.gmra.mxu0 %v2178
        %v2192 = vpop.f32.mrf.mxu0
        %v2193 = vadd.f32 0.0, %v2192
        %v2194 = vpop.f32.mrf.mxu0
        %2195 = vdwg.mxu0
        %v2197 = vsel %vm2085, %v2133, 0
        %v2200 = vsel %vm2141, %v2137, 0
        %2202 = vmatpush.bf16.msra.mxu0 0
        %2203 = vmatpush.bf16.msra.mxu0 0
        %2204 = vmatpush.bf16.msra.mxu0 0
        %2205 = vmatpush.bf16.msra.mxu0 0
        %2206 = vmatpush.bf16.msra.mxu0 0
        %2207 = vmatpush.bf16.msra.mxu0 0
        %2208 = vmatpush.bf16.msra.mxu0 0
        %2209 = vmatpush.bf16.msra.mxu0 %v2200
        %2210 = vmatmul.bf16.gmra.mxu0 %v2197
        %v2211 = vpop.f32.mrf.mxu0
        %v2212 = vadd.f32 0.0, %v2211
        %v2213 = vpop.f32.mrf.mxu0
        %2214 = vdwg.mxu0
        %v2215 = vpack.c.bf16 %v2155, %v2155
        %v2216 = vpack.c.bf16 %v2174, %v2174
        %v2217 = vpack.c.bf16 %v2193, %v2193
        %v2218 = vpack.c.bf16 %v2212, %v2212
        %v2219 = vld [vmem:[%s944] sm:$0xf]
        %v2220 = vld [vmem:[%s944 + $0x4] sm:$0xf]
        %v2221 = vld [vmem:[%s944 + $0x8] sm:$0xf]
        %v2222 = vld [vmem:[%s944 + $0xc] sm:$0xf]
        %v2223 = vld [vmem:[%s944 + $0x10] sm:$0xf]
        %v2224 = vld [vmem:[%s944 + $0x14] sm:$0xf]
        %v2225 = vld [vmem:[%s944 + $0x18] sm:$0xf]
        %v2226 = vld [vmem:[%s944 + $0x1c] sm:$0xf]
        %v2227 = vld [vmem:[%s944 + $0x20] sm:$0xf]
        %v2228 = vld [vmem:[%s944 + $0x24] sm:$0xf]
        %v2229 = vld [vmem:[%s944 + $0x28] sm:$0xf]
        %v2230 = vld [vmem:[%s944 + $0x2c] sm:$0xf]
        %v2231 = vld [vmem:[%s944 + $0x30] sm:$0xf]
        %v2232 = vld [vmem:[%s944 + $0x34] sm:$0xf]
        %v2233 = vld [vmem:[%s944 + $0x38] sm:$0xf]
        %v2234 = vld [vmem:[%s944 + $0x3c] sm:$0xf]
        %v2239 = vunpack.c.l.b16 %v2219
        %v2240 = vunpack.c.l.b16 %v2220
        %v2241 = vunpack.c.l.b16 %v2221
        %v2242 = vunpack.c.l.b16 %v2222
        %v2243 = vpack.c.b16 %v2240, %v2239
        %v2244 = vpack.c.b16 %v2242, %v2241
        %v2248 = vsel %vm1999, %v2215, 0
        %2250 = vmatpush.bf16.msra.mxu0 0
        %2251 = vmatpush.bf16.msra.mxu0 0
        %2252 = vmatpush.bf16.msra.mxu0 0
        %2253 = vmatpush.bf16.msra.mxu0 0
        %2254 = vmatpush.bf16.msra.mxu0 0
        %2255 = vmatpush.bf16.msra.mxu0 0
        %2256 = vmatpush.bf16.msra.mxu0 %v2244
        %2257 = vmatpush.bf16.msra.mxu0 %v2243
        %2258 = vmatmul.bf16.gmra.mxu0 %v2248
        %v2259 = vpop.f32.mrf.mxu0
        %v2260 = vadd.f32 0.0, %v2259
        %v2261 = vpop.f32.mrf.mxu0
        %2262 = vdwg.mxu0
        %v2267 = vunpack.c.l.b16 %v2223
        %v2268 = vunpack.c.l.b16 %v2224
        %v2269 = vunpack.c.l.b16 %v2225
        %v2270 = vunpack.c.l.b16 %v2226
        %v2271 = vpack.c.b16 %v2268, %v2267
        %v2272 = vpack.c.b16 %v2270, %v2269
        %v2276 = vsel %vm1999, %v2216, 0
        %2278 = vmatpush.bf16.msra.mxu0 0
        %2279 = vmatpush.bf16.msra.mxu0 0
        %2280 = vmatpush.bf16.msra.mxu0 0
        %2281 = vmatpush.bf16.msra.mxu0 0
        %2282 = vmatpush.bf16.msra.mxu0 0
        %2283 = vmatpush.bf16.msra.mxu0 0
        %2284 = vmatpush.bf16.msra.mxu0 %v2272
        %2285 = vmatpush.bf16.msra.mxu0 %v2271
        %2286 = vmatmul.bf16.gmra.mxu0 %v2276
        %v2287 = vpop.f32.mrf.mxu0
        %v2288 = vadd.f32 0.0, %v2287
        %v2289 = vpop.f32.mrf.mxu0
        %2290 = vdwg.mxu0
        %v2295 = vunpack.c.l.b16 %v2227
        %v2296 = vunpack.c.l.b16 %v2228
        %v2297 = vunpack.c.l.b16 %v2229
        %v2298 = vunpack.c.l.b16 %v2230
        %v2299 = vpack.c.b16 %v2296, %v2295
        %v2300 = vpack.c.b16 %v2298, %v2297
        %v2304 = vsel %vm1999, %v2217, 0
        %2306 = vmatpush.bf16.msra.mxu0 0
        %2307 = vmatpush.bf16.msra.mxu0 0
        %2308 = vmatpush.bf16.msra.mxu0 0
        %2309 = vmatpush.bf16.msra.mxu0 0
        %2310 = vmatpush.bf16.msra.mxu0 0
        %2311 = vmatpush.bf16.msra.mxu0 0
        %2312 = vmatpush.bf16.msra.mxu0 %v2300
        %2313 = vmatpush.bf16.msra.mxu0 %v2299
        %2314 = vmatmul.bf16.gmra.mxu0 %v2304
        %v2315 = vpop.f32.mrf.mxu0
        %v2316 = vadd.f32 0.0, %v2315
        %v2317 = vpop.f32.mrf.mxu0
        %2318 = vdwg.mxu0
        %v2323 = vunpack.c.l.b16 %v2231
        %v2324 = vunpack.c.l.b16 %v2232
        %v2325 = vunpack.c.l.b16 %v2233
        %v2326 = vunpack.c.l.b16 %v2234
        %v2327 = vpack.c.b16 %v2324, %v2323
        %v2328 = vpack.c.b16 %v2326, %v2325
        %v2332 = vsel %vm1999, %v2218, 0
        %2334 = vmatpush.bf16.msra.mxu0 0
        %2335 = vmatpush.bf16.msra.mxu0 0
        %2336 = vmatpush.bf16.msra.mxu0 0
        %2337 = vmatpush.bf16.msra.mxu0 0
        %2338 = vmatpush.bf16.msra.mxu0 0
        %2339 = vmatpush.bf16.msra.mxu0 0
        %2340 = vmatpush.bf16.msra.mxu0 %v2328
        %2341 = vmatpush.bf16.msra.mxu0 %v2327
        %2342 = vmatmul.bf16.gmra.mxu0 %v2332
        %v2343 = vpop.f32.mrf.mxu0
        %v2344 = vadd.f32 0.0, %v2343
        %v2345 = vpop.f32.mrf.mxu0
        %2346 = vdwg.mxu0
        %v2347 = vadd.f32 %v2260, %v2288
        %v2348 = vadd.f32 %v2347, %v2316
        %v2349 = vadd.f32 %v2348, %v2344
        %v2350 = vadd.f32 %v980, %v2349
        %v2351 = vld [vmem:[%s947] sm:$0x1]
        %v2353 = vperm.slane %v2351, 0
        %v2355 = vadd.f32 %v2350, %v2353
        %v2356 = vld [vmem:[%s950] sm:$0x1]
        %v2357 = vld [vmem:[%s953] sm:$0x1]
        %2358 = vadd.xlane.f32.xlu0 %v2355
        %v2359 = vpop.xlane.xlu0 %2358
        %v2360 = vmul.f32 %v2359, %v991
        %v2361 = vsub.f32 %v2355, %v2360
        %v2362 = vmul.f32 %v2361, %v2361
        %2363 = vadd.xlane.f32.xlu0 %v2362
        %v2364 = vpop.xlane.xlu0 %2363
        %v2365 = vmul.f32 %v2364, %v991
        %v2366 = vadd.f32 %v2365, 1e-05
        %v2367 = vrsqrt.pop %v2366
        %v2368 = vmul.f32 %v2367, %v2366
        %v2369 = vmul.f32 %v2368, %v2367
        %v2370 = vmul.f32 0.5, %v2369
        %v2371 = vsub.f32 1.5, %v2370
        %v2372 = vmul.f32 %v2367, %v2371
        %vm2373 = vweird.f32 %v2366
        %vm2374 = vweird.f32 %v2367
        %vm2375 = vmor %vm2373, %vm2374
        %v2376 = vsel %vm2375, %v2367, %v2372
        %v2377 = vmul.f32 %v2361, %v2376
        %v2379 = vperm.slane %v2356, 0
        %v2381 = vmul.f32 %v2377, %v2379
        %v2383 = vperm.slane %v2357, 0
        %v2385 = vadd.f32 %v2381, %v2383
        %v2386 = vpack.c.bf16 %v2385, %v2385
        %v2387 = vld [vmem:[%s958] sm:$0xff]
        %v2388 = vld [vmem:[%s958 + $0x8] sm:$0xff]
        %v2389 = vld [vmem:[%s958 + $0x10] sm:$0xff]
        %v2390 = vld [vmem:[%s958 + $0x18] sm:$0xff]
        %v2391 = vld [vmem:[%s958 + $0x20] sm:$0xff]
        %v2392 = vld [vmem:[%s958 + $0x28] sm:$0xff]
        %v2393 = vld [vmem:[%s958 + $0x30] sm:$0xff]
        %v2394 = vld [vmem:[%s958 + $0x38] sm:$0xff]
        %v2395 = vld [vmem:[%s958 + $0x40] sm:$0xff]
        %v2396 = vld [vmem:[%s958 + $0x48] sm:$0xff]
        %v2397 = vld [vmem:[%s958 + $0x50] sm:$0xff]
        %v2398 = vld [vmem:[%s958 + $0x58] sm:$0xff]
        %v2399 = vld [vmem:[%s958 + $0x60] sm:$0xff]
        %v2400 = vld [vmem:[%s958 + $0x68] sm:$0xff]
        %v2401 = vld [vmem:[%s958 + $0x70] sm:$0xff]
        %v2402 = vld [vmem:[%s958 + $0x78] sm:$0xff]
        %v2403 = vld [vmem:[%s958 + $0x80] sm:$0xff]
        %v2404 = vld [vmem:[%s958 + $0x88] sm:$0xff]
        %v2405 = vld [vmem:[%s958 + $0x90] sm:$0xff]
        %v2406 = vld [vmem:[%s958 + $0x98] sm:$0xff]
        %v2407 = vld [vmem:[%s958 + $0xa0] sm:$0xff]
        %v2408 = vld [vmem:[%s958 + $0xa8] sm:$0xff]
        %v2409 = vld [vmem:[%s958 + $0xb0] sm:$0xff]
        %v2410 = vld [vmem:[%s958 + $0xb8] sm:$0xff]
        %v2411 = vld [vmem:[%s958 + $0xc0] sm:$0xff]
        %v2412 = vld [vmem:[%s958 + $0xc8] sm:$0xff]
        %v2413 = vld [vmem:[%s958 + $0xd0] sm:$0xff]
        %v2414 = vld [vmem:[%s958 + $0xd8] sm:$0xff]
        %v2415 = vld [vmem:[%s958 + $0xe0] sm:$0xff]
        %v2416 = vld [vmem:[%s958 + $0xe8] sm:$0xff]
        %v2417 = vld [vmem:[%s958 + $0xf0] sm:$0xff]
        %v2418 = vld [vmem:[%s958 + $0xf8] sm:$0xff]
        %v2419 = vld [vmem:[%s962] sm:$0xf]
        %v2421 = vperm.slane %v2419, 0
        %v2422 = vperm.slane %v2419, 1
        %v2423 = vperm.slane %v2419, 2
        %v2424 = vperm.slane %v2419, 3
        %v2461 = vunpack.c.l.b16 %v2387
        %v2462 = vunpack.c.h.b16 %v2387
        %v2463 = vunpack.c.l.b16 %v2388
        %v2464 = vunpack.c.h.b16 %v2388
        %v2465 = vunpack.c.l.b16 %v2389
        %v2466 = vunpack.c.h.b16 %v2389
        %v2467 = vunpack.c.l.b16 %v2390
        %v2468 = vunpack.c.h.b16 %v2390
        %v2469 = vunpack.c.l.b16 %v2391
        %v2470 = vunpack.c.h.b16 %v2391
        %v2471 = vunpack.c.l.b16 %v2392
        %v2472 = vunpack.c.h.b16 %v2392
        %v2473 = vunpack.c.l.b16 %v2393
        %v2474 = vunpack.c.h.b16 %v2393
        %v2475 = vunpack.c.l.b16 %v2394
        %v2476 = vunpack.c.h.b16 %v2394
        %v2477 = vunpack.c.l.b16 %v2395
        %v2478 = vunpack.c.h.b16 %v2395
        %v2479 = vunpack.c.l.b16 %v2396
        %v2480 = vunpack.c.h.b16 %v2396
        %v2481 = vunpack.c.l.b16 %v2397
        %v2482 = vunpack.c.h.b16 %v2397
        %v2483 = vunpack.c.l.b16 %v2398
        %v2484 = vunpack.c.h.b16 %v2398
        %v2485 = vunpack.c.l.b16 %v2399
        %v2486 = vunpack.c.h.b16 %v2399
        %v2487 = vunpack.c.l.b16 %v2400
        %v2488 = vunpack.c.h.b16 %v2400
        %v2489 = vunpack.c.l.b16 %v2401
        %v2490 = vunpack.c.h.b16 %v2401
        %v2491 = vunpack.c.l.b16 %v2402
        %v2492 = vunpack.c.h.b16 %v2402
        %v2493 = vunpack.c.l.b16 %v2403
        %v2494 = vunpack.c.h.b16 %v2403
        %v2495 = vunpack.c.l.b16 %v2404
        %v2496 = vunpack.c.h.b16 %v2404
        %v2497 = vunpack.c.l.b16 %v2405
        %v2498 = vunpack.c.h.b16 %v2405
        %v2499 = vunpack.c.l.b16 %v2406
        %v2500 = vunpack.c.h.b16 %v2406
        %v2501 = vunpack.c.l.b16 %v2407
        %v2502 = vunpack.c.h.b16 %v2407
        %v2503 = vunpack.c.l.b16 %v2408
        %v2504 = vunpack.c.h.b16 %v2408
        %v2505 = vunpack.c.l.b16 %v2409
        %v2506 = vunpack.c.h.b16 %v2409
        %v2507 = vunpack.c.l.b16 %v2410
        %v2508 = vunpack.c.h.b16 %v2410
        %v2509 = vunpack.c.l.b16 %v2411
        %v2510 = vunpack.c.h.b16 %v2411
        %v2511 = vunpack.c.l.b16 %v2412
        %v2512 = vunpack.c.h.b16 %v2412
        %v2513 = vunpack.c.l.b16 %v2413
        %v2514 = vunpack.c.h.b16 %v2413
        %v2515 = vunpack.c.l.b16 %v2414
        %v2516 = vunpack.c.h.b16 %v2414
        %v2517 = vunpack.c.l.b16 %v2415
        %v2518 = vunpack.c.h.b16 %v2415
        %v2519 = vunpack.c.l.b16 %v2416
        %v2520 = vunpack.c.h.b16 %v2416
        %v2521 = vunpack.c.l.b16 %v2417
        %v2522 = vunpack.c.h.b16 %v2417
        %v2523 = vunpack.c.l.b16 %v2418
        %v2524 = vunpack.c.h.b16 %v2418
        %v2525 = vpack.c.b16 %v2465, %v2461
        %v2526 = vpack.c.b16 %v2466, %v2462
        %v2527 = vpack.c.b16 %v2467, %v2463
        %v2528 = vpack.c.b16 %v2468, %v2464
        %v2529 = vpack.c.b16 %v2473, %v2469
        %v2530 = vpack.c.b16 %v2474, %v2470
        %v2531 = vpack.c.b16 %v2475, %v2471
        %v2532 = vpack.c.b16 %v2476, %v2472
        %v2533 = vpack.c.b16 %v2481, %v2477
        %v2534 = vpack.c.b16 %v2482, %v2478
        %v2535 = vpack.c.b16 %v2483, %v2479
        %v2536 = vpack.c.b16 %v2484, %v2480
        %v2537 = vpack.c.b16 %v2489, %v2485
        %v2538 = vpack.c.b16 %v2490, %v2486
        %v2539 = vpack.c.b16 %v2491, %v2487
        %v2540 = vpack.c.b16 %v2492, %v2488
        %v2541 = vpack.c.b16 %v2497, %v2493
        %v2542 = vpack.c.b16 %v2498, %v2494
        %v2543 = vpack.c.b16 %v2499, %v2495
        %v2544 = vpack.c.b16 %v2500, %v2496
        %v2545 = vpack.c.b16 %v2505, %v2501
        %v2546 = vpack.c.b16 %v2506, %v2502
        %v2547 = vpack.c.b16 %v2507, %v2503
        %v2548 = vpack.c.b16 %v2508, %v2504
        %v2549 = vpack.c.b16 %v2513, %v2509
        %v2550 = vpack.c.b16 %v2514, %v2510
        %v2551 = vpack.c.b16 %v2515, %v2511
        %v2552 = vpack.c.b16 %v2516, %v2512
        %v2553 = vpack.c.b16 %v2521, %v2517
        %v2554 = vpack.c.b16 %v2522, %v2518
        %v2555 = vpack.c.b16 %v2523, %v2519
        %v2556 = vpack.c.b16 %v2524, %v2520
        %2589 = vmatpush.bf16.msra.mxu0 %v2553
        %2590 = vmatpush.bf16.msra.mxu0 %v2549
        %2591 = vmatpush.bf16.msra.mxu0 %v2545
        %2592 = vmatpush.bf16.msra.mxu0 %v2541
        %2593 = vmatpush.bf16.msra.mxu0 %v2537
        %2594 = vmatpush.bf16.msra.mxu0 %v2533
        %2595 = vmatpush.bf16.msra.mxu0 %v2529
        %2596 = vmatpush.bf16.msra.mxu0 %v2525
        %2597 = vmatmul.bf16.gmra.mxu0 %v2386
        %v2598 = vpop.f32.mrf.mxu0
        %v2599 = vadd.f32 %v2421, %v2598
        %v2600 = vpop.f32.mrf.mxu0
        %2601 = vdwg.mxu0
        %2602 = vmatpush.bf16.msra.mxu0 %v2554
        %2603 = vmatpush.bf16.msra.mxu0 %v2550
        %2604 = vmatpush.bf16.msra.mxu0 %v2546
        %2605 = vmatpush.bf16.msra.mxu0 %v2542
        %2606 = vmatpush.bf16.msra.mxu0 %v2538
        %2607 = vmatpush.bf16.msra.mxu0 %v2534
        %2608 = vmatpush.bf16.msra.mxu0 %v2530
        %2609 = vmatpush.bf16.msra.mxu0 %v2526
        %2610 = vmatmul.bf16.gmra.mxu0 %v2386
        %v2611 = vpop.f32.mrf.mxu0
        %v2612 = vadd.f32 %v2422, %v2611
        %v2613 = vpop.f32.mrf.mxu0
        %2614 = vdwg.mxu0
        %2615 = vmatpush.bf16.msra.mxu0 %v2555
        %2616 = vmatpush.bf16.msra.mxu0 %v2551
        %2617 = vmatpush.bf16.msra.mxu0 %v2547
        %2618 = vmatpush.bf16.msra.mxu0 %v2543
        %2619 = vmatpush.bf16.msra.mxu0 %v2539
        %2620 = vmatpush.bf16.msra.mxu0 %v2535
        %2621 = vmatpush.bf16.msra.mxu0 %v2531
        %2622 = vmatpush.bf16.msra.mxu0 %v2527
        %2623 = vmatmul.bf16.gmra.mxu0 %v2386
        %v2624 = vpop.f32.mrf.mxu0
        %v2625 = vadd.f32 %v2423, %v2624
        %v2626 = vpop.f32.mrf.mxu0
        %2627 = vdwg.mxu0
        %2628 = vmatpush.bf16.msra.mxu0 %v2556
        %2629 = vmatpush.bf16.msra.mxu0 %v2552
        %2630 = vmatpush.bf16.msra.mxu0 %v2548
        %2631 = vmatpush.bf16.msra.mxu0 %v2544
        %2632 = vmatpush.bf16.msra.mxu0 %v2540
        %2633 = vmatpush.bf16.msra.mxu0 %v2536
        %2634 = vmatpush.bf16.msra.mxu0 %v2532
        %2635 = vmatpush.bf16.msra.mxu0 %v2528
        %2636 = vmatmul.bf16.gmra.mxu0 %v2386
        %v2637 = vpop.f32.mrf.mxu0
        %v2638 = vadd.f32 %v2424, %v2637
        %v2639 = vpop.f32.mrf.mxu0
        %2640 = vdwg.mxu0
        %v2641 = vmul.f32 %v2599, 1.702
        %v2642 = vmul.f32 %v2612, 1.702
        %v2643 = vmul.f32 %v2625, 1.702
        %v2644 = vmul.f32 %v2638, 1.702
        %v2645 = vxor.u32 %v2641, 2147483648
        %v2646 = vxor.u32 %v2642, 2147483648
        %v2647 = vxor.u32 %v2643, 2147483648
        %v2648 = vxor.u32 %v2644, 2147483648
        %v2649 = vmul.f32 %v2645, 1.442695
        %v2650 = vpow.pop %v2649
        %v2651 = vmul.f32 %v2646, 1.442695
        %v2652 = vpow.pop %v2651
        %v2653 = vmul.f32 %v2647, 1.442695
        %v2654 = vpow.pop %v2653
        %v2655 = vmul.f32 %v2648, 1.442695
        %v2656 = vpow.pop %v2655
        %v2657 = vadd.f32 %v2650, 1.0
        %v2658 = vadd.f32 %v2652, 1.0
        %v2659 = vadd.f32 %v2654, 1.0
        %v2660 = vadd.f32 %v2656, 1.0
        %v2661 = vrcp.pop %v2657
        %v2662 = vmul.f32 %v2657, %v2661
        %v2663 = vsub.f32 1.0, %v2662
        %v2664 = vmul.f32 %v2661, %v2663
        %v2665 = vadd.f32 %v2661, %v2664
        %vm2666 = vweird.f32 %v2657
        %vm2667 = vweird.f32 %v2661
        %vm2668 = vmor %vm2666, %vm2667
        %v2669 = vsel %vm2668, %v2661, %v2665
        %v2670 = vand.u32 2147483647, %v2657
        %vm2671 = vcmp.eq.f32.partialorder %v2670, 8.507059e+37
        %v2672 = vand.u32 %v2657, 2147483648
        %v2673 = vor.u32 1.1754944e-38, %v2672
        %v2674 = vsel %vm2671, %v2673, %v2669
        %v2675 = vmul.f32 1.0, %v2674
        %v2676 = vrcp.pop %v2658
        %v2677 = vmul.f32 %v2658, %v2676
        %v2678 = vsub.f32 1.0, %v2677
        %v2679 = vmul.f32 %v2676, %v2678
        %v2680 = vadd.f32 %v2676, %v2679
        %vm2681 = vweird.f32 %v2658
        %vm2682 = vweird.f32 %v2676
        %vm2683 = vmor %vm2681, %vm2682
        %v2684 = vsel %vm2683, %v2676, %v2680
        %v2685 = vand.u32 2147483647, %v2658
        %vm2686 = vcmp.eq.f32.partialorder %v2685, 8.507059e+37
        %v2687 = vand.u32 %v2658, 2147483648
        %v2688 = vor.u32 1.1754944e-38, %v2687
        %v2689 = vsel %vm2686, %v2688, %v2684
        %v2690 = vmul.f32 1.0, %v2689
        %v2691 = vrcp.pop %v2659
        %v2692 = vmul.f32 %v2659, %v2691
        %v2693 = vsub.f32 1.0, %v2692
        %v2694 = vmul.f32 %v2691, %v2693
        %v2695 = vadd.f32 %v2691, %v2694
        %vm2696 = vweird.f32 %v2659
        %vm2697 = vweird.f32 %v2691
        %vm2698 = vmor %vm2696, %vm2697
        %v2699 = vsel %vm2698, %v2691, %v2695
        %v2700 = vand.u32 2147483647, %v2659
        %vm2701 = vcmp.eq.f32.partialorder %v2700, 8.507059e+37
        %v2702 = vand.u32 %v2659, 2147483648
        %v2703 = vor.u32 1.1754944e-38, %v2702
        %v2704 = vsel %vm2701, %v2703, %v2699
        %v2705 = vmul.f32 1.0, %v2704
        %v2706 = vrcp.pop %v2660
        %v2707 = vmul.f32 %v2660, %v2706
        %v2708 = vsub.f32 1.0, %v2707
        %v2709 = vmul.f32 %v2706, %v2708
        %v2710 = vadd.f32 %v2706, %v2709
        %vm2711 = vweird.f32 %v2660
        %vm2712 = vweird.f32 %v2706
        %vm2713 = vmor %vm2711, %vm2712
        %v2714 = vsel %vm2713, %v2706, %v2710
        %v2715 = vand.u32 2147483647, %v2660
        %vm2716 = vcmp.eq.f32.partialorder %v2715, 8.507059e+37
        %v2717 = vand.u32 %v2660, 2147483648
        %v2718 = vor.u32 1.1754944e-38, %v2717
        %v2719 = vsel %vm2716, %v2718, %v2714
        %v2720 = vmul.f32 1.0, %v2719
        %v2721 = vmul.f32 %v2599, %v2675
        %v2722 = vmul.f32 %v2612, %v2690
        %v2723 = vmul.f32 %v2625, %v2705
        %v2724 = vmul.f32 %v2638, %v2720
        %v2725 = vpack.c.bf16 %v2721, %v2721
        %v2726 = vpack.c.bf16 %v2722, %v2722
        %v2727 = vpack.c.bf16 %v2723, %v2723
        %v2728 = vpack.c.bf16 %v2724, %v2724
        %v2729 = vld [vmem:[%s967] sm:$0xf]
        %v2730 = vld [vmem:[%s967 + $0x4] sm:$0xf]
        %v2731 = vld [vmem:[%s967 + $0x8] sm:$0xf]
        %v2732 = vld [vmem:[%s967 + $0xc] sm:$0xf]
        %v2733 = vld [vmem:[%s967 + $0x10] sm:$0xf]
        %v2734 = vld [vmem:[%s967 + $0x14] sm:$0xf]
        %v2735 = vld [vmem:[%s967 + $0x18] sm:$0xf]
        %v2736 = vld [vmem:[%s967 + $0x1c] sm:$0xf]
        %v2737 = vld [vmem:[%s967 + $0x20] sm:$0xf]
        %v2738 = vld [vmem:[%s967 + $0x24] sm:$0xf]
        %v2739 = vld [vmem:[%s967 + $0x28] sm:$0xf]
        %v2740 = vld [vmem:[%s967 + $0x2c] sm:$0xf]
        %v2741 = vld [vmem:[%s967 + $0x30] sm:$0xf]
        %v2742 = vld [vmem:[%s967 + $0x34] sm:$0xf]
        %v2743 = vld [vmem:[%s967 + $0x38] sm:$0xf]
        %v2744 = vld [vmem:[%s967 + $0x3c] sm:$0xf]
        %v2745 = vld [vmem:[%s967 + $0x40] sm:$0xf]
        %v2746 = vld [vmem:[%s967 + $0x44] sm:$0xf]
        %v2747 = vld [vmem:[%s967 + $0x48] sm:$0xf]
        %v2748 = vld [vmem:[%s967 + $0x4c] sm:$0xf]
        %v2749 = vld [vmem:[%s967 + $0x50] sm:$0xf]
        %v2750 = vld [vmem:[%s967 + $0x54] sm:$0xf]
        %v2751 = vld [vmem:[%s967 + $0x58] sm:$0xf]
        %v2752 = vld [vmem:[%s967 + $0x5c] sm:$0xf]
        %v2753 = vld [vmem:[%s967 + $0x60] sm:$0xf]
        %v2754 = vld [vmem:[%s967 + $0x64] sm:$0xf]
        %v2755 = vld [vmem:[%s967 + $0x68] sm:$0xf]
        %v2756 = vld [vmem:[%s967 + $0x6c] sm:$0xf]
        %v2757 = vld [vmem:[%s967 + $0x70] sm:$0xf]
        %v2758 = vld [vmem:[%s967 + $0x74] sm:$0xf]
        %v2759 = vld [vmem:[%s967 + $0x78] sm:$0xf]
        %v2760 = vld [vmem:[%s967 + $0x7c] sm:$0xf]
        %v2761 = vld [vmem:[%s967 + $0x80] sm:$0xf]
        %v2762 = vld [vmem:[%s967 + $0x84] sm:$0xf]
        %v2763 = vld [vmem:[%s967 + $0x88] sm:$0xf]
        %v2764 = vld [vmem:[%s967 + $0x8c] sm:$0xf]
        %v2765 = vld [vmem:[%s967 + $0x90] sm:$0xf]
        %v2766 = vld [vmem:[%s967 + $0x94] sm:$0xf]
        %v2767 = vld [vmem:[%s967 + $0x98] sm:$0xf]
        %v2768 = vld [vmem:[%s967 + $0x9c] sm:$0xf]
        %v2769 = vld [vmem:[%s967 + $0xa0] sm:$0xf]
        %v2770 = vld [vmem:[%s967 + $0xa4] sm:$0xf]
        %v2771 = vld [vmem:[%s967 + $0xa8] sm:$0xf]
        %v2772 = vld [vmem:[%s967 + $0xac] sm:$0xf]
        %v2773 = vld [vmem:[%s967 + $0xb0] sm:$0xf]
        %v2774 = vld [vmem:[%s967 + $0xb4] sm:$0xf]
        %v2775 = vld [vmem:[%s967 + $0xb8] sm:$0xf]
        %v2776 = vld [vmem:[%s967 + $0xbc] sm:$0xf]
        %v2777 = vld [vmem:[%s967 + $0xc0] sm:$0xf]
        %v2778 = vld [vmem:[%s967 + $0xc4] sm:$0xf]
        %v2779 = vld [vmem:[%s967 + $0xc8] sm:$0xf]
        %v2780 = vld [vmem:[%s967 + $0xcc] sm:$0xf]
        %v2781 = vld [vmem:[%s967 + $0xd0] sm:$0xf]
        %v2782 = vld [vmem:[%s967 + $0xd4] sm:$0xf]
        %v2783 = vld [vmem:[%s967 + $0xd8] sm:$0xf]
        %v2784 = vld [vmem:[%s967 + $0xdc] sm:$0xf]
        %v2785 = vld [vmem:[%s967 + $0xe0] sm:$0xf]
        %v2786 = vld [vmem:[%s967 + $0xe4] sm:$0xf]
        %v2787 = vld [vmem:[%s967 + $0xe8] sm:$0xf]
        %v2788 = vld [vmem:[%s967 + $0xec] sm:$0xf]
        %v2789 = vld [vmem:[%s967 + $0xf0] sm:$0xf]
        %v2790 = vld [vmem:[%s967 + $0xf4] sm:$0xf]
        %v2791 = vld [vmem:[%s967 + $0xf8] sm:$0xf]
        %v2792 = vld [vmem:[%s967 + $0xfc] sm:$0xf]
        %v2793 = vld [vmem:[%s970] sm:$0x1]
        %v2795 = vperm.slane %v2793, 0
        %v2861 = vunpack.c.l.b16 %v2729
        %v2862 = vunpack.c.l.b16 %v2730
        %v2863 = vunpack.c.l.b16 %v2731
        %v2864 = vunpack.c.l.b16 %v2732
        %v2865 = vunpack.c.l.b16 %v2733
        %v2866 = vunpack.c.l.b16 %v2734
        %v2867 = vunpack.c.l.b16 %v2735
        %v2868 = vunpack.c.l.b16 %v2736
        %v2869 = vunpack.c.l.b16 %v2737
        %v2870 = vunpack.c.l.b16 %v2738
        %v2871 = vunpack.c.l.b16 %v2739
        %v2872 = vunpack.c.l.b16 %v2740
        %v2873 = vunpack.c.l.b16 %v2741
        %v2874 = vunpack.c.l.b16 %v2742
        %v2875 = vunpack.c.l.b16 %v2743
        %v2876 = vunpack.c.l.b16 %v2744
        %v2877 = vunpack.c.l.b16 %v2745
        %v2878 = vunpack.c.l.b16 %v2746
        %v2879 = vunpack.c.l.b16 %v2747
        %v2880 = vunpack.c.l.b16 %v2748
        %v2881 = vunpack.c.l.b16 %v2749
        %v2882 = vunpack.c.l.b16 %v2750
        %v2883 = vunpack.c.l.b16 %v2751
        %v2884 = vunpack.c.l.b16 %v2752
        %v2885 = vunpack.c.l.b16 %v2753
        %v2886 = vunpack.c.l.b16 %v2754
        %v2887 = vunpack.c.l.b16 %v2755
        %v2888 = vunpack.c.l.b16 %v2756
        %v2889 = vunpack.c.l.b16 %v2757
        %v2890 = vunpack.c.l.b16 %v2758
        %v2891 = vunpack.c.l.b16 %v2759
        %v2892 = vunpack.c.l.b16 %v2760
        %v2893 = vunpack.c.l.b16 %v2761
        %v2894 = vunpack.c.l.b16 %v2762
        %v2895 = vunpack.c.l.b16 %v2763
        %v2896 = vunpack.c.l.b16 %v2764
        %v2897 = vunpack.c.l.b16 %v2765
        %v2898 = vunpack.c.l.b16 %v2766
        %v2899 = vunpack.c.l.b16 %v2767
        %v2900 = vunpack.c.l.b16 %v2768
        %v2901 = vunpack.c.l.b16 %v2769
        %v2902 = vunpack.c.l.b16 %v2770
        %v2903 = vunpack.c.l.b16 %v2771
        %v2904 = vunpack.c.l.b16 %v2772
        %v2905 = vunpack.c.l.b16 %v2773
        %v2906 = vunpack.c.l.b16 %v2774
        %v2907 = vunpack.c.l.b16 %v2775
        %v2908 = vunpack.c.l.b16 %v2776
        %v2909 = vunpack.c.l.b16 %v2777
        %v2910 = vunpack.c.l.b16 %v2778
        %v2911 = vunpack.c.l.b16 %v2779
        %v2912 = vunpack.c.l.b16 %v2780
        %v2913 = vunpack.c.l.b16 %v2781
        %v2914 = vunpack.c.l.b16 %v2782
        %v2915 = vunpack.c.l.b16 %v2783
        %v2916 = vunpack.c.l.b16 %v2784
        %v2917 = vunpack.c.l.b16 %v2785
        %v2918 = vunpack.c.l.b16 %v2786
        %v2919 = vunpack.c.l.b16 %v2787
        %v2920 = vunpack.c.l.b16 %v2788
        %v2921 = vunpack.c.l.b16 %v2789
        %v2922 = vunpack.c.l.b16 %v2790
        %v2923 = vunpack.c.l.b16 %v2791
        %v2924 = vunpack.c.l.b16 %v2792
        %v2925 = vpack.c.b16 %v2862, %v2861
        %v2926 = vpack.c.b16 %v2864, %v2863
        %v2927 = vpack.c.b16 %v2866, %v2865
        %v2928 = vpack.c.b16 %v2868, %v2867
        %v2929 = vpack.c.b16 %v2870, %v2869
        %v2930 = vpack.c.b16 %v2872, %v2871
        %v2931 = vpack.c.b16 %v2874, %v2873
        %v2932 = vpack.c.b16 %v2876, %v2875
        %v2933 = vpack.c.b16 %v2878, %v2877
        %v2934 = vpack.c.b16 %v2880, %v2879
        %v2935 = vpack.c.b16 %v2882, %v2881
        %v2936 = vpack.c.b16 %v2884, %v2883
        %v2937 = vpack.c.b16 %v2886, %v2885
        %v2938 = vpack.c.b16 %v2888, %v2887
        %v2939 = vpack.c.b16 %v2890, %v2889
        %v2940 = vpack.c.b16 %v2892, %v2891
        %v2941 = vpack.c.b16 %v2894, %v2893
        %v2942 = vpack.c.b16 %v2896, %v2895
        %v2943 = vpack.c.b16 %v2898, %v2897
        %v2944 = vpack.c.b16 %v2900, %v2899
        %v2945 = vpack.c.b16 %v2902, %v2901
        %v2946 = vpack.c.b16 %v2904, %v2903
        %v2947 = vpack.c.b16 %v2906, %v2905
        %v2948 = vpack.c.b16 %v2908, %v2907
        %v2949 = vpack.c.b16 %v2910, %v2909
        %v2950 = vpack.c.b16 %v2912, %v2911
        %v2951 = vpack.c.b16 %v2914, %v2913
        %v2952 = vpack.c.b16 %v2916, %v2915
        %v2953 = vpack.c.b16 %v2918, %v2917
        %v2954 = vpack.c.b16 %v2920, %v2919
        %v2955 = vpack.c.b16 %v2922, %v2921
        %v2956 = vpack.c.b16 %v2924, %v2923
        %2989 = vmatpush.bf16.msra.mxu0 %v2932
        %2990 = vmatpush.bf16.msra.mxu0 %v2931
        %2991 = vmatpush.bf16.msra.mxu0 %v2930
        %2992 = vmatpush.bf16.msra.mxu0 %v2929
        %2993 = vmatpush.bf16.msra.mxu0 %v2928
        %2994 = vmatpush.bf16.msra.mxu0 %v2927
        %2995 = vmatpush.bf16.msra.mxu0 %v2926
        %2996 = vmatpush.bf16.msra.mxu0 %v2925
        %2997 = vmatmul.bf16.gmra.mxu0 %v2725
        %v2998 = vpop.f32.mrf.mxu0
        %v2999 = vadd.f32 %v2795, %v2998
        %v3000 = vpop.f32.mrf.mxu0
        %3001 = vdwg.mxu0
        %3002 = vmatpush.bf16.msra.mxu0 %v2940
        %3003 = vmatpush.bf16.msra.mxu0 %v2939
        %3004 = vmatpush.bf16.msra.mxu0 %v2938
        %3005 = vmatpush.bf16.msra.mxu0 %v2937
        %3006 = vmatpush.bf16.msra.mxu0 %v2936
        %3007 = vmatpush.bf16.msra.mxu0 %v2935
        %3008 = vmatpush.bf16.msra.mxu0 %v2934
        %3009 = vmatpush.bf16.msra.mxu0 %v2933
        %3010 = vmatmul.bf16.gmra.mxu0 %v2726
        %v3011 = vpop.f32.mrf.mxu0
        %v3012 = vadd.f32 %v2999, %v3011
        %v3013 = vpop.f32.mrf.mxu0
        %3014 = vdwg.mxu0
        %3015 = vmatpush.bf16.msra.mxu0 %v2948
        %3016 = vmatpush.bf16.msra.mxu0 %v2947
        %3017 = vmatpush.bf16.msra.mxu0 %v2946
        %3018 = vmatpush.bf16.msra.mxu0 %v2945
        %3019 = vmatpush.bf16.msra.mxu0 %v2944
        %3020 = vmatpush.bf16.msra.mxu0 %v2943
        %3021 = vmatpush.bf16.msra.mxu0 %v2942
        %3022 = vmatpush.bf16.msra.mxu0 %v2941
        %3023 = vmatmul.bf16.gmra.mxu0 %v2727
        %v3024 = vpop.f32.mrf.mxu0
        %v3025 = vadd.f32 %v3012, %v3024
        %v3026 = vpop.f32.mrf.mxu0
        %3027 = vdwg.mxu0
        %3028 = vmatpush.bf16.msra.mxu0 %v2956
        %3029 = vmatpush.bf16.msra.mxu0 %v2955
        %3030 = vmatpush.bf16.msra.mxu0 %v2954
        %3031 = vmatpush.bf16.msra.mxu0 %v2953
        %3032 = vmatpush.bf16.msra.mxu0 %v2952
        %3033 = vmatpush.bf16.msra.mxu0 %v2951
        %3034 = vmatpush.bf16.msra.mxu0 %v2950
        %3035 = vmatpush.bf16.msra.mxu0 %v2949
        %3036 = vmatmul.bf16.gmra.mxu0 %v2728
        %v3037 = vpop.f32.mrf.mxu0
        %v3038 = vadd.f32 %v3025, %v3037
        %v3039 = vpop.f32.mrf.mxu0
        %3040 = vdwg.mxu0
        %v3041 = vadd.f32 %v2355, %v3038
        %3042 = vst [vmem:[#allocation2] sm:$0xff] %v3041
        %p3043 = scmp.eq.s32.totalorder %s50, 1
        // Predicated region
        $region113: #{tpu_custom_call.1} parent=107 // pred_check
          %p3044 = pneg %p3043
        $region114: #{tpu_custom_call.1} parent=107 // pred_check_branch
          %3046 = sbr.rel (%p3044) target = $region116
        $region115: #{tpu_custom_call.1} parent=107 // pred_region
          %s3047 = sld [smem:[#allocation4 + %s49]]
          %s3048 = scalar_lea.vmem [#allocation2], %s3047
          %v3049 = vld [vmem:[%s3048] sm:$0x1]
          %v3050 = vld [vmem:[%s20] sm:$0x1]
          %v3051 = vld [vmem:[%s21] sm:$0x1]
          %vm3052 = vcmask 1040384
          %v3053 = vsel %vm3052, %v3049, 0.0
          %3054 = vadd.xlane.f32.xlu0 %v3053
          %v3055 = vpop.xlane.xlu0 %3054
          %v3056 = vmul.f32 %v3055, %v991
          %v3057 = vsub.f32 %v3049, %v3056
          %v3058 = vmul.f32 %v3057, %v3057
          %v3059 = vsel %vm3052, %v3058, 0.0
          %3060 = vadd.xlane.f32.xlu0 %v3059
          %v3061 = vpop.xlane.xlu0 %3060
          %v3062 = vmul.f32 %v3061, %v991
          %v3063 = vadd.f32 %v3062, 1e-05
          %v3064 = vrsqrt.pop %v3063
          %v3065 = vmul.f32 %v3064, %v3063
          %v3066 = vmul.f32 %v3065, %v3064
          %v3067 = vmul.f32 0.5, %v3066
          %v3068 = vsub.f32 1.5, %v3067
          %v3069 = vmul.f32 %v3064, %v3068
          %vm3070 = vweird.f32 %v3063
          %vm3071 = vweird.f32 %v3064
          %vm3072 = vmor %vm3070, %vm3071
          %v3073 = vsel %vm3072, %v3064, %v3069
          %v3074 = vmul.f32 %v3057, %v3073
          %v3075 = vmul.f32 %v3074, %v3050
          %v3076 = vadd.f32 %v3075, %v3051
          %v3077 = vpack.c.bf16 %v3076, %v3076
          %v3078 = vld [vmem:[%s22] sm:$0xf]
          %v3079 = vld [vmem:[%s22 + $0x4] sm:$0xf]
          %v3080 = vld [vmem:[%s22 + $0x8] sm:$0xf]
          %v3081 = vld [vmem:[%s22 + $0xc] sm:$0xf]
          %v3082 = vld [vmem:[%s22 + $0x10] sm:$0xf]
          %v3083 = vld [vmem:[%s22 + $0x14] sm:$0xf]
          %v3084 = vld [vmem:[%s22 + $0x18] sm:$0xf]
          %v3085 = vld [vmem:[%s22 + $0x1c] sm:$0xf]
          %v3086 = vld [vmem:[%s22 + $0x20] sm:$0xf]
          %v3087 = vld [vmem:[%s22 + $0x24] sm:$0xf]
          %v3088 = vld [vmem:[%s22 + $0x28] sm:$0xf]
          %v3089 = vld [vmem:[%s22 + $0x2c] sm:$0xf]
          %v3090 = vld [vmem:[%s22 + $0x30] sm:$0xf]
          %v3091 = vld [vmem:[%s22 + $0x34] sm:$0xf]
          %v3092 = vld [vmem:[%s22 + $0x38] sm:$0xf]
          %v3093 = vld [vmem:[%s22 + $0x3c] sm:$0xf]
          %v3110 = vunpack.c.l.b16 %v3078
          %v3111 = vunpack.c.l.b16 %v3079
          %v3112 = vunpack.c.l.b16 %v3080
          %v3113 = vunpack.c.l.b16 %v3081
          %v3114 = vunpack.c.l.b16 %v3082
          %v3115 = vunpack.c.l.b16 %v3083
          %v3116 = vunpack.c.l.b16 %v3084
          %v3117 = vunpack.c.l.b16 %v3085
          %v3118 = vunpack.c.l.b16 %v3086
          %v3119 = vunpack.c.l.b16 %v3087
          %v3120 = vunpack.c.l.b16 %v3088
          %v3121 = vunpack.c.l.b16 %v3089
          %v3122 = vunpack.c.l.b16 %v3090
          %v3123 = vunpack.c.l.b16 %v3091
          %v3124 = vunpack.c.l.b16 %v3092
          %v3125 = vunpack.c.l.b16 %v3093
          %v3126 = vpack.c.b16 %v3111, %v3110
          %v3127 = vpack.c.b16 %v3113, %v3112
          %v3128 = vpack.c.b16 %v3115, %v3114
          %v3129 = vpack.c.b16 %v3117, %v3116
          %v3130 = vpack.c.b16 %v3119, %v3118
          %v3131 = vpack.c.b16 %v3121, %v3120
          %v3132 = vpack.c.b16 %v3123, %v3122
          %v3133 = vpack.c.b16 %v3125, %v3124
          %3142 = vmatpush.bf16.msra.mxu0 %v3133
          %3143 = vmatpush.bf16.msra.mxu0 %v3132
          %3144 = vmatpush.bf16.msra.mxu0 %v3131
          %3145 = vmatpush.bf16.msra.mxu0 %v3130
          %3146 = vmatpush.bf16.msra.mxu0 %v3129
          %3147 = vmatpush.bf16.msra.mxu0 %v3128
          %3148 = vmatpush.bf16.msra.mxu0 %v3127
          %3149 = vmatpush.bf16.msra.mxu0 %v3126
          %3150 = vmatmul.bf16.gmra.mxu0 %v3077
          %v3151 = vpop.f32.mrf.mxu0
          %v3152 = vadd.f32 0.0, %v3151
          %v3153 = vpop.f32.mrf.mxu0
          %3154 = vdwg.mxu0
          %3155 = vst [vmem:[%s902] sm:$0x1] %v3152
        $region116: #{tpu_custom_call.1} parent=107 // pred_fallthru
          _
        %s3156 = sand.u32 %s612, 1
        %s3157 = scalar_lea.sflag [#allocation6], %s3156
        %s3158 = sand.u32 %s612, 1
        %s3159 = scalar_lea.vmem [#allocation5], %s3158
        // Predicated region
        $region117: #{tpu_custom_call.1} parent=107 // pred_check
          %p3160 = pneg %p622
        $region118: #{tpu_custom_call.1} parent=107 // pred_check_branch
          %3162 = sbr.rel (%p3160) target = $region120
        $region119: #{tpu_custom_call.1} parent=107 // pred_region
          %3164 = vsyncadd %s3157, 0
          %s3165 = scalar_lea.hbm %s23, %s49
          %s3167 = sshll.u32 %s3159, 4
          %s3168 = int_to_ptr.vmem [resolvable:$true] %s3167
          %s3169 = sshll.u32 %s3165, 4
          %s3170 = int_to_ptr.hbm [resolvable:$true] %s3169
          %3172 = dma.vmem_to_hbm [thread:$0]  %s3168, 16, %s3170, %s3157
        $region120: #{tpu_custom_call.1} parent=107 // pred_fallthru
          _
      $region108: #{tpu_custom_call.1} parent=5 // pred_fallthru
        _
      %p3173 = scmp.le.s32.totalorder 2, %s40
      // Predicated region
      $region121: #{tpu_custom_call.1} parent=5 // pred_check
        %p3174 = pneg %p3173
      $region122: #{tpu_custom_call.1} parent=5 // pred_check_branch
        %3176 = sbr.rel (%p3174) target = $region124
      $region123: #{tpu_custom_call.1} parent=5 // pred_region
        %s3177 = ssub.s32 %s40, 2
        // Predicated region
        $region125: #{tpu_custom_call.1} parent=123 // pred_check
          %p3178 = pneg %p628
        $region126: #{tpu_custom_call.1} parent=123 // pred_check_branch
          %3180 = sbr.rel (%p3178) target = $region128
        $region127: #{tpu_custom_call.1} parent=123 // pred_region
          %s3181 = sand.u32 %s613, 1
          %s3182 = scalar_lea.sflag [#allocation6], %s3181
          %s3183 = sand.u32 %s613, 1
          %s3184 = scalar_lea.vmem [#allocation5], %s3183
          %3186 = dma.done %s3182, 16
        $region128: #{tpu_custom_call.1} parent=123 // pred_fallthru
          _
      $region124: #{tpu_custom_call.1} parent=5 // pred_fallthru
        _
    $region6: #{tpu_custom_call.1} parent=1 // loop_footer
      %s44 = sadd.s32 1, %s40
    $region7: #{tpu_custom_call.1} parent=1 // loop_footer_branch
      %39 = sbr.rel target = $region3
    $region8: #{tpu_custom_call.1} parent=1 // loop_exit
      _
    %3187 = vsyncpa [#allocation6], 1
    %s3188 = scalar_lea.sflag [#allocation6], 1
    %3189 = vsyncpa %s3188, 1

</llo_original>
